<compile_context>
chip_gen: v7x
topology: tpu7x:2x2x1
jax: 0.10.0
libtpu: 0.0.40
codegen_flags: <defaults>
</compile_context>

<pallas_src>
import math

import jax
import jax.numpy as jnp
from jax import lax
from jax.experimental import pallas as pl
from jax.experimental.pallas import tpu as pltpu

# ---------------- model config (small, consistent with the module) ----------
DIM = 32          # embedding dim
HEADS = 4         # num attention heads
FFN = 64          # ffn hidden dim
NUM_LAYERS = 2
EPS = 1e-5        # nn.LayerNorm default eps

B, LQ, LS = 2, 8, 16   # batch, query length, memory (src) length

MAT_LANES = 128   # lane width of the packed weight slabs
MAT_ALIGN = 16    # bf16 (16,128) tile alignment (matrix slab)
VEC_ALIGN = 8     # f32  (8,128) tile alignment (bias / norm slab)
NEG_INF = -1e9    # additive mask for cross-batch attention blocks


# ---------------- shared math ------------------------------------------------
def _layer_norm(x, g, b):
    mu = jnp.mean(x, axis=-1, keepdims=True)
    var = jnp.mean((x - mu) ** 2, axis=-1, keepdims=True)
    return (x - mu) * lax.rsqrt(var + EPS) * g + b


# ---------------- weight packing (wrapper side) -------------------------------
def _pack(entries, dtype, row_align, lanes=MAT_LANES):
    """Pack named 2-D tensors into one (rows, lanes) slab; return slab + layout."""
    layout, chunks, off = {}, [], 0
    for name, arr in entries:
        arr = jnp.asarray(arr, jnp.float32)
        r, c = arr.shape
        assert c <= lanes, f"{name}: {c} > {lanes}"
        layout[name] = (off, r, c)
        rpad = (-r) % row_align
        chunks.append(jnp.pad(arr, ((0, rpad), (0, lanes - c))).astype(dtype))
        off += r + rpad
    return jnp.concatenate(chunks, axis=0), layout


def _fold_vo(wv, wo, bv, num_heads):
    """Fold the per-head value projection into the output projection offline."""
    d = wv.shape[0]
    hd = d // num_heads
    wblk, bblk = [], []
    for h in range(num_heads):
        hsl = slice(h * hd, (h + 1) * hd)
        wblk.append(wv[:, hsl] @ wo[hsl, :])     # (D, D)
        bblk.append(bv[hsl] @ wo[hsl, :])        # (D,)
    return jnp.concatenate(wblk, axis=1), jnp.concatenate(bblk)[None, :]


def build_weight_slabs(layer_params, num_heads):
    num_layers = len(layer_params)
    d = int(layer_params[0]["sa_ow"].shape[0])
    hd = d // num_heads
    scale = 1.0 / math.sqrt(hd)
    assert num_heads * d <= MAT_LANES, "folded Wv.Wo packing needs H*D <= 128"
    assert num_layers * d <= MAT_LANES, "hoisted cross-K packing needs L*D <= 128"

    f32 = lambda a: jnp.asarray(a, jnp.float32)
    mats, vecs = [], []

    # Hoisted cross-attention K projection: all layers side by side (lane-dense).
    k_cols = [f32(p["ca_w"])[d:2 * d].T for p in layer_params]
    kb_cols = [f32(p["ca_b"])[0, d:2 * d] for p in layer_params]
    mats.append(("ca_k_all", jnp.concatenate(k_cols, axis=1)))
    vecs.append(("ca_k_b_all", jnp.concatenate(kb_cols)[None, :]))

    for l, p in enumerate(layer_params):
        # ---- self-attention: fused Q/K columns (scale folded into Q), folded V.Wo
        in_w, in_b = f32(p["sa_w"]), f32(p["sa_b"])[0]
        out_w, out_b = f32(p["sa_ow"]).T, f32(p["sa_ob"])
        wq, wk, wv = in_w[0:d].T, in_w[d:2 * d].T, in_w[2 * d:3 * d].T
        bq, bk, bv = in_b[0:d], in_b[d:2 * d], in_b[2 * d:3 * d]
        sa_vo, sa_vo_b = _fold_vo(wv, out_w, bv, num_heads)
        mats += [(f"{l}_sa_qk", jnp.concatenate([wq * scale, wk], axis=1)),
                 (f"{l}_sa_vo", sa_vo)]
        vecs += [(f"{l}_sa_qk_b", jnp.concatenate([bq * scale, bk])[None, :]),
                 (f"{l}_sa_vo_b", sa_vo_b),
                 (f"{l}_sa_ob", out_b),
                 (f"{l}_n1g", f32(p["n1g"])), (f"{l}_n1b", f32(p["n1b"]))]

        # ---- cross-attention: Q (scaled); K hoisted above; V folded with Wo
        in_w, in_b = f32(p["ca_w"]), f32(p["ca_b"])[0]
        out_w, out_b = f32(p["ca_ow"]).T, f32(p["ca_ob"])
        cwq, cwv = in_w[0:d].T, in_w[2 * d:3 * d].T
        cbq, cbv = in_b[0:d], in_b[2 * d:3 * d]
        ca_vo, ca_vo_b = _fold_vo(cwv, out_w, cbv, num_heads)
        mats += [(f"{l}_ca_q", cwq * scale), (f"{l}_ca_vo", ca_vo)]
        vecs += [(f"{l}_ca_q_b", (cbq * scale)[None, :]),
                 (f"{l}_ca_vo_b", ca_vo_b),
                 (f"{l}_ca_ob", out_b),
                 (f"{l}_n2g", f32(p["n2g"])), (f"{l}_n2b", f32(p["n2b"]))]

        # ---- FFN
        mats += [(f"{l}_l1w", f32(p["l1w"]).T), (f"{l}_l2w", f32(p["l2w"]).T)]
        vecs += [(f"{l}_l1b", f32(p["l1b"])), (f"{l}_l2b", f32(p["l2b"])),
                 (f"{l}_n3g", f32(p["n3g"])), (f"{l}_n3b", f32(p["n3b"]))]

    wm, mlayout = _pack(mats, jnp.bfloat16, MAT_ALIGN)
    wv_slab, vlayout = _pack(vecs, jnp.float32, VEC_ALIGN)
    return wm, mlayout, wv_slab, vlayout


def _block_mask(b, lq, lk):
    """Additive mask zeroing attention between different batch elements."""
    row = jnp.repeat(jnp.arange(b), lq)
    col = jnp.repeat(jnp.arange(b), lk)
    return jnp.where(row[:, None] == col[None, :], 0.0, NEG_INF).astype(jnp.float32)


# ---------------- fused decoder kernel ----------------------------------------
def make_decoder_kernel(mlayout, vlayout, num_layers, num_heads, dim):
    hd = dim // num_heads
    bf16 = jnp.bfloat16

    def kernel(q_ref, src_ref, smask_ref, cmask_ref, wm_ref, wv_ref, out_ref):
        def mat(name):                       # bf16 matmul weight, (in, out) layout
            off, r, c = mlayout[name]
            return wm_ref[off:off + r, 0:c]

        def vec(name):                       # f32 (1, c) bias / norm vector
            off, r, c = vlayout[name]
            return wv_ref[off:off + r, 0:c]

        def attend(q, kT, vpr, mask):
            # q:(R,D) f32 (1/sqrt(hd) pre-folded into weights), kT:(D,Lk) f32,
            # vpr:(Lk,H*D) f32 = value projection already folded with Wo, mask additive.
            acc = jnp.zeros((q.shape[0], dim), jnp.float32)
            for h in range(num_heads):
                hsl = slice(h * hd, (h + 1) * hd)
                s = jnp.dot(q[:, hsl].astype(bf16), kT[hsl, :].astype(bf16),
                            preferred_element_type=jnp.float32)
                s = s + mask
                s = s - jnp.max(s, axis=-1, keepdims=True)
                p = jnp.exp(s)
                p = p * pl.reciprocal(jnp.sum(p, axis=-1, keepdims=True), approx=True)
                acc = acc + jnp.dot(p.astype(bf16),
                                    vpr[:, h * dim:(h + 1) * dim].astype(bf16),
                                    preferred_element_type=jnp.float32)
            return acc

        x = q_ref[...].astype(jnp.float32)        # (B*Lq, D) batch-stacked
        src_b = src_ref[...].astype(bf16)          # (B*Ls, D)
        smask = smask_ref[...]                     # (B*Lq, B*Lq) block-diag mask
        cmask = cmask_ref[...]                     # (B*Lq, B*Ls) block-diag mask

        # Hoisted cross-attention K (all layers in one matmul) and folded V'
        # projections: issued up-front so they overlap with layer-0 compute.
        k_cross_all = jnp.dot(src_b, mat("ca_k_all"),
                              preferred_element_type=jnp.float32) + vec("ca_k_b_all")
        kT_cross = [jnp.transpose(k_cross_all[:, l * dim:(l + 1) * dim])
                    for l in range(num_layers)]
        vpr_cross = [jnp.dot(src_b, mat(f"{l}_ca_vo"),
                             preferred_element_type=jnp.float32) + vec(f"{l}_ca_vo_b")
                     for l in range(num_layers)]

        for l in range(num_layers):               # static loop: all layers fused
            m = lambda n, l=l: mat(f"{l}_{n}")
            w = lambda n, l=l: vec(f"{l}_{n}")

            # ---- self-attention (fused Q/K projection; V.Wo folded offline) ----
            xb = x.astype(bf16)
            qk = jnp.dot(xb, m("sa_qk"),
                         preferred_element_type=jnp.float32) + w("sa_qk_b")
            vpr_self = jnp.dot(xb, m("sa_vo"),
                               preferred_element_type=jnp.float32) + w("sa_vo_b")
            kT_self = jnp.transpose(qk[:, dim:2 * dim])        # one transpose/attn
            a = attend(qk[:, 0:dim], kT_self, vpr_self, smask) + w("sa_ob")
            x = _layer_norm(x + a, w("n1g"), w("n1b"))

            # ---- cross-attention (K / V' hoisted before the loop) ----
            xb = x.astype(bf16)
            q = jnp.dot(xb, m("ca_q"),
                        preferred_element_type=jnp.float32) + w("ca_q_b")
            a = attend(q, kT_cross[l], vpr_cross[l], cmask) + w("ca_ob")
            x = _layer_norm(x + a, w("n2g"), w("n2b"))

            # ---- FFN: linear1 -> tanh-GELU (EUP) -> linear2, residual, norm3 ----
            xb = x.astype(bf16)
            ff = jnp.dot(xb, m("l1w"),
                         preferred_element_type=jnp.float32) + w("l1b")
            ff = jax.nn.gelu(ff, approximate=True)
            ff = jnp.dot(ff.astype(bf16), m("l2w"),
                         preferred_element_type=jnp.float32) + w("l2b")
            x = _layer_norm(x + ff, w("n3g"), w("n3b"))

            out_ref[l] = x.astype(out_ref.dtype)   # per-layer intermediate output

    return kernel


def transformer_decoder_pallas(query, src, layer_params, num_heads,
                               reference_points=None, spatial_shapes=None,
                               level_start_index=None, padding_mask=None):
    # reference_points / spatial_shapes / level_start_index / padding_mask are
    # accepted for signature parity; the reference layer never uses them.
    b, lq, d = query.shape
    _, ls, _ = src.shape
    num_layers = len(layer_params)
    assert d % num_heads == 0
    assert (b * lq) % 8 == 0 and (b * ls) % 8 == 0, "stacked rows must be 8-aligned"

    wm, mlayout, wvec, vlayout = build_weight_slabs(layer_params, num_heads)

    q2 = query.reshape(b * lq, d)
    s2 = src.reshape(b * ls, d)
    smask = _block_mask(b, lq, lq)
    cmask = _block_mask(b, lq, ls)

    kernel = make_decoder_kernel(mlayout, vlayout, num_layers, num_heads, d)

    # Single invocation (grid=()): whole batch processed in one step; all inputs are
    # tiny and live in VMEM (<1 MiB total), so no pipelining is needed.
    out = pl.pallas_call(
        kernel,
        out_shape=jax.ShapeDtypeStruct((num_layers, b * lq, d), query.dtype),
        in_specs=[
            pl.BlockSpec((b * lq, d), lambda: (0, 0)),
            pl.BlockSpec((b * ls, d), lambda: (0, 0)),
            pl.BlockSpec(smask.shape, lambda: (0, 0)),
            pl.BlockSpec(cmask.shape, lambda: (0, 0)),
            pl.BlockSpec(wm.shape, lambda: (0, 0)),     # bf16 matrix slab
            pl.BlockSpec(wvec.shape, lambda: (0, 0)),   # f32 bias / norm slab
        ],
        out_specs=pl.BlockSpec((num_layers, b * lq, d), lambda: (0, 0, 0)),
    )(q2, s2, smask, cmask, wm, wvec)

    out = out.reshape(num_layers, b, lq, d)
    return [out[l] for l in range(num_layers)]


# ---------------- pure-JAX reference (correctness check) ----------------------
def _mha_ref(q_in, kv_in, in_w, in_b, out_w, out_b, num_heads):
    d = q_in.shape[-1]
    hd = d // num_heads
    wq, wk, wv = in_w[0:d], in_w[d:2 * d], in_w[2 * d:3 * d]
    bq, bk, bv = in_b[0, 0:d], in_b[0, d:2 * d], in_b[0, 2 * d:3 * d]
    q = q_in @ wq.T + bq
    k = kv_in @ wk.T + bk
    v = kv_in @ wv.T + bv
    lq, lk = q.shape[0], k.shape[0]
    qh = q.reshape(lq, num_heads, hd).transpose(1, 0, 2)
    kh = k.reshape(lk, num_heads, hd).transpose(1, 0, 2)
    vh = v.reshape(lk, num_heads, hd).transpose(1, 0, 2)
    s = jnp.einsum("hqd,hkd->hqk", qh, kh) / math.sqrt(hd)
    p = jax.nn.softmax(s, axis=-1)
    o = jnp.einsum("hqk,hkd->hqd", p, vh).transpose(1, 0, 2).reshape(lq, d)
    return o @ out_w.T + out_b[0]


def _layer_ref(x, s, p, num_heads):
    a1 = _mha_ref(x, x, p["sa_w"], p["sa_b"], p["sa_ow"], p["sa_ob"], num_heads)
    x = _layer_norm(x + a1, p["n1g"], p["n1b"])
    a2 = _mha_ref(x, s, p["ca_w"], p["ca_b"], p["ca_ow"], p["ca_ob"], num_heads)
    x = _layer_norm(x + a2, p["n2g"], p["n2b"])
    h = jax.nn.gelu(x @ p["l1w"].T + p["l1b"][0], approximate=False)
    h = h @ p["l2w"].T + p["l2b"][0]
    x = _layer_norm(x + h, p["n3g"], p["n3b"])
    return x


def transformer_decoder_ref(query, src, layer_params, num_heads):
    out = query
    outputs = []
    for p in layer_params:
        out = jax.vmap(lambda x, s, _p=p: _layer_ref(x, s, _p, num_heads))(out, src)
        outputs.append(out)
    return outputs


# ---------------- deterministic parameter init --------------------------------
def init_layer_params(key, dim, ffn_dim):
    ks = jax.random.split(key, 12)
    r = lambda k, shape, s=0.05: (s * jax.random.normal(k, shape)).astype(jnp.float32)
    return {
        "sa_w": r(ks[0], (3 * dim, dim)),
        "sa_b": r(ks[1], (1, 3 * dim)),
        "sa_ow": r(ks[2], (dim, dim)),
        "sa_ob": r(ks[3], (1, dim)),
        "n1g": jnp.ones((1, dim), jnp.float32),
        "n1b": jnp.zeros((1, dim), jnp.float32),
        "ca_w": r(ks[4], (3 * dim, dim)),
        "ca_b": r(ks[5], (1, 3 * dim)),
        "ca_ow": r(ks[6], (dim, dim)),
        "ca_ob": r(ks[7], (1, dim)),
        "n2g": jnp.ones((1, dim), jnp.float32),
        "n2b": jnp.zeros((1, dim), jnp.float32),
        "l1w": r(ks[8], (ffn_dim, dim)),
        "l1b": r(ks[9], (1, ffn_dim)),
        "l2w": r(ks[10], (dim, ffn_dim)),
        "l2b": r(ks[11], (1, dim)),
        "n3g": jnp.ones((1, dim), jnp.float32),
        "n3b": jnp.zeros((1, dim), jnp.float32),
    }


if __name__ == "__main__":
    key = jax.random.PRNGKey(0)
    k_q, k_s, k_p = jax.random.split(key, 3)

    query = jax.random.normal(k_q, (B, LQ, DIM), dtype=jnp.float32)
    src = jax.random.normal(k_s, (B, LS, DIM), dtype=jnp.float32)

    # unused-by-the-layer auxiliary inputs (signature parity)
    reference_points = jnp.zeros((B, LQ, 2), jnp.float32)
    spatial_shapes = jnp.array([[4, 4]], jnp.int32)
    level_start_index = jnp.array([0], jnp.int32)

    layer_keys = jax.random.split(k_p, NUM_LAYERS)
    layer_params = [init_layer_params(k, DIM, FFN) for k in layer_keys]

    outs = transformer_decoder_pallas(
        query, src, layer_params, HEADS,
        reference_points, spatial_shapes, level_start_index, padding_mask=None)
    outs = [jax.block_until_ready(o) for o in outs]

    refs = transformer_decoder_ref(query, src, layer_params, HEADS)
    for o, r in zip(outs, refs):
        assert o.shape == (B, LQ, DIM)
        # bf16 matmul operands + approx reciprocal + tanh GELU vs f32/erf reference
        # -> looser tolerance than a pure-f32 kernel.
        assert jnp.allclose(o, r, atol=2e-2, rtol=2e-2), "mismatch vs reference"

    print("KERNEL_OK")
</pallas_src>

<mosaic_0001>
module attributes {stable_mosaic.version = 11 : i64} {
  func.func @kernel(%arg0: memref<16x32xf32, #tpu.memory_space<vmem>>, %arg1: memref<32x32xf32, #tpu.memory_space<vmem>>, %arg2: memref<16x16xf32, #tpu.memory_space<vmem>>, %arg3: memref<16x32xf32, #tpu.memory_space<vmem>>, %arg4: memref<480x128xbf16, #tpu.memory_space<vmem>>, %arg5: memref<232x128xf32, #tpu.memory_space<vmem>>, %arg6: memref<2x16x32xf32, #tpu.memory_space<vmem>>) attributes {dimension_semantics = [], scalar_prefetch = 0 : i64, scratch_operands = 0 : i64, tpu.core_type = #tpu.core_type<tc>} {
    %c0 = arith.constant 0 : index
    %c0_0 = arith.constant 0 : index
    %0 = vector.load %arg0[%c0, %c0_0] : memref<16x32xf32, #tpu.memory_space<vmem>>, vector<16x32xf32>
    %c0_1 = arith.constant 0 : index
    %c0_2 = arith.constant 0 : index
    %1 = vector.load %arg1[%c0_1, %c0_2] : memref<32x32xf32, #tpu.memory_space<vmem>>, vector<32x32xf32>
    %2 = arith.truncf %1 : vector<32x32xf32> to vector<32x32xbf16>
    %c0_3 = arith.constant 0 : index
    %c0_4 = arith.constant 0 : index
    %3 = vector.load %arg2[%c0_3, %c0_4] : memref<16x16xf32, #tpu.memory_space<vmem>>, vector<16x16xf32>
    %c0_5 = arith.constant 0 : index
    %c0_6 = arith.constant 0 : index
    %4 = vector.load %arg3[%c0_5, %c0_6] : memref<16x32xf32, #tpu.memory_space<vmem>>, vector<16x32xf32>
    %c0_7 = arith.constant 0 : index
    %c0_8 = arith.constant 0 : index
    %5 = vector.load %arg4[%c0_7, %c0_8] : memref<480x128xbf16, #tpu.memory_space<vmem>>, vector<32x64xbf16>
    %cst = arith.constant dense<0.000000e+00> : vector<32x64xf32>
    %6 = tpu.matmul %2, %5, %cst {dimension_numbers = #tpu.dot_dimension_numbers<[1], [0], [0], [1], [0, 0, 1, 1], [], []>} : vector<32x32xbf16>, vector<32x64xbf16>, vector<32x64xf32> -> vector<32x64xf32>
    %c0_9 = arith.constant 0 : index
    %c0_10 = arith.constant 0 : index
    %7 = vector.load %arg5[%c0_9, %c0_10] : memref<232x128xf32, #tpu.memory_space<vmem>>, vector<1x64xf32>
    %8 = vector.broadcast %7 : vector<1x64xf32> to vector<32x64xf32>
    %9 = arith.addf %6, %8 : vector<32x64xf32>
    %10 = vector.extract_strided_slice %9 {offsets = [0, 0], sizes = [32, 32], strides = [1, 1]} : vector<32x64xf32> to vector<32x32xf32>
    %11 = tpu.transpose %10, [1, 0] : vector<32x32xf32> -> vector<32x32xf32>
    %12 = vector.extract_strided_slice %9 {offsets = [0, 32], sizes = [32, 32], strides = [1, 1]} : vector<32x64xf32> to vector<32x32xf32>
    %13 = tpu.transpose %12, [1, 0] : vector<32x32xf32> -> vector<32x32xf32>
    %c128 = arith.constant 128 : index
    %c0_11 = arith.constant 0 : index
    %14 = vector.load %arg4[%c128, %c0_11] : memref<480x128xbf16, #tpu.memory_space<vmem>>, vector<32x128xbf16>
    %cst_12 = arith.constant dense<0.000000e+00> : vector<32x128xf32>
    %15 = tpu.matmul %2, %14, %cst_12 {dimension_numbers = #tpu.dot_dimension_numbers<[1], [0], [0], [1], [0, 0, 1, 1], [], []>} : vector<32x32xbf16>, vector<32x128xbf16>, vector<32x128xf32> -> vector<32x128xf32>
    %c56 = arith.constant 56 : index
    %c0_13 = arith.constant 0 : index
    %16 = vector.load %arg5[%c56, %c0_13] : memref<232x128xf32, #tpu.memory_space<vmem>>, vector<1x128xf32>
    %17 = vector.broadcast %16 : vector<1x128xf32> to vector<32x128xf32>
    %18 = arith.addf %15, %17 : vector<32x128xf32>
    %c352 = arith.constant 352 : index
    %c0_14 = arith.constant 0 : index
    %19 = vector.load %arg4[%c352, %c0_14] : memref<480x128xbf16, #tpu.memory_space<vmem>>, vector<32x128xbf16>
    %cst_15 = arith.constant dense<0.000000e+00> : vector<32x128xf32>
    %20 = tpu.matmul %2, %19, %cst_15 {dimension_numbers = #tpu.dot_dimension_numbers<[1], [0], [0], [1], [0, 0, 1, 1], [], []>} : vector<32x32xbf16>, vector<32x128xbf16>, vector<32x128xf32> -> vector<32x128xf32>
    %c168 = arith.constant 168 : index
    %c0_16 = arith.constant 0 : index
    %21 = vector.load %arg5[%c168, %c0_16] : memref<232x128xf32, #tpu.memory_space<vmem>>, vector<1x128xf32>
    %22 = vector.broadcast %21 : vector<1x128xf32> to vector<32x128xf32>
    %23 = arith.addf %20, %22 : vector<32x128xf32>
    %24 = arith.truncf %0 : vector<16x32xf32> to vector<16x32xbf16>
    %c32 = arith.constant 32 : index
    %c0_17 = arith.constant 0 : index
    %25 = vector.load %arg4[%c32, %c0_17] : memref<480x128xbf16, #tpu.memory_space<vmem>>, vector<32x64xbf16>
    %cst_18 = arith.constant dense<0.000000e+00> : vector<16x64xf32>
    %26 = tpu.matmul %24, %25, %cst_18 {dimension_numbers = #tpu.dot_dimension_numbers<[1], [0], [0], [1], [0, 0, 1, 1], [], []>} : vector<16x32xbf16>, vector<32x64xbf16>, vector<16x64xf32> -> vector<16x64xf32>
    %c8 = arith.constant 8 : index
    %c0_19 = arith.constant 0 : index
    %27 = vector.load %arg5[%c8, %c0_19] : memref<232x128xf32, #tpu.memory_space<vmem>>, vector<1x64xf32>
    %28 = vector.broadcast %27 : vector<1x64xf32> to vector<16x64xf32>
    %29 = arith.addf %26, %28 : vector<16x64xf32>
    %c64 = arith.constant 64 : index
    %c0_20 = arith.constant 0 : index
    %30 = vector.load %arg4[%c64, %c0_20] : memref<480x128xbf16, #tpu.memory_space<vmem>>, vector<32x128xbf16>
    %cst_21 = arith.constant dense<0.000000e+00> : vector<16x128xf32>
    %31 = tpu.matmul %24, %30, %cst_21 {dimension_numbers = #tpu.dot_dimension_numbers<[1], [0], [0], [1], [0, 0, 1, 1], [], []>} : vector<16x32xbf16>, vector<32x128xbf16>, vector<16x128xf32> -> vector<16x128xf32>
    %c16 = arith.constant 16 : index
    %c0_22 = arith.constant 0 : index
    %32 = vector.load %arg5[%c16, %c0_22] : memref<232x128xf32, #tpu.memory_space<vmem>>, vector<1x128xf32>
    %33 = vector.broadcast %32 : vector<1x128xf32> to vector<16x128xf32>
    %34 = arith.addf %31, %33 : vector<16x128xf32>
    %35 = vector.extract_strided_slice %29 {offsets = [0, 32], sizes = [16, 32], strides = [1, 1]} : vector<16x64xf32> to vector<16x32xf32>
    %36 = tpu.transpose %35, [1, 0] : vector<16x32xf32> -> vector<32x16xf32>
    %37 = vector.extract_strided_slice %29 {offsets = [0, 0], sizes = [16, 32], strides = [1, 1]} : vector<16x64xf32> to vector<16x32xf32>
    %cst_23 = arith.constant 0.000000e+00 : f32
    %38 = vector.broadcast %cst_23 : f32 to vector<16x32xf32>
    %39 = vector.extract_strided_slice %37 {offsets = [0, 0], sizes = [16, 8], strides = [1, 1]} : vector<16x32xf32> to vector<16x8xf32>
    %40 = arith.truncf %39 : vector<16x8xf32> to vector<16x8xbf16>
    %41 = vector.extract_strided_slice %36 {offsets = [0, 0], sizes = [8, 16], strides = [1, 1]} : vector<32x16xf32> to vector<8x16xf32>
    %42 = arith.truncf %41 : vector<8x16xf32> to vector<8x16xbf16>
    %cst_24 = arith.constant dense<0.000000e+00> : vector<16x16xf32>
    %43 = tpu.matmul %40, %42, %cst_24 {dimension_numbers = #tpu.dot_dimension_numbers<[1], [0], [0], [1], [0, 0, 1, 1], [], []>} : vector<16x8xbf16>, vector<8x16xbf16>, vector<16x16xf32> -> vector<16x16xf32>
    %44 = arith.addf %43, %3 : vector<16x16xf32>
    %cst_25 = arith.constant dense<0xFF800000> : vector<16xf32>
    %45 = vector.multi_reduction <maximumf>, %44, %cst_25 [1] : vector<16x16xf32> to vector<16xf32>
    %46 = vector.shape_cast %45 : vector<16xf32> to vector<16x1xf32>
    %47 = vector.broadcast %46 : vector<16x1xf32> to vector<16x16xf32>
    %48 = arith.subf %44, %47 : vector<16x16xf32>
    %49 = math.exp %48 : vector<16x16xf32>
    %cst_26 = arith.constant dense<0.000000e+00> : vector<16xf32>
    %50 = vector.multi_reduction <add>, %49, %cst_26 [1] : vector<16x16xf32> to vector<16xf32>
    %51 = vector.shape_cast %50 : vector<16xf32> to vector<16x1xf32>
    %52 = tpu.reciprocal %51 {approx = true} : vector<16x1xf32> -> vector<16x1xf32>
    %53 = vector.broadcast %52 : vector<16x1xf32> to vector<16x16xf32>
    %54 = arith.mulf %49, %53 : vector<16x16xf32>
    %55 = arith.truncf %54 : vector<16x16xf32> to vector<16x16xbf16>
    %56 = vector.extract_strided_slice %34 {offsets = [0, 0], sizes = [16, 32], strides = [1, 1]} : vector<16x128xf32> to vector<16x32xf32>
    %57 = arith.truncf %56 : vector<16x32xf32> to vector<16x32xbf16>
    %cst_27 = arith.constant dense<0.000000e+00> : vector<16x32xf32>
    %58 = tpu.matmul %55, %57, %cst_27 {dimension_numbers = #tpu.dot_dimension_numbers<[1], [0], [0], [1], [0, 0, 1, 1], [], []>} : vector<16x16xbf16>, vector<16x32xbf16>, vector<16x32xf32> -> vector<16x32xf32>
    %59 = arith.addf %38, %58 : vector<16x32xf32>
    %60 = vector.extract_strided_slice %37 {offsets = [0, 8], sizes = [16, 8], strides = [1, 1]} : vector<16x32xf32> to vector<16x8xf32>
    %61 = arith.truncf %60 : vector<16x8xf32> to vector<16x8xbf16>
    %62 = vector.extract_strided_slice %36 {offsets = [8, 0], sizes = [8, 16], strides = [1, 1]} : vector<32x16xf32> to vector<8x16xf32>
    %63 = arith.truncf %62 : vector<8x16xf32> to vector<8x16xbf16>
    %cst_28 = arith.constant dense<0.000000e+00> : vector<16x16xf32>
    %64 = tpu.matmul %61, %63, %cst_28 {dimension_numbers = #tpu.dot_dimension_numbers<[1], [0], [0], [1], [0, 0, 1, 1], [], []>} : vector<16x8xbf16>, vector<8x16xbf16>, vector<16x16xf32> -> vector<16x16xf32>
    %65 = arith.addf %64, %3 : vector<16x16xf32>
    %cst_29 = arith.constant dense<0xFF800000> : vector<16xf32>
    %66 = vector.multi_reduction <maximumf>, %65, %cst_29 [1] : vector<16x16xf32> to vector<16xf32>
    %67 = vector.shape_cast %66 : vector<16xf32> to vector<16x1xf32>
    %68 = vector.broadcast %67 : vector<16x1xf32> to vector<16x16xf32>
    %69 = arith.subf %65, %68 : vector<16x16xf32>
    %70 = math.exp %69 : vector<16x16xf32>
    %cst_30 = arith.constant dense<0.000000e+00> : vector<16xf32>
    %71 = vector.multi_reduction <add>, %70, %cst_30 [1] : vector<16x16xf32> to vector<16xf32>
    %72 = vector.shape_cast %71 : vector<16xf32> to vector<16x1xf32>
    %73 = tpu.reciprocal %72 {approx = true} : vector<16x1xf32> -> vector<16x1xf32>
    %74 = vector.broadcast %73 : vector<16x1xf32> to vector<16x16xf32>
    %75 = arith.mulf %70, %74 : vector<16x16xf32>
    %76 = arith.truncf %75 : vector<16x16xf32> to vector<16x16xbf16>
    %77 = vector.extract_strided_slice %34 {offsets = [0, 32], sizes = [16, 32], strides = [1, 1]} : vector<16x128xf32> to vector<16x32xf32>
    %78 = arith.truncf %77 : vector<16x32xf32> to vector<16x32xbf16>
    %cst_31 = arith.constant dense<0.000000e+00> : vector<16x32xf32>
    %79 = tpu.matmul %76, %78, %cst_31 {dimension_numbers = #tpu.dot_dimension_numbers<[1], [0], [0], [1], [0, 0, 1, 1], [], []>} : vector<16x16xbf16>, vector<16x32xbf16>, vector<16x32xf32> -> vector<16x32xf32>
    %80 = arith.addf %59, %79 : vector<16x32xf32>
    %81 = vector.extract_strided_slice %37 {offsets = [0, 16], sizes = [16, 8], strides = [1, 1]} : vector<16x32xf32> to vector<16x8xf32>
    %82 = arith.truncf %81 : vector<16x8xf32> to vector<16x8xbf16>
    %83 = vector.extract_strided_slice %36 {offsets = [16, 0], sizes = [8, 16], strides = [1, 1]} : vector<32x16xf32> to vector<8x16xf32>
    %84 = arith.truncf %83 : vector<8x16xf32> to vector<8x16xbf16>
    %cst_32 = arith.constant dense<0.000000e+00> : vector<16x16xf32>
    %85 = tpu.matmul %82, %84, %cst_32 {dimension_numbers = #tpu.dot_dimension_numbers<[1], [0], [0], [1], [0, 0, 1, 1], [], []>} : vector<16x8xbf16>, vector<8x16xbf16>, vector<16x16xf32> -> vector<16x16xf32>
    %86 = arith.addf %85, %3 : vector<16x16xf32>
    %cst_33 = arith.constant dense<0xFF800000> : vector<16xf32>
    %87 = vector.multi_reduction <maximumf>, %86, %cst_33 [1] : vector<16x16xf32> to vector<16xf32>
    %88 = vector.shape_cast %87 : vector<16xf32> to vector<16x1xf32>
    %89 = vector.broadcast %88 : vector<16x1xf32> to vector<16x16xf32>
    %90 = arith.subf %86, %89 : vector<16x16xf32>
    %91 = math.exp %90 : vector<16x16xf32>
    %cst_34 = arith.constant dense<0.000000e+00> : vector<16xf32>
    %92 = vector.multi_reduction <add>, %91, %cst_34 [1] : vector<16x16xf32> to vector<16xf32>
    %93 = vector.shape_cast %92 : vector<16xf32> to vector<16x1xf32>
    %94 = tpu.reciprocal %93 {approx = true} : vector<16x1xf32> -> vector<16x1xf32>
    %95 = vector.broadcast %94 : vector<16x1xf32> to vector<16x16xf32>
    %96 = arith.mulf %91, %95 : vector<16x16xf32>
    %97 = arith.truncf %96 : vector<16x16xf32> to vector<16x16xbf16>
    %98 = vector.extract_strided_slice %34 {offsets = [0, 64], sizes = [16, 32], strides = [1, 1]} : vector<16x128xf32> to vector<16x32xf32>
    %99 = arith.truncf %98 : vector<16x32xf32> to vector<16x32xbf16>
    %cst_35 = arith.constant dense<0.000000e+00> : vector<16x32xf32>
    %100 = tpu.matmul %97, %99, %cst_35 {dimension_numbers = #tpu.dot_dimension_numbers<[1], [0], [0], [1], [0, 0, 1, 1], [], []>} : vector<16x16xbf16>, vector<16x32xbf16>, vector<16x32xf32> -> vector<16x32xf32>
    %101 = arith.addf %80, %100 : vector<16x32xf32>
    %102 = vector.extract_strided_slice %37 {offsets = [0, 24], sizes = [16, 8], strides = [1, 1]} : vector<16x32xf32> to vector<16x8xf32>
    %103 = arith.truncf %102 : vector<16x8xf32> to vector<16x8xbf16>
    %104 = vector.extract_strided_slice %36 {offsets = [24, 0], sizes = [8, 16], strides = [1, 1]} : vector<32x16xf32> to vector<8x16xf32>
    %105 = arith.truncf %104 : vector<8x16xf32> to vector<8x16xbf16>
    %cst_36 = arith.constant dense<0.000000e+00> : vector<16x16xf32>
    %106 = tpu.matmul %103, %105, %cst_36 {dimension_numbers = #tpu.dot_dimension_numbers<[1], [0], [0], [1], [0, 0, 1, 1], [], []>} : vector<16x8xbf16>, vector<8x16xbf16>, vector<16x16xf32> -> vector<16x16xf32>
    %107 = arith.addf %106, %3 : vector<16x16xf32>
    %cst_37 = arith.constant dense<0xFF800000> : vector<16xf32>
    %108 = vector.multi_reduction <maximumf>, %107, %cst_37 [1] : vector<16x16xf32> to vector<16xf32>
    %109 = vector.shape_cast %108 : vector<16xf32> to vector<16x1xf32>
    %110 = vector.broadcast %109 : vector<16x1xf32> to vector<16x16xf32>
    %111 = arith.subf %107, %110 : vector<16x16xf32>
    %112 = math.exp %111 : vector<16x16xf32>
    %cst_38 = arith.constant dense<0.000000e+00> : vector<16xf32>
    %113 = vector.multi_reduction <add>, %112, %cst_38 [1] : vector<16x16xf32> to vector<16xf32>
    %114 = vector.shape_cast %113 : vector<16xf32> to vector<16x1xf32>
    %115 = tpu.reciprocal %114 {approx = true} : vector<16x1xf32> -> vector<16x1xf32>
    %116 = vector.broadcast %115 : vector<16x1xf32> to vector<16x16xf32>
    %117 = arith.mulf %112, %116 : vector<16x16xf32>
    %118 = arith.truncf %117 : vector<16x16xf32> to vector<16x16xbf16>
    %119 = vector.extract_strided_slice %34 {offsets = [0, 96], sizes = [16, 32], strides = [1, 1]} : vector<16x128xf32> to vector<16x32xf32>
    %120 = arith.truncf %119 : vector<16x32xf32> to vector<16x32xbf16>
    %cst_39 = arith.constant dense<0.000000e+00> : vector<16x32xf32>
    %121 = tpu.matmul %118, %120, %cst_39 {dimension_numbers = #tpu.dot_dimension_numbers<[1], [0], [0], [1], [0, 0, 1, 1], [], []>} : vector<16x16xbf16>, vector<16x32xbf16>, vector<16x32xf32> -> vector<16x32xf32>
    %122 = arith.addf %101, %121 : vector<16x32xf32>
    %c24 = arith.constant 24 : index
    %c0_40 = arith.constant 0 : index
    %123 = vector.load %arg5[%c24, %c0_40] : memref<232x128xf32, #tpu.memory_space<vmem>>, vector<1x32xf32>
    %124 = vector.broadcast %123 : vector<1x32xf32> to vector<16x32xf32>
    %125 = arith.addf %122, %124 : vector<16x32xf32>
    %126 = arith.addf %0, %125 : vector<16x32xf32>
    %c32_41 = arith.constant 32 : index
    %c0_42 = arith.constant 0 : index
    %127 = vector.load %arg5[%c32_41, %c0_42] : memref<232x128xf32, #tpu.memory_space<vmem>>, vector<1x32xf32>
    %c40 = arith.constant 40 : index
    %c0_43 = arith.constant 0 : index
    %128 = vector.load %arg5[%c40, %c0_43] : memref<232x128xf32, #tpu.memory_space<vmem>>, vector<1x32xf32>
    %cst_44 = arith.constant dense<0.000000e+00> : vector<16xf32>
    %129 = vector.multi_reduction <add>, %126, %cst_44 [1] : vector<16x32xf32> to vector<16xf32>
    %130 = vector.shape_cast %129 : vector<16xf32> to vector<16x1xf32>
    %cst_45 = arith.constant 3.200000e+01 : f32
    %131 = vector.broadcast %cst_45 : f32 to vector<16x1xf32>
    %132 = arith.divf %130, %131 : vector<16x1xf32>
    %133 = vector.broadcast %132 : vector<16x1xf32> to vector<16x32xf32>
    %134 = arith.subf %126, %133 : vector<16x32xf32>
    %135 = arith.mulf %134, %134 : vector<16x32xf32>
    %cst_46 = arith.constant dense<0.000000e+00> : vector<16xf32>
    %136 = vector.multi_reduction <add>, %135, %cst_46 [1] : vector<16x32xf32> to vector<16xf32>
    %137 = vector.shape_cast %136 : vector<16xf32> to vector<16x1xf32>
    %cst_47 = arith.constant 3.200000e+01 : f32
    %138 = vector.broadcast %cst_47 : f32 to vector<16x1xf32>
    %139 = arith.divf %137, %138 : vector<16x1xf32>
    %140 = vector.broadcast %132 : vector<16x1xf32> to vector<16x32xf32>
    %141 = arith.subf %126, %140 : vector<16x32xf32>
    %cst_48 = arith.constant 9.99999974E-6 : f32
    %142 = vector.broadcast %cst_48 : f32 to vector<16x1xf32>
    %143 = arith.addf %139, %142 : vector<16x1xf32>
    %144 = math.rsqrt %143 : vector<16x1xf32>
    %145 = vector.broadcast %144 : vector<16x1xf32> to vector<16x32xf32>
    %146 = arith.mulf %141, %145 : vector<16x32xf32>
    %147 = vector.broadcast %127 : vector<1x32xf32> to vector<16x32xf32>
    %148 = arith.mulf %146, %147 : vector<16x32xf32>
    %149 = vector.broadcast %128 : vector<1x32xf32> to vector<16x32xf32>
    %150 = arith.addf %148, %149 : vector<16x32xf32>
    %151 = arith.truncf %150 : vector<16x32xf32> to vector<16x32xbf16>
    %c96 = arith.constant 96 : index
    %c0_49 = arith.constant 0 : index
    %152 = vector.load %arg4[%c96, %c0_49] : memref<480x128xbf16, #tpu.memory_space<vmem>>, vector<32x32xbf16>
    %cst_50 = arith.constant dense<0.000000e+00> : vector<16x32xf32>
    %153 = tpu.matmul %151, %152, %cst_50 {dimension_numbers = #tpu.dot_dimension_numbers<[1], [0], [0], [1], [0, 0, 1, 1], [], []>} : vector<16x32xbf16>, vector<32x32xbf16>, vector<16x32xf32> -> vector<16x32xf32>
    %c48 = arith.constant 48 : index
    %c0_51 = arith.constant 0 : index
    %154 = vector.load %arg5[%c48, %c0_51] : memref<232x128xf32, #tpu.memory_space<vmem>>, vector<1x32xf32>
    %155 = vector.broadcast %154 : vector<1x32xf32> to vector<16x32xf32>
    %156 = arith.addf %153, %155 : vector<16x32xf32>
    %cst_52 = arith.constant 0.000000e+00 : f32
    %157 = vector.broadcast %cst_52 : f32 to vector<16x32xf32>
    %158 = vector.extract_strided_slice %156 {offsets = [0, 0], sizes = [16, 8], strides = [1, 1]} : vector<16x32xf32> to vector<16x8xf32>
    %159 = arith.truncf %158 : vector<16x8xf32> to vector<16x8xbf16>
    %160 = vector.extract_strided_slice %11 {offsets = [0, 0], sizes = [8, 32], strides = [1, 1]} : vector<32x32xf32> to vector<8x32xf32>
    %161 = arith.truncf %160 : vector<8x32xf32> to vector<8x32xbf16>
    %cst_53 = arith.constant dense<0.000000e+00> : vector<16x32xf32>
    %162 = tpu.matmul %159, %161, %cst_53 {dimension_numbers = #tpu.dot_dimension_numbers<[1], [0], [0], [1], [0, 0, 1, 1], [], []>} : vector<16x8xbf16>, vector<8x32xbf16>, vector<16x32xf32> -> vector<16x32xf32>
    %163 = arith.addf %162, %4 : vector<16x32xf32>
    %cst_54 = arith.constant dense<0xFF800000> : vector<16xf32>
    %164 = vector.multi_reduction <maximumf>, %163, %cst_54 [1] : vector<16x32xf32> to vector<16xf32>
    %165 = vector.shape_cast %164 : vector<16xf32> to vector<16x1xf32>
    %166 = vector.broadcast %165 : vector<16x1xf32> to vector<16x32xf32>
    %167 = arith.subf %163, %166 : vector<16x32xf32>
    %168 = math.exp %167 : vector<16x32xf32>
    %cst_55 = arith.constant dense<0.000000e+00> : vector<16xf32>
    %169 = vector.multi_reduction <add>, %168, %cst_55 [1] : vector<16x32xf32> to vector<16xf32>
    %170 = vector.shape_cast %169 : vector<16xf32> to vector<16x1xf32>
    %171 = tpu.reciprocal %170 {approx = true} : vector<16x1xf32> -> vector<16x1xf32>
    %172 = vector.broadcast %171 : vector<16x1xf32> to vector<16x32xf32>
    %173 = arith.mulf %168, %172 : vector<16x32xf32>
    %174 = arith.truncf %173 : vector<16x32xf32> to vector<16x32xbf16>
    %175 = vector.extract_strided_slice %18 {offsets = [0, 0], sizes = [32, 32], strides = [1, 1]} : vector<32x128xf32> to vector<32x32xf32>
    %176 = arith.truncf %175 : vector<32x32xf32> to vector<32x32xbf16>
    %cst_56 = arith.constant dense<0.000000e+00> : vector<16x32xf32>
    %177 = tpu.matmul %174, %176, %cst_56 {dimension_numbers = #tpu.dot_dimension_numbers<[1], [0], [0], [1], [0, 0, 1, 1], [], []>} : vector<16x32xbf16>, vector<32x32xbf16>, vector<16x32xf32> -> vector<16x32xf32>
    %178 = arith.addf %157, %177 : vector<16x32xf32>
    %179 = vector.extract_strided_slice %156 {offsets = [0, 8], sizes = [16, 8], strides = [1, 1]} : vector<16x32xf32> to vector<16x8xf32>
    %180 = arith.truncf %179 : vector<16x8xf32> to vector<16x8xbf16>
    %181 = vector.extract_strided_slice %11 {offsets = [8, 0], sizes = [8, 32], strides = [1, 1]} : vector<32x32xf32> to vector<8x32xf32>
    %182 = arith.truncf %181 : vector<8x32xf32> to vector<8x32xbf16>
    %cst_57 = arith.constant dense<0.000000e+00> : vector<16x32xf32>
    %183 = tpu.matmul %180, %182, %cst_57 {dimension_numbers = #tpu.dot_dimension_numbers<[1], [0], [0], [1], [0, 0, 1, 1], [], []>} : vector<16x8xbf16>, vector<8x32xbf16>, vector<16x32xf32> -> vector<16x32xf32>
    %184 = arith.addf %183, %4 : vector<16x32xf32>
    %cst_58 = arith.constant dense<0xFF800000> : vector<16xf32>
    %185 = vector.multi_reduction <maximumf>, %184, %cst_58 [1] : vector<16x32xf32> to vector<16xf32>
    %186 = vector.shape_cast %185 : vector<16xf32> to vector<16x1xf32>
    %187 = vector.broadcast %186 : vector<16x1xf32> to vector<16x32xf32>
    %188 = arith.subf %184, %187 : vector<16x32xf32>
    %189 = math.exp %188 : vector<16x32xf32>
    %cst_59 = arith.constant dense<0.000000e+00> : vector<16xf32>
    %190 = vector.multi_reduction <add>, %189, %cst_59 [1] : vector<16x32xf32> to vector<16xf32>
    %191 = vector.shape_cast %190 : vector<16xf32> to vector<16x1xf32>
    %192 = tpu.reciprocal %191 {approx = true} : vector<16x1xf32> -> vector<16x1xf32>
    %193 = vector.broadcast %192 : vector<16x1xf32> to vector<16x32xf32>
    %194 = arith.mulf %189, %193 : vector<16x32xf32>
    %195 = arith.truncf %194 : vector<16x32xf32> to vector<16x32xbf16>
    %196 = vector.extract_strided_slice %18 {offsets = [0, 32], sizes = [32, 32], strides = [1, 1]} : vector<32x128xf32> to vector<32x32xf32>
    %197 = arith.truncf %196 : vector<32x32xf32> to vector<32x32xbf16>
    %cst_60 = arith.constant dense<0.000000e+00> : vector<16x32xf32>
    %198 = tpu.matmul %195, %197, %cst_60 {dimension_numbers = #tpu.dot_dimension_numbers<[1], [0], [0], [1], [0, 0, 1, 1], [], []>} : vector<16x32xbf16>, vector<32x32xbf16>, vector<16x32xf32> -> vector<16x32xf32>
    %199 = arith.addf %178, %198 : vector<16x32xf32>
    %200 = vector.extract_strided_slice %156 {offsets = [0, 16], sizes = [16, 8], strides = [1, 1]} : vector<16x32xf32> to vector<16x8xf32>
    %201 = arith.truncf %200 : vector<16x8xf32> to vector<16x8xbf16>
    %202 = vector.extract_strided_slice %11 {offsets = [16, 0], sizes = [8, 32], strides = [1, 1]} : vector<32x32xf32> to vector<8x32xf32>
    %203 = arith.truncf %202 : vector<8x32xf32> to vector<8x32xbf16>
    %cst_61 = arith.constant dense<0.000000e+00> : vector<16x32xf32>
    %204 = tpu.matmul %201, %203, %cst_61 {dimension_numbers = #tpu.dot_dimension_numbers<[1], [0], [0], [1], [0, 0, 1, 1], [], []>} : vector<16x8xbf16>, vector<8x32xbf16>, vector<16x32xf32> -> vector<16x32xf32>
    %205 = arith.addf %204, %4 : vector<16x32xf32>
    %cst_62 = arith.constant dense<0xFF800000> : vector<16xf32>
    %206 = vector.multi_reduction <maximumf>, %205, %cst_62 [1] : vector<16x32xf32> to vector<16xf32>
    %207 = vector.shape_cast %206 : vector<16xf32> to vector<16x1xf32>
    %208 = vector.broadcast %207 : vector<16x1xf32> to vector<16x32xf32>
    %209 = arith.subf %205, %208 : vector<16x32xf32>
    %210 = math.exp %209 : vector<16x32xf32>
    %cst_63 = arith.constant dense<0.000000e+00> : vector<16xf32>
    %211 = vector.multi_reduction <add>, %210, %cst_63 [1] : vector<16x32xf32> to vector<16xf32>
    %212 = vector.shape_cast %211 : vector<16xf32> to vector<16x1xf32>
    %213 = tpu.reciprocal %212 {approx = true} : vector<16x1xf32> -> vector<16x1xf32>
    %214 = vector.broadcast %213 : vector<16x1xf32> to vector<16x32xf32>
    %215 = arith.mulf %210, %214 : vector<16x32xf32>
    %216 = arith.truncf %215 : vector<16x32xf32> to vector<16x32xbf16>
    %217 = vector.extract_strided_slice %18 {offsets = [0, 64], sizes = [32, 32], strides = [1, 1]} : vector<32x128xf32> to vector<32x32xf32>
    %218 = arith.truncf %217 : vector<32x32xf32> to vector<32x32xbf16>
    %cst_64 = arith.constant dense<0.000000e+00> : vector<16x32xf32>
    %219 = tpu.matmul %216, %218, %cst_64 {dimension_numbers = #tpu.dot_dimension_numbers<[1], [0], [0], [1], [0, 0, 1, 1], [], []>} : vector<16x32xbf16>, vector<32x32xbf16>, vector<16x32xf32> -> vector<16x32xf32>
    %220 = arith.addf %199, %219 : vector<16x32xf32>
    %221 = vector.extract_strided_slice %156 {offsets = [0, 24], sizes = [16, 8], strides = [1, 1]} : vector<16x32xf32> to vector<16x8xf32>
    %222 = arith.truncf %221 : vector<16x8xf32> to vector<16x8xbf16>
    %223 = vector.extract_strided_slice %11 {offsets = [24, 0], sizes = [8, 32], strides = [1, 1]} : vector<32x32xf32> to vector<8x32xf32>
    %224 = arith.truncf %223 : vector<8x32xf32> to vector<8x32xbf16>
    %cst_65 = arith.constant dense<0.000000e+00> : vector<16x32xf32>
    %225 = tpu.matmul %222, %224, %cst_65 {dimension_numbers = #tpu.dot_dimension_numbers<[1], [0], [0], [1], [0, 0, 1, 1], [], []>} : vector<16x8xbf16>, vector<8x32xbf16>, vector<16x32xf32> -> vector<16x32xf32>
    %226 = arith.addf %225, %4 : vector<16x32xf32>
    %cst_66 = arith.constant dense<0xFF800000> : vector<16xf32>
    %227 = vector.multi_reduction <maximumf>, %226, %cst_66 [1] : vector<16x32xf32> to vector<16xf32>
    %228 = vector.shape_cast %227 : vector<16xf32> to vector<16x1xf32>
    %229 = vector.broadcast %228 : vector<16x1xf32> to vector<16x32xf32>
    %230 = arith.subf %226, %229 : vector<16x32xf32>
    %231 = math.exp %230 : vector<16x32xf32>
    %cst_67 = arith.constant dense<0.000000e+00> : vector<16xf32>
    %232 = vector.multi_reduction <add>, %231, %cst_67 [1] : vector<16x32xf32> to vector<16xf32>
    %233 = vector.shape_cast %232 : vector<16xf32> to vector<16x1xf32>
    %234 = tpu.reciprocal %233 {approx = true} : vector<16x1xf32> -> vector<16x1xf32>
    %235 = vector.broadcast %234 : vector<16x1xf32> to vector<16x32xf32>
    %236 = arith.mulf %231, %235 : vector<16x32xf32>
    %237 = arith.truncf %236 : vector<16x32xf32> to vector<16x32xbf16>
    %238 = vector.extract_strided_slice %18 {offsets = [0, 96], sizes = [32, 32], strides = [1, 1]} : vector<32x128xf32> to vector<32x32xf32>
    %239 = arith.truncf %238 : vector<32x32xf32> to vector<32x32xbf16>
    %cst_68 = arith.constant dense<0.000000e+00> : vector<16x32xf32>
    %240 = tpu.matmul %237, %239, %cst_68 {dimension_numbers = #tpu.dot_dimension_numbers<[1], [0], [0], [1], [0, 0, 1, 1], [], []>} : vector<16x32xbf16>, vector<32x32xbf16>, vector<16x32xf32> -> vector<16x32xf32>
    %241 = arith.addf %220, %240 : vector<16x32xf32>
    %c64_69 = arith.constant 64 : index
    %c0_70 = arith.constant 0 : index
    %242 = vector.load %arg5[%c64_69, %c0_70] : memref<232x128xf32, #tpu.memory_space<vmem>>, vector<1x32xf32>
    %243 = vector.broadcast %242 : vector<1x32xf32> to vector<16x32xf32>
    %244 = arith.addf %241, %243 : vector<16x32xf32>
    %245 = arith.addf %150, %244 : vector<16x32xf32>
    %c72 = arith.constant 72 : index
    %c0_71 = arith.constant 0 : index
    %246 = vector.load %arg5[%c72, %c0_71] : memref<232x128xf32, #tpu.memory_space<vmem>>, vector<1x32xf32>
    %c80 = arith.constant 80 : index
    %c0_72 = arith.constant 0 : index
    %247 = vector.load %arg5[%c80, %c0_72] : memref<232x128xf32, #tpu.memory_space<vmem>>, vector<1x32xf32>
    %cst_73 = arith.constant dense<0.000000e+00> : vector<16xf32>
    %248 = vector.multi_reduction <add>, %245, %cst_73 [1] : vector<16x32xf32> to vector<16xf32>
    %249 = vector.shape_cast %248 : vector<16xf32> to vector<16x1xf32>
    %cst_74 = arith.constant 3.200000e+01 : f32
    %250 = vector.broadcast %cst_74 : f32 to vector<16x1xf32>
    %251 = arith.divf %249, %250 : vector<16x1xf32>
    %252 = vector.broadcast %251 : vector<16x1xf32> to vector<16x32xf32>
    %253 = arith.subf %245, %252 : vector<16x32xf32>
    %254 = arith.mulf %253, %253 : vector<16x32xf32>
    %cst_75 = arith.constant dense<0.000000e+00> : vector<16xf32>
    %255 = vector.multi_reduction <add>, %254, %cst_75 [1] : vector<16x32xf32> to vector<16xf32>
    %256 = vector.shape_cast %255 : vector<16xf32> to vector<16x1xf32>
    %cst_76 = arith.constant 3.200000e+01 : f32
    %257 = vector.broadcast %cst_76 : f32 to vector<16x1xf32>
    %258 = arith.divf %256, %257 : vector<16x1xf32>
    %259 = vector.broadcast %251 : vector<16x1xf32> to vector<16x32xf32>
    %260 = arith.subf %245, %259 : vector<16x32xf32>
    %cst_77 = arith.constant 9.99999974E-6 : f32
    %261 = vector.broadcast %cst_77 : f32 to vector<16x1xf32>
    %262 = arith.addf %258, %261 : vector<16x1xf32>
    %263 = math.rsqrt %262 : vector<16x1xf32>
    %264 = vector.broadcast %263 : vector<16x1xf32> to vector<16x32xf32>
    %265 = arith.mulf %260, %264 : vector<16x32xf32>
    %266 = vector.broadcast %246 : vector<1x32xf32> to vector<16x32xf32>
    %267 = arith.mulf %265, %266 : vector<16x32xf32>
    %268 = vector.broadcast %247 : vector<1x32xf32> to vector<16x32xf32>
    %269 = arith.addf %267, %268 : vector<16x32xf32>
    %270 = arith.truncf %269 : vector<16x32xf32> to vector<16x32xbf16>
    %c160 = arith.constant 160 : index
    %c0_78 = arith.constant 0 : index
    %271 = vector.load %arg4[%c160, %c0_78] : memref<480x128xbf16, #tpu.memory_space<vmem>>, vector<32x64xbf16>
    %cst_79 = arith.constant dense<0.000000e+00> : vector<16x64xf32>
    %272 = tpu.matmul %270, %271, %cst_79 {dimension_numbers = #tpu.dot_dimension_numbers<[1], [0], [0], [1], [0, 0, 1, 1], [], []>} : vector<16x32xbf16>, vector<32x64xbf16>, vector<16x64xf32> -> vector<16x64xf32>
    %c88 = arith.constant 88 : index
    %c0_80 = arith.constant 0 : index
    %273 = vector.load %arg5[%c88, %c0_80] : memref<232x128xf32, #tpu.memory_space<vmem>>, vector<1x64xf32>
    %274 = vector.broadcast %273 : vector<1x64xf32> to vector<16x64xf32>
    %275 = arith.addf %272, %274 : vector<16x64xf32>
    %276 = arith.mulf %275, %275 : vector<16x64xf32>
    %277 = arith.mulf %275, %276 : vector<16x64xf32>
    %cst_81 = arith.constant 4.471500e-02 : f32
    %278 = vector.broadcast %cst_81 : f32 to vector<16x64xf32>
    %279 = arith.mulf %278, %277 : vector<16x64xf32>
    %280 = arith.addf %275, %279 : vector<16x64xf32>
    %cst_82 = arith.constant 0.797884583 : f32
    %281 = vector.broadcast %cst_82 : f32 to vector<16x64xf32>
    %282 = arith.mulf %281, %280 : vector<16x64xf32>
    %283 = math.tanh %282 : vector<16x64xf32>
    %cst_83 = arith.constant 1.000000e+00 : f32
    %284 = vector.broadcast %cst_83 : f32 to vector<16x64xf32>
    %285 = arith.addf %284, %283 : vector<16x64xf32>
    %cst_84 = arith.constant 5.000000e-01 : f32
    %286 = vector.broadcast %cst_84 : f32 to vector<16x64xf32>
    %287 = arith.mulf %286, %285 : vector<16x64xf32>
    %288 = arith.mulf %275, %287 : vector<16x64xf32>
    %289 = arith.truncf %288 : vector<16x64xf32> to vector<16x64xbf16>
    %c192 = arith.constant 192 : index
    %c0_85 = arith.constant 0 : index
    %290 = vector.load %arg4[%c192, %c0_85] : memref<480x128xbf16, #tpu.memory_space<vmem>>, vector<64x32xbf16>
    %cst_86 = arith.constant dense<0.000000e+00> : vector<16x32xf32>
    %291 = tpu.matmul %289, %290, %cst_86 {dimension_numbers = #tpu.dot_dimension_numbers<[1], [0], [0], [1], [0, 0, 1, 1], [], []>} : vector<16x64xbf16>, vector<64x32xbf16>, vector<16x32xf32> -> vector<16x32xf32>
    %c96_87 = arith.constant 96 : index
    %c0_88 = arith.constant 0 : index
    %292 = vector.load %arg5[%c96_87, %c0_88] : memref<232x128xf32, #tpu.memory_space<vmem>>, vector<1x32xf32>
    %293 = vector.broadcast %292 : vector<1x32xf32> to vector<16x32xf32>
    %294 = arith.addf %291, %293 : vector<16x32xf32>
    %295 = arith.addf %269, %294 : vector<16x32xf32>
    %c104 = arith.constant 104 : index
    %c0_89 = arith.constant 0 : index
    %296 = vector.load %arg5[%c104, %c0_89] : memref<232x128xf32, #tpu.memory_space<vmem>>, vector<1x32xf32>
    %c112 = arith.constant 112 : index
    %c0_90 = arith.constant 0 : index
    %297 = vector.load %arg5[%c112, %c0_90] : memref<232x128xf32, #tpu.memory_space<vmem>>, vector<1x32xf32>
    %cst_91 = arith.constant dense<0.000000e+00> : vector<16xf32>
    %298 = vector.multi_reduction <add>, %295, %cst_91 [1] : vector<16x32xf32> to vector<16xf32>
    %299 = vector.shape_cast %298 : vector<16xf32> to vector<16x1xf32>
    %cst_92 = arith.constant 3.200000e+01 : f32
    %300 = vector.broadcast %cst_92 : f32 to vector<16x1xf32>
    %301 = arith.divf %299, %300 : vector<16x1xf32>
    %302 = vector.broadcast %301 : vector<16x1xf32> to vector<16x32xf32>
    %303 = arith.subf %295, %302 : vector<16x32xf32>
    %304 = arith.mulf %303, %303 : vector<16x32xf32>
    %cst_93 = arith.constant dense<0.000000e+00> : vector<16xf32>
    %305 = vector.multi_reduction <add>, %304, %cst_93 [1] : vector<16x32xf32> to vector<16xf32>
    %306 = vector.shape_cast %305 : vector<16xf32> to vector<16x1xf32>
    %cst_94 = arith.constant 3.200000e+01 : f32
    %307 = vector.broadcast %cst_94 : f32 to vector<16x1xf32>
    %308 = arith.divf %306, %307 : vector<16x1xf32>
    %309 = vector.broadcast %301 : vector<16x1xf32> to vector<16x32xf32>
    %310 = arith.subf %295, %309 : vector<16x32xf32>
    %cst_95 = arith.constant 9.99999974E-6 : f32
    %311 = vector.broadcast %cst_95 : f32 to vector<16x1xf32>
    %312 = arith.addf %308, %311 : vector<16x1xf32>
    %313 = math.rsqrt %312 : vector<16x1xf32>
    %314 = vector.broadcast %313 : vector<16x1xf32> to vector<16x32xf32>
    %315 = arith.mulf %310, %314 : vector<16x32xf32>
    %316 = vector.broadcast %296 : vector<1x32xf32> to vector<16x32xf32>
    %317 = arith.mulf %315, %316 : vector<16x32xf32>
    %318 = vector.broadcast %297 : vector<1x32xf32> to vector<16x32xf32>
    %319 = arith.addf %317, %318 : vector<16x32xf32>
    %c0_96 = arith.constant 0 : index
    %c0_97 = arith.constant 0 : index
    %c0_98 = arith.constant 0 : index
    %320 = vector.load %arg6[%c0_96, %c0_97, %c0_98] : memref<2x16x32xf32, #tpu.memory_space<vmem>>, vector<1x16x32xf32>
    %321 = vector.shape_cast %320 : vector<1x16x32xf32> to vector<16x32xf32>
    %322 = vector.shape_cast %319 : vector<16x32xf32> to vector<1x16x32xf32>
    tpu.vector_store %arg6[%c0_96, %c0_97, %c0_98], %322 {strides = array<i32>} : memref<2x16x32xf32, #tpu.memory_space<vmem>>, vector<1x16x32xf32>,
    %323 = arith.truncf %319 : vector<16x32xf32> to vector<16x32xbf16>
    %c256 = arith.constant 256 : index
    %c0_99 = arith.constant 0 : index
    %324 = vector.load %arg4[%c256, %c0_99] : memref<480x128xbf16, #tpu.memory_space<vmem>>, vector<32x64xbf16>
    %cst_100 = arith.constant dense<0.000000e+00> : vector<16x64xf32>
    %325 = tpu.matmul %323, %324, %cst_100 {dimension_numbers = #tpu.dot_dimension_numbers<[1], [0], [0], [1], [0, 0, 1, 1], [], []>} : vector<16x32xbf16>, vector<32x64xbf16>, vector<16x64xf32> -> vector<16x64xf32>
    %c120 = arith.constant 120 : index
    %c0_101 = arith.constant 0 : index
    %326 = vector.load %arg5[%c120, %c0_101] : memref<232x128xf32, #tpu.memory_space<vmem>>, vector<1x64xf32>
    %327 = vector.broadcast %326 : vector<1x64xf32> to vector<16x64xf32>
    %328 = arith.addf %325, %327 : vector<16x64xf32>
    %c288 = arith.constant 288 : index
    %c0_102 = arith.constant 0 : index
    %329 = vector.load %arg4[%c288, %c0_102] : memref<480x128xbf16, #tpu.memory_space<vmem>>, vector<32x128xbf16>
    %cst_103 = arith.constant dense<0.000000e+00> : vector<16x128xf32>
    %330 = tpu.matmul %323, %329, %cst_103 {dimension_numbers = #tpu.dot_dimension_numbers<[1], [0], [0], [1], [0, 0, 1, 1], [], []>} : vector<16x32xbf16>, vector<32x128xbf16>, vector<16x128xf32> -> vector<16x128xf32>
    %c128_104 = arith.constant 128 : index
    %c0_105 = arith.constant 0 : index
    %331 = vector.load %arg5[%c128_104, %c0_105] : memref<232x128xf32, #tpu.memory_space<vmem>>, vector<1x128xf32>
    %332 = vector.broadcast %331 : vector<1x128xf32> to vector<16x128xf32>
    %333 = arith.addf %330, %332 : vector<16x128xf32>
    %334 = vector.extract_strided_slice %328 {offsets = [0, 32], sizes = [16, 32], strides = [1, 1]} : vector<16x64xf32> to vector<16x32xf32>
    %335 = tpu.transpose %334, [1, 0] : vector<16x32xf32> -> vector<32x16xf32>
    %336 = vector.extract_strided_slice %328 {offsets = [0, 0], sizes = [16, 32], strides = [1, 1]} : vector<16x64xf32> to vector<16x32xf32>
    %cst_106 = arith.constant 0.000000e+00 : f32
    %337 = vector.broadcast %cst_106 : f32 to vector<16x32xf32>
    %338 = vector.extract_strided_slice %336 {offsets = [0, 0], sizes = [16, 8], strides = [1, 1]} : vector<16x32xf32> to vector<16x8xf32>
    %339 = arith.truncf %338 : vector<16x8xf32> to vector<16x8xbf16>
    %340 = vector.extract_strided_slice %335 {offsets = [0, 0], sizes = [8, 16], strides = [1, 1]} : vector<32x16xf32> to vector<8x16xf32>
    %341 = arith.truncf %340 : vector<8x16xf32> to vector<8x16xbf16>
    %cst_107 = arith.constant dense<0.000000e+00> : vector<16x16xf32>
    %342 = tpu.matmul %339, %341, %cst_107 {dimension_numbers = #tpu.dot_dimension_numbers<[1], [0], [0], [1], [0, 0, 1, 1], [], []>} : vector<16x8xbf16>, vector<8x16xbf16>, vector<16x16xf32> -> vector<16x16xf32>
    %343 = arith.addf %342, %3 : vector<16x16xf32>
    %cst_108 = arith.constant dense<0xFF800000> : vector<16xf32>
    %344 = vector.multi_reduction <maximumf>, %343, %cst_108 [1] : vector<16x16xf32> to vector<16xf32>
    %345 = vector.shape_cast %344 : vector<16xf32> to vector<16x1xf32>
    %346 = vector.broadcast %345 : vector<16x1xf32> to vector<16x16xf32>
    %347 = arith.subf %343, %346 : vector<16x16xf32>
    %348 = math.exp %347 : vector<16x16xf32>
    %cst_109 = arith.constant dense<0.000000e+00> : vector<16xf32>
    %349 = vector.multi_reduction <add>, %348, %cst_109 [1] : vector<16x16xf32> to vector<16xf32>
    %350 = vector.shape_cast %349 : vector<16xf32> to vector<16x1xf32>
    %351 = tpu.reciprocal %350 {approx = true} : vector<16x1xf32> -> vector<16x1xf32>
    %352 = vector.broadcast %351 : vector<16x1xf32> to vector<16x16xf32>
    %353 = arith.mulf %348, %352 : vector<16x16xf32>
    %354 = arith.truncf %353 : vector<16x16xf32> to vector<16x16xbf16>
    %355 = vector.extract_strided_slice %333 {offsets = [0, 0], sizes = [16, 32], strides = [1, 1]} : vector<16x128xf32> to vector<16x32xf32>
    %356 = arith.truncf %355 : vector<16x32xf32> to vector<16x32xbf16>
    %cst_110 = arith.constant dense<0.000000e+00> : vector<16x32xf32>
    %357 = tpu.matmul %354, %356, %cst_110 {dimension_numbers = #tpu.dot_dimension_numbers<[1], [0], [0], [1], [0, 0, 1, 1], [], []>} : vector<16x16xbf16>, vector<16x32xbf16>, vector<16x32xf32> -> vector<16x32xf32>
    %358 = arith.addf %337, %357 : vector<16x32xf32>
    %359 = vector.extract_strided_slice %336 {offsets = [0, 8], sizes = [16, 8], strides = [1, 1]} : vector<16x32xf32> to vector<16x8xf32>
    %360 = arith.truncf %359 : vector<16x8xf32> to vector<16x8xbf16>
    %361 = vector.extract_strided_slice %335 {offsets = [8, 0], sizes = [8, 16], strides = [1, 1]} : vector<32x16xf32> to vector<8x16xf32>
    %362 = arith.truncf %361 : vector<8x16xf32> to vector<8x16xbf16>
    %cst_111 = arith.constant dense<0.000000e+00> : vector<16x16xf32>
    %363 = tpu.matmul %360, %362, %cst_111 {dimension_numbers = #tpu.dot_dimension_numbers<[1], [0], [0], [1], [0, 0, 1, 1], [], []>} : vector<16x8xbf16>, vector<8x16xbf16>, vector<16x16xf32> -> vector<16x16xf32>
    %364 = arith.addf %363, %3 : vector<16x16xf32>
    %cst_112 = arith.constant dense<0xFF800000> : vector<16xf32>
    %365 = vector.multi_reduction <maximumf>, %364, %cst_112 [1] : vector<16x16xf32> to vector<16xf32>
    %366 = vector.shape_cast %365 : vector<16xf32> to vector<16x1xf32>
    %367 = vector.broadcast %366 : vector<16x1xf32> to vector<16x16xf32>
    %368 = arith.subf %364, %367 : vector<16x16xf32>
    %369 = math.exp %368 : vector<16x16xf32>
    %cst_113 = arith.constant dense<0.000000e+00> : vector<16xf32>
    %370 = vector.multi_reduction <add>, %369, %cst_113 [1] : vector<16x16xf32> to vector<16xf32>
    %371 = vector.shape_cast %370 : vector<16xf32> to vector<16x1xf32>
    %372 = tpu.reciprocal %371 {approx = true} : vector<16x1xf32> -> vector<16x1xf32>
    %373 = vector.broadcast %372 : vector<16x1xf32> to vector<16x16xf32>
    %374 = arith.mulf %369, %373 : vector<16x16xf32>
    %375 = arith.truncf %374 : vector<16x16xf32> to vector<16x16xbf16>
    %376 = vector.extract_strided_slice %333 {offsets = [0, 32], sizes = [16, 32], strides = [1, 1]} : vector<16x128xf32> to vector<16x32xf32>
    %377 = arith.truncf %376 : vector<16x32xf32> to vector<16x32xbf16>
    %cst_114 = arith.constant dense<0.000000e+00> : vector<16x32xf32>
    %378 = tpu.matmul %375, %377, %cst_114 {dimension_numbers = #tpu.dot_dimension_numbers<[1], [0], [0], [1], [0, 0, 1, 1], [], []>} : vector<16x16xbf16>, vector<16x32xbf16>, vector<16x32xf32> -> vector<16x32xf32>
    %379 = arith.addf %358, %378 : vector<16x32xf32>
    %380 = vector.extract_strided_slice %336 {offsets = [0, 16], sizes = [16, 8], strides = [1, 1]} : vector<16x32xf32> to vector<16x8xf32>
    %381 = arith.truncf %380 : vector<16x8xf32> to vector<16x8xbf16>
    %382 = vector.extract_strided_slice %335 {offsets = [16, 0], sizes = [8, 16], strides = [1, 1]} : vector<32x16xf32> to vector<8x16xf32>
    %383 = arith.truncf %382 : vector<8x16xf32> to vector<8x16xbf16>
    %cst_115 = arith.constant dense<0.000000e+00> : vector<16x16xf32>
    %384 = tpu.matmul %381, %383, %cst_115 {dimension_numbers = #tpu.dot_dimension_numbers<[1], [0], [0], [1], [0, 0, 1, 1], [], []>} : vector<16x8xbf16>, vector<8x16xbf16>, vector<16x16xf32> -> vector<16x16xf32>
    %385 = arith.addf %384, %3 : vector<16x16xf32>
    %cst_116 = arith.constant dense<0xFF800000> : vector<16xf32>
    %386 = vector.multi_reduction <maximumf>, %385, %cst_116 [1] : vector<16x16xf32> to vector<16xf32>
    %387 = vector.shape_cast %386 : vector<16xf32> to vector<16x1xf32>
    %388 = vector.broadcast %387 : vector<16x1xf32> to vector<16x16xf32>
    %389 = arith.subf %385, %388 : vector<16x16xf32>
    %390 = math.exp %389 : vector<16x16xf32>
    %cst_117 = arith.constant dense<0.000000e+00> : vector<16xf32>
    %391 = vector.multi_reduction <add>, %390, %cst_117 [1] : vector<16x16xf32> to vector<16xf32>
    %392 = vector.shape_cast %391 : vector<16xf32> to vector<16x1xf32>
    %393 = tpu.reciprocal %392 {approx = true} : vector<16x1xf32> -> vector<16x1xf32>
    %394 = vector.broadcast %393 : vector<16x1xf32> to vector<16x16xf32>
    %395 = arith.mulf %390, %394 : vector<16x16xf32>
    %396 = arith.truncf %395 : vector<16x16xf32> to vector<16x16xbf16>
    %397 = vector.extract_strided_slice %333 {offsets = [0, 64], sizes = [16, 32], strides = [1, 1]} : vector<16x128xf32> to vector<16x32xf32>
    %398 = arith.truncf %397 : vector<16x32xf32> to vector<16x32xbf16>
    %cst_118 = arith.constant dense<0.000000e+00> : vector<16x32xf32>
    %399 = tpu.matmul %396, %398, %cst_118 {dimension_numbers = #tpu.dot_dimension_numbers<[1], [0], [0], [1], [0, 0, 1, 1], [], []>} : vector<16x16xbf16>, vector<16x32xbf16>, vector<16x32xf32> -> vector<16x32xf32>
    %400 = arith.addf %379, %399 : vector<16x32xf32>
    %401 = vector.extract_strided_slice %336 {offsets = [0, 24], sizes = [16, 8], strides = [1, 1]} : vector<16x32xf32> to vector<16x8xf32>
    %402 = arith.truncf %401 : vector<16x8xf32> to vector<16x8xbf16>
    %403 = vector.extract_strided_slice %335 {offsets = [24, 0], sizes = [8, 16], strides = [1, 1]} : vector<32x16xf32> to vector<8x16xf32>
    %404 = arith.truncf %403 : vector<8x16xf32> to vector<8x16xbf16>
    %cst_119 = arith.constant dense<0.000000e+00> : vector<16x16xf32>
    %405 = tpu.matmul %402, %404, %cst_119 {dimension_numbers = #tpu.dot_dimension_numbers<[1], [0], [0], [1], [0, 0, 1, 1], [], []>} : vector<16x8xbf16>, vector<8x16xbf16>, vector<16x16xf32> -> vector<16x16xf32>
    %406 = arith.addf %405, %3 : vector<16x16xf32>
    %cst_120 = arith.constant dense<0xFF800000> : vector<16xf32>
    %407 = vector.multi_reduction <maximumf>, %406, %cst_120 [1] : vector<16x16xf32> to vector<16xf32>
    %408 = vector.shape_cast %407 : vector<16xf32> to vector<16x1xf32>
    %409 = vector.broadcast %408 : vector<16x1xf32> to vector<16x16xf32>
    %410 = arith.subf %406, %409 : vector<16x16xf32>
    %411 = math.exp %410 : vector<16x16xf32>
    %cst_121 = arith.constant dense<0.000000e+00> : vector<16xf32>
    %412 = vector.multi_reduction <add>, %411, %cst_121 [1] : vector<16x16xf32> to vector<16xf32>
    %413 = vector.shape_cast %412 : vector<16xf32> to vector<16x1xf32>
    %414 = tpu.reciprocal %413 {approx = true} : vector<16x1xf32> -> vector<16x1xf32>
    %415 = vector.broadcast %414 : vector<16x1xf32> to vector<16x16xf32>
    %416 = arith.mulf %411, %415 : vector<16x16xf32>
    %417 = arith.truncf %416 : vector<16x16xf32> to vector<16x16xbf16>
    %418 = vector.extract_strided_slice %333 {offsets = [0, 96], sizes = [16, 32], strides = [1, 1]} : vector<16x128xf32> to vector<16x32xf32>
    %419 = arith.truncf %418 : vector<16x32xf32> to vector<16x32xbf16>
    %cst_122 = arith.constant dense<0.000000e+00> : vector<16x32xf32>
    %420 = tpu.matmul %417, %419, %cst_122 {dimension_numbers = #tpu.dot_dimension_numbers<[1], [0], [0], [1], [0, 0, 1, 1], [], []>} : vector<16x16xbf16>, vector<16x32xbf16>, vector<16x32xf32> -> vector<16x32xf32>
    %421 = arith.addf %400, %420 : vector<16x32xf32>
    %c136 = arith.constant 136 : index
    %c0_123 = arith.constant 0 : index
    %422 = vector.load %arg5[%c136, %c0_123] : memref<232x128xf32, #tpu.memory_space<vmem>>, vector<1x32xf32>
    %423 = vector.broadcast %422 : vector<1x32xf32> to vector<16x32xf32>
    %424 = arith.addf %421, %423 : vector<16x32xf32>
    %425 = arith.addf %319, %424 : vector<16x32xf32>
    %c144 = arith.constant 144 : index
    %c0_124 = arith.constant 0 : index
    %426 = vector.load %arg5[%c144, %c0_124] : memref<232x128xf32, #tpu.memory_space<vmem>>, vector<1x32xf32>
    %c152 = arith.constant 152 : index
    %c0_125 = arith.constant 0 : index
    %427 = vector.load %arg5[%c152, %c0_125] : memref<232x128xf32, #tpu.memory_space<vmem>>, vector<1x32xf32>
    %cst_126 = arith.constant dense<0.000000e+00> : vector<16xf32>
    %428 = vector.multi_reduction <add>, %425, %cst_126 [1] : vector<16x32xf32> to vector<16xf32>
    %429 = vector.shape_cast %428 : vector<16xf32> to vector<16x1xf32>
    %cst_127 = arith.constant 3.200000e+01 : f32
    %430 = vector.broadcast %cst_127 : f32 to vector<16x1xf32>
    %431 = arith.divf %429, %430 : vector<16x1xf32>
    %432 = vector.broadcast %431 : vector<16x1xf32> to vector<16x32xf32>
    %433 = arith.subf %425, %432 : vector<16x32xf32>
    %434 = arith.mulf %433, %433 : vector<16x32xf32>
    %cst_128 = arith.constant dense<0.000000e+00> : vector<16xf32>
    %435 = vector.multi_reduction <add>, %434, %cst_128 [1] : vector<16x32xf32> to vector<16xf32>
    %436 = vector.shape_cast %435 : vector<16xf32> to vector<16x1xf32>
    %cst_129 = arith.constant 3.200000e+01 : f32
    %437 = vector.broadcast %cst_129 : f32 to vector<16x1xf32>
    %438 = arith.divf %436, %437 : vector<16x1xf32>
    %439 = vector.broadcast %431 : vector<16x1xf32> to vector<16x32xf32>
    %440 = arith.subf %425, %439 : vector<16x32xf32>
    %cst_130 = arith.constant 9.99999974E-6 : f32
    %441 = vector.broadcast %cst_130 : f32 to vector<16x1xf32>
    %442 = arith.addf %438, %441 : vector<16x1xf32>
    %443 = math.rsqrt %442 : vector<16x1xf32>
    %444 = vector.broadcast %443 : vector<16x1xf32> to vector<16x32xf32>
    %445 = arith.mulf %440, %444 : vector<16x32xf32>
    %446 = vector.broadcast %426 : vector<1x32xf32> to vector<16x32xf32>
    %447 = arith.mulf %445, %446 : vector<16x32xf32>
    %448 = vector.broadcast %427 : vector<1x32xf32> to vector<16x32xf32>
    %449 = arith.addf %447, %448 : vector<16x32xf32>
    %450 = arith.truncf %449 : vector<16x32xf32> to vector<16x32xbf16>
    %c320 = arith.constant 320 : index
    %c0_131 = arith.constant 0 : index
    %451 = vector.load %arg4[%c320, %c0_131] : memref<480x128xbf16, #tpu.memory_space<vmem>>, vector<32x32xbf16>
    %cst_132 = arith.constant dense<0.000000e+00> : vector<16x32xf32>
    %452 = tpu.matmul %450, %451, %cst_132 {dimension_numbers = #tpu.dot_dimension_numbers<[1], [0], [0], [1], [0, 0, 1, 1], [], []>} : vector<16x32xbf16>, vector<32x32xbf16>, vector<16x32xf32> -> vector<16x32xf32>
    %c160_133 = arith.constant 160 : index
    %c0_134 = arith.constant 0 : index
    %453 = vector.load %arg5[%c160_133, %c0_134] : memref<232x128xf32, #tpu.memory_space<vmem>>, vector<1x32xf32>
    %454 = vector.broadcast %453 : vector<1x32xf32> to vector<16x32xf32>
    %455 = arith.addf %452, %454 : vector<16x32xf32>
    %cst_135 = arith.constant 0.000000e+00 : f32
    %456 = vector.broadcast %cst_135 : f32 to vector<16x32xf32>
    %457 = vector.extract_strided_slice %455 {offsets = [0, 0], sizes = [16, 8], strides = [1, 1]} : vector<16x32xf32> to vector<16x8xf32>
    %458 = arith.truncf %457 : vector<16x8xf32> to vector<16x8xbf16>
    %459 = vector.extract_strided_slice %13 {offsets = [0, 0], sizes = [8, 32], strides = [1, 1]} : vector<32x32xf32> to vector<8x32xf32>
    %460 = arith.truncf %459 : vector<8x32xf32> to vector<8x32xbf16>
    %cst_136 = arith.constant dense<0.000000e+00> : vector<16x32xf32>
    %461 = tpu.matmul %458, %460, %cst_136 {dimension_numbers = #tpu.dot_dimension_numbers<[1], [0], [0], [1], [0, 0, 1, 1], [], []>} : vector<16x8xbf16>, vector<8x32xbf16>, vector<16x32xf32> -> vector<16x32xf32>
    %462 = arith.addf %461, %4 : vector<16x32xf32>
    %cst_137 = arith.constant dense<0xFF800000> : vector<16xf32>
    %463 = vector.multi_reduction <maximumf>, %462, %cst_137 [1] : vector<16x32xf32> to vector<16xf32>
    %464 = vector.shape_cast %463 : vector<16xf32> to vector<16x1xf32>
    %465 = vector.broadcast %464 : vector<16x1xf32> to vector<16x32xf32>
    %466 = arith.subf %462, %465 : vector<16x32xf32>
    %467 = math.exp %466 : vector<16x32xf32>
    %cst_138 = arith.constant dense<0.000000e+00> : vector<16xf32>
    %468 = vector.multi_reduction <add>, %467, %cst_138 [1] : vector<16x32xf32> to vector<16xf32>
    %469 = vector.shape_cast %468 : vector<16xf32> to vector<16x1xf32>
    %470 = tpu.reciprocal %469 {approx = true} : vector<16x1xf32> -> vector<16x1xf32>
    %471 = vector.broadcast %470 : vector<16x1xf32> to vector<16x32xf32>
    %472 = arith.mulf %467, %471 : vector<16x32xf32>
    %473 = arith.truncf %472 : vector<16x32xf32> to vector<16x32xbf16>
    %474 = vector.extract_strided_slice %23 {offsets = [0, 0], sizes = [32, 32], strides = [1, 1]} : vector<32x128xf32> to vector<32x32xf32>
    %475 = arith.truncf %474 : vector<32x32xf32> to vector<32x32xbf16>
    %cst_139 = arith.constant dense<0.000000e+00> : vector<16x32xf32>
    %476 = tpu.matmul %473, %475, %cst_139 {dimension_numbers = #tpu.dot_dimension_numbers<[1], [0], [0], [1], [0, 0, 1, 1], [], []>} : vector<16x32xbf16>, vector<32x32xbf16>, vector<16x32xf32> -> vector<16x32xf32>
    %477 = arith.addf %456, %476 : vector<16x32xf32>
    %478 = vector.extract_strided_slice %455 {offsets = [0, 8], sizes = [16, 8], strides = [1, 1]} : vector<16x32xf32> to vector<16x8xf32>
    %479 = arith.truncf %478 : vector<16x8xf32> to vector<16x8xbf16>
    %480 = vector.extract_strided_slice %13 {offsets = [8, 0], sizes = [8, 32], strides = [1, 1]} : vector<32x32xf32> to vector<8x32xf32>
    %481 = arith.truncf %480 : vector<8x32xf32> to vector<8x32xbf16>
    %cst_140 = arith.constant dense<0.000000e+00> : vector<16x32xf32>
    %482 = tpu.matmul %479, %481, %cst_140 {dimension_numbers = #tpu.dot_dimension_numbers<[1], [0], [0], [1], [0, 0, 1, 1], [], []>} : vector<16x8xbf16>, vector<8x32xbf16>, vector<16x32xf32> -> vector<16x32xf32>
    %483 = arith.addf %482, %4 : vector<16x32xf32>
    %cst_141 = arith.constant dense<0xFF800000> : vector<16xf32>
    %484 = vector.multi_reduction <maximumf>, %483, %cst_141 [1] : vector<16x32xf32> to vector<16xf32>
    %485 = vector.shape_cast %484 : vector<16xf32> to vector<16x1xf32>
    %486 = vector.broadcast %485 : vector<16x1xf32> to vector<16x32xf32>
    %487 = arith.subf %483, %486 : vector<16x32xf32>
    %488 = math.exp %487 : vector<16x32xf32>
    %cst_142 = arith.constant dense<0.000000e+00> : vector<16xf32>
    %489 = vector.multi_reduction <add>, %488, %cst_142 [1] : vector<16x32xf32> to vector<16xf32>
    %490 = vector.shape_cast %489 : vector<16xf32> to vector<16x1xf32>
    %491 = tpu.reciprocal %490 {approx = true} : vector<16x1xf32> -> vector<16x1xf32>
    %492 = vector.broadcast %491 : vector<16x1xf32> to vector<16x32xf32>
    %493 = arith.mulf %488, %492 : vector<16x32xf32>
    %494 = arith.truncf %493 : vector<16x32xf32> to vector<16x32xbf16>
    %495 = vector.extract_strided_slice %23 {offsets = [0, 32], sizes = [32, 32], strides = [1, 1]} : vector<32x128xf32> to vector<32x32xf32>
    %496 = arith.truncf %495 : vector<32x32xf32> to vector<32x32xbf16>
    %cst_143 = arith.constant dense<0.000000e+00> : vector<16x32xf32>
    %497 = tpu.matmul %494, %496, %cst_143 {dimension_numbers = #tpu.dot_dimension_numbers<[1], [0], [0], [1], [0, 0, 1, 1], [], []>} : vector<16x32xbf16>, vector<32x32xbf16>, vector<16x32xf32> -> vector<16x32xf32>
    %498 = arith.addf %477, %497 : vector<16x32xf32>
    %499 = vector.extract_strided_slice %455 {offsets = [0, 16], sizes = [16, 8], strides = [1, 1]} : vector<16x32xf32> to vector<16x8xf32>
    %500 = arith.truncf %499 : vector<16x8xf32> to vector<16x8xbf16>
    %501 = vector.extract_strided_slice %13 {offsets = [16, 0], sizes = [8, 32], strides = [1, 1]} : vector<32x32xf32> to vector<8x32xf32>
    %502 = arith.truncf %501 : vector<8x32xf32> to vector<8x32xbf16>
    %cst_144 = arith.constant dense<0.000000e+00> : vector<16x32xf32>
    %503 = tpu.matmul %500, %502, %cst_144 {dimension_numbers = #tpu.dot_dimension_numbers<[1], [0], [0], [1], [0, 0, 1, 1], [], []>} : vector<16x8xbf16>, vector<8x32xbf16>, vector<16x32xf32> -> vector<16x32xf32>
    %504 = arith.addf %503, %4 : vector<16x32xf32>
    %cst_145 = arith.constant dense<0xFF800000> : vector<16xf32>
    %505 = vector.multi_reduction <maximumf>, %504, %cst_145 [1] : vector<16x32xf32> to vector<16xf32>
    %506 = vector.shape_cast %505 : vector<16xf32> to vector<16x1xf32>
    %507 = vector.broadcast %506 : vector<16x1xf32> to vector<16x32xf32>
    %508 = arith.subf %504, %507 : vector<16x32xf32>
    %509 = math.exp %508 : vector<16x32xf32>
    %cst_146 = arith.constant dense<0.000000e+00> : vector<16xf32>
    %510 = vector.multi_reduction <add>, %509, %cst_146 [1] : vector<16x32xf32> to vector<16xf32>
    %511 = vector.shape_cast %510 : vector<16xf32> to vector<16x1xf32>
    %512 = tpu.reciprocal %511 {approx = true} : vector<16x1xf32> -> vector<16x1xf32>
    %513 = vector.broadcast %512 : vector<16x1xf32> to vector<16x32xf32>
    %514 = arith.mulf %509, %513 : vector<16x32xf32>
    %515 = arith.truncf %514 : vector<16x32xf32> to vector<16x32xbf16>
    %516 = vector.extract_strided_slice %23 {offsets = [0, 64], sizes = [32, 32], strides = [1, 1]} : vector<32x128xf32> to vector<32x32xf32>
    %517 = arith.truncf %516 : vector<32x32xf32> to vector<32x32xbf16>
    %cst_147 = arith.constant dense<0.000000e+00> : vector<16x32xf32>
    %518 = tpu.matmul %515, %517, %cst_147 {dimension_numbers = #tpu.dot_dimension_numbers<[1], [0], [0], [1], [0, 0, 1, 1], [], []>} : vector<16x32xbf16>, vector<32x32xbf16>, vector<16x32xf32> -> vector<16x32xf32>
    %519 = arith.addf %498, %518 : vector<16x32xf32>
    %520 = vector.extract_strided_slice %455 {offsets = [0, 24], sizes = [16, 8], strides = [1, 1]} : vector<16x32xf32> to vector<16x8xf32>
    %521 = arith.truncf %520 : vector<16x8xf32> to vector<16x8xbf16>
    %522 = vector.extract_strided_slice %13 {offsets = [24, 0], sizes = [8, 32], strides = [1, 1]} : vector<32x32xf32> to vector<8x32xf32>
    %523 = arith.truncf %522 : vector<8x32xf32> to vector<8x32xbf16>
    %cst_148 = arith.constant dense<0.000000e+00> : vector<16x32xf32>
    %524 = tpu.matmul %521, %523, %cst_148 {dimension_numbers = #tpu.dot_dimension_numbers<[1], [0], [0], [1], [0, 0, 1, 1], [], []>} : vector<16x8xbf16>, vector<8x32xbf16>, vector<16x32xf32> -> vector<16x32xf32>
    %525 = arith.addf %524, %4 : vector<16x32xf32>
    %cst_149 = arith.constant dense<0xFF800000> : vector<16xf32>
    %526 = vector.multi_reduction <maximumf>, %525, %cst_149 [1] : vector<16x32xf32> to vector<16xf32>
    %527 = vector.shape_cast %526 : vector<16xf32> to vector<16x1xf32>
    %528 = vector.broadcast %527 : vector<16x1xf32> to vector<16x32xf32>
    %529 = arith.subf %525, %528 : vector<16x32xf32>
    %530 = math.exp %529 : vector<16x32xf32>
    %cst_150 = arith.constant dense<0.000000e+00> : vector<16xf32>
    %531 = vector.multi_reduction <add>, %530, %cst_150 [1] : vector<16x32xf32> to vector<16xf32>
    %532 = vector.shape_cast %531 : vector<16xf32> to vector<16x1xf32>
    %533 = tpu.reciprocal %532 {approx = true} : vector<16x1xf32> -> vector<16x1xf32>
    %534 = vector.broadcast %533 : vector<16x1xf32> to vector<16x32xf32>
    %535 = arith.mulf %530, %534 : vector<16x32xf32>
    %536 = arith.truncf %535 : vector<16x32xf32> to vector<16x32xbf16>
    %537 = vector.extract_strided_slice %23 {offsets = [0, 96], sizes = [32, 32], strides = [1, 1]} : vector<32x128xf32> to vector<32x32xf32>
    %538 = arith.truncf %537 : vector<32x32xf32> to vector<32x32xbf16>
    %cst_151 = arith.constant dense<0.000000e+00> : vector<16x32xf32>
    %539 = tpu.matmul %536, %538, %cst_151 {dimension_numbers = #tpu.dot_dimension_numbers<[1], [0], [0], [1], [0, 0, 1, 1], [], []>} : vector<16x32xbf16>, vector<32x32xbf16>, vector<16x32xf32> -> vector<16x32xf32>
    %540 = arith.addf %519, %539 : vector<16x32xf32>
    %c176 = arith.constant 176 : index
    %c0_152 = arith.constant 0 : index
    %541 = vector.load %arg5[%c176, %c0_152] : memref<232x128xf32, #tpu.memory_space<vmem>>, vector<1x32xf32>
    %542 = vector.broadcast %541 : vector<1x32xf32> to vector<16x32xf32>
    %543 = arith.addf %540, %542 : vector<16x32xf32>
    %544 = arith.addf %449, %543 : vector<16x32xf32>
    %c184 = arith.constant 184 : index
    %c0_153 = arith.constant 0 : index
    %545 = vector.load %arg5[%c184, %c0_153] : memref<232x128xf32, #tpu.memory_space<vmem>>, vector<1x32xf32>
    %c192_154 = arith.constant 192 : index
    %c0_155 = arith.constant 0 : index
    %546 = vector.load %arg5[%c192_154, %c0_155] : memref<232x128xf32, #tpu.memory_space<vmem>>, vector<1x32xf32>
    %cst_156 = arith.constant dense<0.000000e+00> : vector<16xf32>
    %547 = vector.multi_reduction <add>, %544, %cst_156 [1] : vector<16x32xf32> to vector<16xf32>
    %548 = vector.shape_cast %547 : vector<16xf32> to vector<16x1xf32>
    %cst_157 = arith.constant 3.200000e+01 : f32
    %549 = vector.broadcast %cst_157 : f32 to vector<16x1xf32>
    %550 = arith.divf %548, %549 : vector<16x1xf32>
    %551 = vector.broadcast %550 : vector<16x1xf32> to vector<16x32xf32>
    %552 = arith.subf %544, %551 : vector<16x32xf32>
    %553 = arith.mulf %552, %552 : vector<16x32xf32>
    %cst_158 = arith.constant dense<0.000000e+00> : vector<16xf32>
    %554 = vector.multi_reduction <add>, %553, %cst_158 [1] : vector<16x32xf32> to vector<16xf32>
    %555 = vector.shape_cast %554 : vector<16xf32> to vector<16x1xf32>
    %cst_159 = arith.constant 3.200000e+01 : f32
    %556 = vector.broadcast %cst_159 : f32 to vector<16x1xf32>
    %557 = arith.divf %555, %556 : vector<16x1xf32>
    %558 = vector.broadcast %550 : vector<16x1xf32> to vector<16x32xf32>
    %559 = arith.subf %544, %558 : vector<16x32xf32>
    %cst_160 = arith.constant 9.99999974E-6 : f32
    %560 = vector.broadcast %cst_160 : f32 to vector<16x1xf32>
    %561 = arith.addf %557, %560 : vector<16x1xf32>
    %562 = math.rsqrt %561 : vector<16x1xf32>
    %563 = vector.broadcast %562 : vector<16x1xf32> to vector<16x32xf32>
    %564 = arith.mulf %559, %563 : vector<16x32xf32>
    %565 = vector.broadcast %545 : vector<1x32xf32> to vector<16x32xf32>
    %566 = arith.mulf %564, %565 : vector<16x32xf32>
    %567 = vector.broadcast %546 : vector<1x32xf32> to vector<16x32xf32>
    %568 = arith.addf %566, %567 : vector<16x32xf32>
    %569 = arith.truncf %568 : vector<16x32xf32> to vector<16x32xbf16>
    %c384 = arith.constant 384 : index
    %c0_161 = arith.constant 0 : index
    %570 = vector.load %arg4[%c384, %c0_161] : memref<480x128xbf16, #tpu.memory_space<vmem>>, vector<32x64xbf16>
    %cst_162 = arith.constant dense<0.000000e+00> : vector<16x64xf32>
    %571 = tpu.matmul %569, %570, %cst_162 {dimension_numbers = #tpu.dot_dimension_numbers<[1], [0], [0], [1], [0, 0, 1, 1], [], []>} : vector<16x32xbf16>, vector<32x64xbf16>, vector<16x64xf32> -> vector<16x64xf32>
    %c200 = arith.constant 200 : index
    %c0_163 = arith.constant 0 : index
    %572 = vector.load %arg5[%c200, %c0_163] : memref<232x128xf32, #tpu.memory_space<vmem>>, vector<1x64xf32>
    %573 = vector.broadcast %572 : vector<1x64xf32> to vector<16x64xf32>
    %574 = arith.addf %571, %573 : vector<16x64xf32>
    %575 = arith.mulf %574, %574 : vector<16x64xf32>
    %576 = arith.mulf %574, %575 : vector<16x64xf32>
    %cst_164 = arith.constant 4.471500e-02 : f32
    %577 = vector.broadcast %cst_164 : f32 to vector<16x64xf32>
    %578 = arith.mulf %577, %576 : vector<16x64xf32>
    %579 = arith.addf %574, %578 : vector<16x64xf32>
    %cst_165 = arith.constant 0.797884583 : f32
    %580 = vector.broadcast %cst_165 : f32 to vector<16x64xf32>
    %581 = arith.mulf %580, %579 : vector<16x64xf32>
    %582 = math.tanh %581 : vector<16x64xf32>
    %cst_166 = arith.constant 1.000000e+00 : f32
    %583 = vector.broadcast %cst_166 : f32 to vector<16x64xf32>
    %584 = arith.addf %583, %582 : vector<16x64xf32>
    %cst_167 = arith.constant 5.000000e-01 : f32
    %585 = vector.broadcast %cst_167 : f32 to vector<16x64xf32>
    %586 = arith.mulf %585, %584 : vector<16x64xf32>
    %587 = arith.mulf %574, %586 : vector<16x64xf32>
    %588 = arith.truncf %587 : vector<16x64xf32> to vector<16x64xbf16>
    %c416 = arith.constant 416 : index
    %c0_168 = arith.constant 0 : index
    %589 = vector.load %arg4[%c416, %c0_168] : memref<480x128xbf16, #tpu.memory_space<vmem>>, vector<64x32xbf16>
    %cst_169 = arith.constant dense<0.000000e+00> : vector<16x32xf32>
    %590 = tpu.matmul %588, %589, %cst_169 {dimension_numbers = #tpu.dot_dimension_numbers<[1], [0], [0], [1], [0, 0, 1, 1], [], []>} : vector<16x64xbf16>, vector<64x32xbf16>, vector<16x32xf32> -> vector<16x32xf32>
    %c208 = arith.constant 208 : index
    %c0_170 = arith.constant 0 : index
    %591 = vector.load %arg5[%c208, %c0_170] : memref<232x128xf32, #tpu.memory_space<vmem>>, vector<1x32xf32>
    %592 = vector.broadcast %591 : vector<1x32xf32> to vector<16x32xf32>
    %593 = arith.addf %590, %592 : vector<16x32xf32>
    %594 = arith.addf %568, %593 : vector<16x32xf32>
    %c216 = arith.constant 216 : index
    %c0_171 = arith.constant 0 : index
    %595 = vector.load %arg5[%c216, %c0_171] : memref<232x128xf32, #tpu.memory_space<vmem>>, vector<1x32xf32>
    %c224 = arith.constant 224 : index
    %c0_172 = arith.constant 0 : index
    %596 = vector.load %arg5[%c224, %c0_172] : memref<232x128xf32, #tpu.memory_space<vmem>>, vector<1x32xf32>
    %cst_173 = arith.constant dense<0.000000e+00> : vector<16xf32>
    %597 = vector.multi_reduction <add>, %594, %cst_173 [1] : vector<16x32xf32> to vector<16xf32>
    %598 = vector.shape_cast %597 : vector<16xf32> to vector<16x1xf32>
    %cst_174 = arith.constant 3.200000e+01 : f32
    %599 = vector.broadcast %cst_174 : f32 to vector<16x1xf32>
    %600 = arith.divf %598, %599 : vector<16x1xf32>
    %601 = vector.broadcast %600 : vector<16x1xf32> to vector<16x32xf32>
    %602 = arith.subf %594, %601 : vector<16x32xf32>
    %603 = arith.mulf %602, %602 : vector<16x32xf32>
    %cst_175 = arith.constant dense<0.000000e+00> : vector<16xf32>
    %604 = vector.multi_reduction <add>, %603, %cst_175 [1] : vector<16x32xf32> to vector<16xf32>
    %605 = vector.shape_cast %604 : vector<16xf32> to vector<16x1xf32>
    %cst_176 = arith.constant 3.200000e+01 : f32
    %606 = vector.broadcast %cst_176 : f32 to vector<16x1xf32>
    %607 = arith.divf %605, %606 : vector<16x1xf32>
    %608 = vector.broadcast %600 : vector<16x1xf32> to vector<16x32xf32>
    %609 = arith.subf %594, %608 : vector<16x32xf32>
    %cst_177 = arith.constant 9.99999974E-6 : f32
    %610 = vector.broadcast %cst_177 : f32 to vector<16x1xf32>
    %611 = arith.addf %607, %610 : vector<16x1xf32>
    %612 = math.rsqrt %611 : vector<16x1xf32>
    %613 = vector.broadcast %612 : vector<16x1xf32> to vector<16x32xf32>
    %614 = arith.mulf %609, %613 : vector<16x32xf32>
    %615 = vector.broadcast %595 : vector<1x32xf32> to vector<16x32xf32>
    %616 = arith.mulf %614, %615 : vector<16x32xf32>
    %617 = vector.broadcast %596 : vector<1x32xf32> to vector<16x32xf32>
    %618 = arith.addf %616, %617 : vector<16x32xf32>
    %c1 = arith.constant 1 : index
    %c0_178 = arith.constant 0 : index
    %c0_179 = arith.constant 0 : index
    %619 = vector.load %arg6[%c1, %c0_178, %c0_179] : memref<2x16x32xf32, #tpu.memory_space<vmem>>, vector<1x16x32xf32>
    %620 = vector.shape_cast %619 : vector<1x16x32xf32> to vector<16x32xf32>
    %621 = vector.shape_cast %618 : vector<16x32xf32> to vector<1x16x32xf32>
    tpu.vector_store %arg6[%c1, %c0_178, %c0_179], %621 {strides = array<i32>} : memref<2x16x32xf32, #tpu.memory_space<vmem>>, vector<1x16x32xf32>,
    return
  }
}

</mosaic_0001>

<llo_original>
// kernel: tpu_custom_call.1
$region0: #{tpu_custom_call.1}
  #allocation0 [shape = 'u32[]', space=smem, size = 0x4, offset = 0x4, fixed_abs, tag = 'smem constant byte address 0x4 - core index']
  #allocation1 [shape = 'u32[144,128]{1,0:T(1,128)}', space=vmem, size = 0x12000, scoped, tag = 'internal scratch']
  %s0 = inlined_call_operand.hbm [shape: f32[16,32], index: 0, kind: input, shape index: {}]
  %s1 = inlined_call_operand.hbm [shape: f32[32,32], index: 1, kind: input, shape index: {}]
  %s2 = inlined_call_operand.hbm [shape: f32[16,16], index: 2, kind: input, shape index: {}]
  %s3 = inlined_call_operand.hbm [shape: f32[16,32], index: 3, kind: input, shape index: {}]
  %s4 = inlined_call_operand.hbm [shape: bf16[480,128], index: 4, kind: input, shape index: {}]
  %s5 = inlined_call_operand.hbm [shape: f32[232,128], index: 5, kind: input, shape index: {}]
  %s6 = inlined_call_operand.hbm [shape: f32[2,16,32], index: 6, kind: output, shape index: {}]
  %s7 = sld [smem:[#allocation0]]
  $region58: #{tpu_custom_call.1} parent=0
    _
  %s9 = ssub.s32 1, %s7
  %s10 = scalar_select 0, %s9, %s7
  $region1: #{tpu_custom_call.1} parent=0
    #allocation2 [shape = 'u8[8192]{0}', space=vmem, size = 0x2000, scoped, tag = 'input window, operand 0, single buffered']
    #allocation3 [shape = 's32[1]{0}', space=sflag, size = 0x4, scoped, tag = 'scoped memory for tpu_custom_call.1']
    #allocation4 [shape = 's32[1]{0}', space=sflag, size = 0x4, scoped, tag = 'scoped memory for tpu_custom_call.1']
    #allocation5 [shape = 'u8[16384]{0}', space=vmem, size = 0x4000, scoped, tag = 'input window, operand 1, single buffered']
    #allocation6 [shape = 's32[1]{0}', space=sflag, size = 0x4, scoped, tag = 'scoped memory for tpu_custom_call.1']
    #allocation7 [shape = 'u8[8192]{0}', space=vmem, size = 0x2000, scoped, tag = 'input window, operand 2, single buffered']
    #allocation8 [shape = 'u8[8192]{0}', space=vmem, size = 0x2000, scoped, tag = 'input window, operand 3, single buffered']
    #allocation9 [shape = 's32[1]{0}', space=sflag, size = 0x4, scoped, tag = 'scoped memory for tpu_custom_call.1']
    #allocation10 [shape = 'u8[122880]{0}', space=vmem, size = 0x1e000, scoped, tag = 'input window, operand 4, single buffered']
    #allocation11 [shape = 'u8[118784]{0}', space=vmem, size = 0x1d000, scoped, tag = 'input window, operand 5, single buffered']
    #allocation12 [shape = 's32[1]{0}', space=sflag, size = 0x4, scoped, tag = 'scoped memory for tpu_custom_call.1']
    #allocation13 [shape = 'u8[16384]{0}', space=vmem, size = 0x4000, scoped, tag = 'output window, operand 0, single buffered']
    %11 = vsyncpa [#allocation3], 0
    %12 = vsyncpa [#allocation6], 0
    %13 = vsyncpa [#allocation9], 0
    %14 = vsyncpa [#allocation12], 0
    %15 = vsyncpa [#allocation4], 0
    // Predicated region
    $region2: #{tpu_custom_call.1} parent=1 // pred_check
      _
    $region3: #{tpu_custom_call.1} parent=1 // pred_check_branch
      %17 = sbr.rel (0) target = $region5
    $region4: #{tpu_custom_call.1} parent=1 // pred_region
      %s19 = ssub.s32 256, 256
      %20 = vsyncadd [#allocation3], %s19
      %s21 = sshll.u32 [#allocation2], 4
      %s22 = int_to_ptr.vmem [resolvable:$true] %s21
      %27 = dma.hbm_to_vmem [thread:$0]  %s0, 256, %s22, [#allocation3], 128, 128, 8
    $region5: #{tpu_custom_call.1} parent=1 // pred_fallthru
      _
    // Predicated region
    $region6: #{tpu_custom_call.1} parent=1 // pred_check
      _
    $region7: #{tpu_custom_call.1} parent=1 // pred_check_branch
      %29 = sbr.rel (0) target = $region9
    $region8: #{tpu_custom_call.1} parent=1 // pred_region
      %s31 = ssub.s32 512, 512
      %32 = vsyncadd [#allocation6], %s31
      %s33 = sshll.u32 [#allocation5], 4
      %s34 = int_to_ptr.vmem [resolvable:$true] %s33
      %39 = dma.hbm_to_vmem [thread:$0]  %s1, 512, %s34, [#allocation6], 128, 128, 8
    $region9: #{tpu_custom_call.1} parent=1 // pred_fallthru
      _
    // Predicated region
    $region10: #{tpu_custom_call.1} parent=1 // pred_check
      _
    $region11: #{tpu_custom_call.1} parent=1 // pred_check_branch
      %41 = sbr.rel (0) target = $region13
    $region12: #{tpu_custom_call.1} parent=1 // pred_region
      %s43 = ssub.s32 256, 256
      %44 = vsyncadd [#allocation6], %s43
      %s45 = sshll.u32 [#allocation7], 4
      %s46 = int_to_ptr.vmem [resolvable:$true] %s45
      %51 = dma.hbm_to_vmem [thread:$0]  %s2, 256, %s46, [#allocation6], 128, 128, 8
    $region13: #{tpu_custom_call.1} parent=1 // pred_fallthru
      _
    // Predicated region
    $region14: #{tpu_custom_call.1} parent=1 // pred_check
      _
    $region15: #{tpu_custom_call.1} parent=1 // pred_check_branch
      %53 = sbr.rel (0) target = $region17
    $region16: #{tpu_custom_call.1} parent=1 // pred_region
      %s55 = ssub.s32 256, 256
      %56 = vsyncadd [#allocation9], %s55
      %s57 = sshll.u32 [#allocation8], 4
      %s58 = int_to_ptr.vmem [resolvable:$true] %s57
      %63 = dma.hbm_to_vmem [thread:$0]  %s3, 256, %s58, [#allocation9], 128, 128, 8
    $region17: #{tpu_custom_call.1} parent=1 // pred_fallthru
      _
    // Predicated region
    $region18: #{tpu_custom_call.1} parent=1 // pred_check
      _
    $region19: #{tpu_custom_call.1} parent=1 // pred_check_branch
      %65 = sbr.rel (0) target = $region21
    $region20: #{tpu_custom_call.1} parent=1 // pred_region
      %s67 = ssub.s32 3840, 3840
      %68 = vsyncadd [#allocation9], %s67
      %s69 = sshll.u32 [#allocation10], 4
      %s70 = int_to_ptr.vmem [resolvable:$true] %s69
      %75 = dma.hbm_to_vmem [thread:$0]  %s4, 3840, %s70, [#allocation9], 64, 64, 4
    $region21: #{tpu_custom_call.1} parent=1 // pred_fallthru
      _
    // Predicated region
    $region22: #{tpu_custom_call.1} parent=1 // pred_check
      _
    $region23: #{tpu_custom_call.1} parent=1 // pred_check_branch
      %77 = sbr.rel (0) target = $region25
    $region24: #{tpu_custom_call.1} parent=1 // pred_region
      %s79 = ssub.s32 3712, 3712
      %80 = vsyncadd [#allocation12], %s79
      %s81 = sshll.u32 [#allocation11], 4
      %s82 = int_to_ptr.vmem [resolvable:$true] %s81
      %87 = dma.hbm_to_vmem [thread:$0]  %s5, 3712, %s82, [#allocation12], 128, 128, 8
    $region25: #{tpu_custom_call.1} parent=1 // pred_fallthru
      _
    // Predicated region
    $region26: #{tpu_custom_call.1} parent=1 // pred_check
      _
    $region27: #{tpu_custom_call.1} parent=1 // pred_check_branch
      %89 = sbr.rel (0) target = $region29
    $region28: #{tpu_custom_call.1} parent=1 // pred_region
      %90 = dma.done [#allocation3], 256
    $region29: #{tpu_custom_call.1} parent=1 // pred_fallthru
      _
    // Predicated region
    $region30: #{tpu_custom_call.1} parent=1 // pred_check
      _
    $region31: #{tpu_custom_call.1} parent=1 // pred_check_branch
      %92 = sbr.rel (0) target = $region33
    $region32: #{tpu_custom_call.1} parent=1 // pred_region
      %93 = dma.done [#allocation6], 512
    $region33: #{tpu_custom_call.1} parent=1 // pred_fallthru
      _
    // Predicated region
    $region34: #{tpu_custom_call.1} parent=1 // pred_check
      _
    $region35: #{tpu_custom_call.1} parent=1 // pred_check_branch
      %95 = sbr.rel (0) target = $region37
    $region36: #{tpu_custom_call.1} parent=1 // pred_region
      %96 = dma.done [#allocation6], 256
    $region37: #{tpu_custom_call.1} parent=1 // pred_fallthru
      _
    // Predicated region
    $region38: #{tpu_custom_call.1} parent=1 // pred_check
      _
    $region39: #{tpu_custom_call.1} parent=1 // pred_check_branch
      %98 = sbr.rel (0) target = $region41
    $region40: #{tpu_custom_call.1} parent=1 // pred_region
      %99 = dma.done [#allocation9], 256
    $region41: #{tpu_custom_call.1} parent=1 // pred_fallthru
      _
    // Predicated region
    $region42: #{tpu_custom_call.1} parent=1 // pred_check
      _
    $region43: #{tpu_custom_call.1} parent=1 // pred_check_branch
      %101 = sbr.rel (0) target = $region45
    $region44: #{tpu_custom_call.1} parent=1 // pred_region
      %102 = dma.done [#allocation9], 3840
    $region45: #{tpu_custom_call.1} parent=1 // pred_fallthru
      _
    // Predicated region
    $region46: #{tpu_custom_call.1} parent=1 // pred_check
      _
    $region47: #{tpu_custom_call.1} parent=1 // pred_check_branch
      %104 = sbr.rel (0) target = $region49
    $region48: #{tpu_custom_call.1} parent=1 // pred_region
      %105 = dma.done [#allocation12], 3712
    $region49: #{tpu_custom_call.1} parent=1 // pred_fallthru
      _
    %v107 = vld [vmem:[#allocation2] sm:$0xff]
    %v108 = vld [vmem:[#allocation2 + $0x8] sm:$0xff]
    %v109 = vld [vmem:[#allocation5] sm:$0xff]
    %v110 = vld [vmem:[#allocation5 + $0x8] sm:$0xff]
    %v111 = vld [vmem:[#allocation5 + $0x10] sm:$0xff]
    %v112 = vld [vmem:[#allocation5 + $0x18] sm:$0xff]
    %v113 = vpack.c.bf16 %v110, %v109
    %v114 = vpack.c.bf16 %v112, %v111
    %v115 = vld [vmem:[#allocation7] sm:$0xff]
    %v116 = vld [vmem:[#allocation7 + $0x8] sm:$0xff]
    %v117 = vld [vmem:[#allocation8] sm:$0xff]
    %v118 = vld [vmem:[#allocation8 + $0x8] sm:$0xff]
    %v119 = vld [vmem:[#allocation10] sm:$0xf]
    %v120 = vld [vmem:[#allocation10 + $0x4] sm:$0xf]
    %v121 = vld [vmem:[#allocation10 + $0x8] sm:$0xf]
    %v122 = vld [vmem:[#allocation10 + $0xc] sm:$0xf]
    %v123 = vld [vmem:[#allocation11] sm:$0x1]
    %v124 = vlaneseq
    %v125 = vshrl.u32 %v124, 7
    %v126 = vsub.s32 0, %v125
    %v127 = vrot.slane %v123, %v126
    %v132 = vunpack.c.l.b16 %v119
    %v133 = vunpack.c.l.b16 %v120
    %v134 = vunpack.c.l.b16 %v121
    %v135 = vunpack.c.l.b16 %v122
    %v136 = vpack.c.b16 %v133, %v132
    %v137 = vpack.c.b16 %v135, %v134
    %vm140 = vcmask 261120
    %v142 = vsel %vm140, %v113, 0
    %v145 = vsel %vm140, %v114, 0
    %147 = vmatprep.subr.bf16.mxu0 0
    %148 = vmatpush1.bf16.msra.mxu0 %v136
    %149 = vmatprep.subr.bf16.mxu0 0
    %150 = vmatpush1.bf16.msra.mxu0 %v137
    %151 = vmatprep.subr.bf16.mxu0 0
    %152 = vmatpush1.bf16.msra.mxu0 0
    %153 = vmatprep.subr.bf16.mxu0 0
    %154 = vmatpush1.bf16.msra.mxu0 0
    %155 = vmatprep.subr.bf16.mxu0 0
    %156 = vmatpush1.bf16.msra.mxu0 0
    %157 = vmatprep.subr.bf16.mxu0 0
    %158 = vmatpush1.bf16.msra.mxu0 0
    %159 = vmatprep.subr.bf16.mxu0 0
    %160 = vmatpush1.bf16.msra.mxu0 0
    %161 = vmatprep.subr.bf16.mxu0 0
    %162 = vmatpush1.bf16.msra.mxu0 0
    %163 = vmatprep.subr.bf16.mxu0 0
    %164 = vmatpush1.bf16.msra.mxu0 0
    %165 = vmatprep.subr.bf16.mxu0 0
    %166 = vmatpush1.bf16.msra.mxu0 0
    %167 = vmatprep.subr.bf16.mxu0 0
    %168 = vmatpush1.bf16.msra.mxu0 0
    %169 = vmatprep.subr.bf16.mxu0 0
    %170 = vmatpush1.bf16.msra.mxu0 0
    %171 = vmatprep.subr.bf16.mxu0 0
    %172 = vmatpush1.bf16.msra.mxu0 0
    %173 = vmatprep.subr.bf16.mxu0 0
    %174 = vmatpush1.bf16.msra.mxu0 0
    %175 = vmatprep.subr.bf16.mxu0 0
    %176 = vmatpush1.bf16.msra.mxu0 0
    %177 = vmatprep.subr.bf16.mxu0 0
    %178 = vmatpush1.bf16.msra.mxu0 0
    %179 = vmatprep.mubr.bf16.mxu0 0
    %180 = vmatmul.mubr.bf16.gmra.mrb[0].mxu0 %v142
    %v181 = vpop.f32.mrb[0].mxu0
    %v182 = vadd.f32 %v127, %v181
    %v183 = vpop.f32.mrb[0].mxu0
    %v184 = vpop.f32.mrb[0].mxu0
    %v185 = vadd.f32 %v127, %v184
    %v186 = vpop.f32.mrb[0].mxu0
    %187 = vmatprep.mubr.bf16.mxu0 0
    %188 = vmatmul.mubr.bf16.gmra.mrb[0].mxu0 %v145
    %v189 = vpop.f32.mrb[0].mxu0
    %v190 = vadd.f32 %v127, %v189
    %v191 = vpop.f32.mrb[0].mxu0
    %v192 = vpop.f32.mrb[0].mxu0
    %v193 = vadd.f32 %v127, %v192
    %v194 = vpop.f32.mrb[0].mxu0
    %195 = vdwg.mxu0
    %196 = vxpose.xlu0.b32.start [1/16] %v182, 128
    %197 = vxpose.xlu0.b32.cont [2/16] %v185, 128
    %198 = vxpose.xlu0.b32.cont [3/16] %v190, 128
    %199 = vxpose.xlu0.b32.cont [4/16] %v193, 128
    %200 = vxpose.xlu0.b32.cont [5/16] 0.0, 128
    %201 = vxpose.xlu0.b32.cont [6/16] 0.0, 128
    %202 = vxpose.xlu0.b32.cont [7/16] 0.0, 128
    %203 = vxpose.xlu0.b32.cont [8/16] 0.0, 128
    %204 = vxpose.xlu0.b32.cont [9/16] 0.0, 128
    %205 = vxpose.xlu0.b32.cont [10/16] 0.0, 128
    %206 = vxpose.xlu0.b32.cont [11/16] 0.0, 128
    %207 = vxpose.xlu0.b32.cont [12/16] 0.0, 128
    %208 = vxpose.xlu0.b32.cont [13/16] 0.0, 128
    %209 = vxpose.xlu0.b32.cont [14/16] 0.0, 128
    %210 = vxpose.xlu0.b32.cont [15/16] 0.0, 128
    %211 = vxpose.xlu0.b32.end [16/16] 0.0, 128
    %v212 = vpop.trf.xlu0
    %v213 = vpop.trf.xlu0
    %v214 = vpop.trf.xlu0
    %v215 = vpop.trf.xlu0
    %v216 = vpop.trf.xlu0
    %v217 = vpop.trf.xlu0
    %v218 = vpop.trf.xlu0
    %v219 = vpop.trf.xlu0
    %v220 = vpop.trf.xlu0
    %v221 = vpop.trf.xlu0
    %v222 = vpop.trf.xlu0
    %v223 = vpop.trf.xlu0
    %v224 = vpop.trf.xlu0
    %v225 = vpop.trf.xlu0
    %v226 = vpop.trf.xlu0
    %v227 = vpop.trf.xlu0
    %232 = vrot.lane.b32.xlu0 %v182, 96
    %v233 = vpop.permute.xlu0 %232
    %234 = vrot.lane.b32.xlu0 %v185, 96
    %v235 = vpop.permute.xlu0 %234
    %236 = vrot.lane.b32.xlu0 %v190, 96
    %v237 = vpop.permute.xlu0 %236
    %238 = vrot.lane.b32.xlu0 %v193, 96
    %v239 = vpop.permute.xlu0 %238
    %244 = vxpose.xlu0.b32.start [1/16] %v233, 128
    %245 = vxpose.xlu0.b32.cont [2/16] %v235, 128
    %246 = vxpose.xlu0.b32.cont [3/16] %v237, 128
    %247 = vxpose.xlu0.b32.cont [4/16] %v239, 128
    %248 = vxpose.xlu0.b32.cont [5/16] 0.0, 128
    %249 = vxpose.xlu0.b32.cont [6/16] 0.0, 128
    %250 = vxpose.xlu0.b32.cont [7/16] 0.0, 128
    %251 = vxpose.xlu0.b32.cont [8/16] 0.0, 128
    %252 = vxpose.xlu0.b32.cont [9/16] 0.0, 128
    %253 = vxpose.xlu0.b32.cont [10/16] 0.0, 128
    %254 = vxpose.xlu0.b32.cont [11/16] 0.0, 128
    %255 = vxpose.xlu0.b32.cont [12/16] 0.0, 128
    %256 = vxpose.xlu0.b32.cont [13/16] 0.0, 128
    %257 = vxpose.xlu0.b32.cont [14/16] 0.0, 128
    %258 = vxpose.xlu0.b32.cont [15/16] 0.0, 128
    %259 = vxpose.xlu0.b32.end [16/16] 0.0, 128
    %v260 = vpop.trf.xlu0
    %v261 = vpop.trf.xlu0
    %v262 = vpop.trf.xlu0
    %v263 = vpop.trf.xlu0
    %v264 = vpop.trf.xlu0
    %v265 = vpop.trf.xlu0
    %v266 = vpop.trf.xlu0
    %v267 = vpop.trf.xlu0
    %v268 = vpop.trf.xlu0
    %v269 = vpop.trf.xlu0
    %v270 = vpop.trf.xlu0
    %v271 = vpop.trf.xlu0
    %v272 = vpop.trf.xlu0
    %v273 = vpop.trf.xlu0
    %v274 = vpop.trf.xlu0
    %v275 = vpop.trf.xlu0
    %v276 = vld [vmem:[#allocation10 + $0x40] sm:$0xf]
    %v277 = vld [vmem:[#allocation10 + $0x44] sm:$0xf]
    %v278 = vld [vmem:[#allocation10 + $0x48] sm:$0xf]
    %v279 = vld [vmem:[#allocation10 + $0x4c] sm:$0xf]
    %v280 = vld [vmem:[#allocation11 + $0x38] sm:$0x1]
    %v281 = vlaneseq
    %v282 = vshrl.u32 %v281, 7
    %v283 = vsub.s32 0, %v282
    %v284 = vrot.slane %v280, %v283
    %v289 = vunpack.c.l.b16 %v276
    %v290 = vunpack.c.l.b16 %v277
    %v291 = vunpack.c.l.b16 %v278
    %v292 = vunpack.c.l.b16 %v279
    %v293 = vpack.c.b16 %v290, %v289
    %v294 = vpack.c.b16 %v292, %v291
    %297 = vmatprep.subr.bf16.mxu0 0
    %298 = vmatpush1.bf16.msra.mxu0 %v293
    %299 = vmatprep.subr.bf16.mxu0 0
    %300 = vmatpush1.bf16.msra.mxu0 %v294
    %301 = vmatprep.subr.bf16.mxu0 0
    %302 = vmatpush1.bf16.msra.mxu0 0
    %303 = vmatprep.subr.bf16.mxu0 0
    %304 = vmatpush1.bf16.msra.mxu0 0
    %305 = vmatprep.subr.bf16.mxu0 0
    %306 = vmatpush1.bf16.msra.mxu0 0
    %307 = vmatprep.subr.bf16.mxu0 0
    %308 = vmatpush1.bf16.msra.mxu0 0
    %309 = vmatprep.subr.bf16.mxu0 0
    %310 = vmatpush1.bf16.msra.mxu0 0
    %311 = vmatprep.subr.bf16.mxu0 0
    %312 = vmatpush1.bf16.msra.mxu0 0
    %313 = vmatprep.subr.bf16.mxu0 0
    %314 = vmatpush1.bf16.msra.mxu0 0
    %315 = vmatprep.subr.bf16.mxu0 0
    %316 = vmatpush1.bf16.msra.mxu0 0
    %317 = vmatprep.subr.bf16.mxu0 0
    %318 = vmatpush1.bf16.msra.mxu0 0
    %319 = vmatprep.subr.bf16.mxu0 0
    %320 = vmatpush1.bf16.msra.mxu0 0
    %321 = vmatprep.subr.bf16.mxu0 0
    %322 = vmatpush1.bf16.msra.mxu0 0
    %323 = vmatprep.subr.bf16.mxu0 0
    %324 = vmatpush1.bf16.msra.mxu0 0
    %325 = vmatprep.subr.bf16.mxu0 0
    %326 = vmatpush1.bf16.msra.mxu0 0
    %327 = vmatprep.subr.bf16.mxu0 0
    %328 = vmatpush1.bf16.msra.mxu0 0
    %329 = vmatprep.mubr.bf16.mxu0 0
    %330 = vmatmul.mubr.bf16.gmra.mrb[0].mxu0 %v142
    %v331 = vpop.f32.mrb[0].mxu0
    %v332 = vadd.f32 %v284, %v331
    %v333 = vpop.f32.mrb[0].mxu0
    %v334 = vpop.f32.mrb[0].mxu0
    %v335 = vadd.f32 %v284, %v334
    %v336 = vpop.f32.mrb[0].mxu0
    %337 = vmatprep.mubr.bf16.mxu0 0
    %338 = vmatmul.mubr.bf16.gmra.mrb[0].mxu0 %v145
    %v339 = vpop.f32.mrb[0].mxu0
    %v340 = vadd.f32 %v284, %v339
    %v341 = vpop.f32.mrb[0].mxu0
    %v342 = vpop.f32.mrb[0].mxu0
    %v343 = vadd.f32 %v284, %v342
    %v344 = vpop.f32.mrb[0].mxu0
    %345 = vdwg.mxu0
    %v346 = vld [vmem:[#allocation10 + $0xb0] sm:$0xf]
    %v347 = vld [vmem:[#allocation10 + $0xb4] sm:$0xf]
    %v348 = vld [vmem:[#allocation10 + $0xb8] sm:$0xf]
    %v349 = vld [vmem:[#allocation10 + $0xbc] sm:$0xf]
    %v350 = vld [vmem:[#allocation11 + $0xa8] sm:$0x1]
    %v351 = vlaneseq
    %v352 = vshrl.u32 %v351, 7
    %v353 = vsub.s32 0, %v352
    %v354 = vrot.slane %v350, %v353
    %v359 = vunpack.c.l.b16 %v346
    %v360 = vunpack.c.l.b16 %v347
    %v361 = vunpack.c.l.b16 %v348
    %v362 = vunpack.c.l.b16 %v349
    %v363 = vpack.c.b16 %v360, %v359
    %v364 = vpack.c.b16 %v362, %v361
    %367 = vmatprep.subr.bf16.mxu0 0
    %368 = vmatpush1.bf16.msra.mxu0 %v363
    %369 = vmatprep.subr.bf16.mxu0 0
    %370 = vmatpush1.bf16.msra.mxu0 %v364
    %371 = vmatprep.subr.bf16.mxu0 0
    %372 = vmatpush1.bf16.msra.mxu0 0
    %373 = vmatprep.subr.bf16.mxu0 0
    %374 = vmatpush1.bf16.msra.mxu0 0
    %375 = vmatprep.subr.bf16.mxu0 0
    %376 = vmatpush1.bf16.msra.mxu0 0
    %377 = vmatprep.subr.bf16.mxu0 0
    %378 = vmatpush1.bf16.msra.mxu0 0
    %379 = vmatprep.subr.bf16.mxu0 0
    %380 = vmatpush1.bf16.msra.mxu0 0
    %381 = vmatprep.subr.bf16.mxu0 0
    %382 = vmatpush1.bf16.msra.mxu0 0
    %383 = vmatprep.subr.bf16.mxu0 0
    %384 = vmatpush1.bf16.msra.mxu0 0
    %385 = vmatprep.subr.bf16.mxu0 0
    %386 = vmatpush1.bf16.msra.mxu0 0
    %387 = vmatprep.subr.bf16.mxu0 0
    %388 = vmatpush1.bf16.msra.mxu0 0
    %389 = vmatprep.subr.bf16.mxu0 0
    %390 = vmatpush1.bf16.msra.mxu0 0
    %391 = vmatprep.subr.bf16.mxu0 0
    %392 = vmatpush1.bf16.msra.mxu0 0
    %393 = vmatprep.subr.bf16.mxu0 0
    %394 = vmatpush1.bf16.msra.mxu0 0
    %395 = vmatprep.subr.bf16.mxu0 0
    %396 = vmatpush1.bf16.msra.mxu0 0
    %397 = vmatprep.subr.bf16.mxu0 0
    %398 = vmatpush1.bf16.msra.mxu0 0
    %399 = vmatprep.mubr.bf16.mxu0 0
    %400 = vmatmul.mubr.bf16.gmra.mrb[0].mxu0 %v142
    %v401 = vpop.f32.mrb[0].mxu0
    %v402 = vadd.f32 %v354, %v401
    %v403 = vpop.f32.mrb[0].mxu0
    %v404 = vpop.f32.mrb[0].mxu0
    %v405 = vadd.f32 %v354, %v404
    %v406 = vpop.f32.mrb[0].mxu0
    %407 = vmatprep.mubr.bf16.mxu0 0
    %408 = vmatmul.mubr.bf16.gmra.mrb[0].mxu0 %v145
    %v409 = vpop.f32.mrb[0].mxu0
    %v410 = vadd.f32 %v354, %v409
    %v411 = vpop.f32.mrb[0].mxu0
    %v412 = vpop.f32.mrb[0].mxu0
    %v413 = vadd.f32 %v354, %v412
    %v414 = vpop.f32.mrb[0].mxu0
    %415 = vdwg.mxu0
    %v416 = vpack.c.bf16 %v108, %v107
    %v417 = vld [vmem:[#allocation10 + $0x10] sm:$0xf]
    %v418 = vld [vmem:[#allocation10 + $0x14] sm:$0xf]
    %v419 = vld [vmem:[#allocation10 + $0x18] sm:$0xf]
    %v420 = vld [vmem:[#allocation10 + $0x1c] sm:$0xf]
    %v421 = vld [vmem:[#allocation11 + $0x8] sm:$0x1]
    %v422 = vlaneseq
    %v423 = vshrl.u32 %v422, 7
    %v424 = vsub.s32 0, %v423
    %v425 = vrot.slane %v421, %v424
    %v430 = vunpack.c.l.b16 %v417
    %v431 = vunpack.c.l.b16 %v418
    %v432 = vunpack.c.l.b16 %v419
    %v433 = vunpack.c.l.b16 %v420
    %v434 = vpack.c.b16 %v431, %v430
    %v435 = vpack.c.b16 %v433, %v432
    %v439 = vsel %vm140, %v416, 0
    %441 = vmatprep.subr.bf16.mxu0 0
    %442 = vmatpush1.bf16.msra.mxu0 %v434
    %443 = vmatprep.subr.bf16.mxu0 0
    %444 = vmatpush1.bf16.msra.mxu0 %v435
    %445 = vmatprep.subr.bf16.mxu0 0
    %446 = vmatpush1.bf16.msra.mxu0 0
    %447 = vmatprep.subr.bf16.mxu0 0
    %448 = vmatpush1.bf16.msra.mxu0 0
    %449 = vmatprep.subr.bf16.mxu0 0
    %450 = vmatpush1.bf16.msra.mxu0 0
    %451 = vmatprep.subr.bf16.mxu0 0
    %452 = vmatpush1.bf16.msra.mxu0 0
    %453 = vmatprep.subr.bf16.mxu0 0
    %454 = vmatpush1.bf16.msra.mxu0 0
    %455 = vmatprep.subr.bf16.mxu0 0
    %456 = vmatpush1.bf16.msra.mxu0 0
    %457 = vmatprep.subr.bf16.mxu0 0
    %458 = vmatpush1.bf16.msra.mxu0 0
    %459 = vmatprep.subr.bf16.mxu0 0
    %460 = vmatpush1.bf16.msra.mxu0 0
    %461 = vmatprep.subr.bf16.mxu0 0
    %462 = vmatpush1.bf16.msra.mxu0 0
    %463 = vmatprep.subr.bf16.mxu0 0
    %464 = vmatpush1.bf16.msra.mxu0 0
    %465 = vmatprep.subr.bf16.mxu0 0
    %466 = vmatpush1.bf16.msra.mxu0 0
    %467 = vmatprep.subr.bf16.mxu0 0
    %468 = vmatpush1.bf16.msra.mxu0 0
    %469 = vmatprep.subr.bf16.mxu0 0
    %470 = vmatpush1.bf16.msra.mxu0 0
    %471 = vmatprep.subr.bf16.mxu0 0
    %472 = vmatpush1.bf16.msra.mxu0 0
    %473 = vmatprep.mubr.bf16.mxu0 0
    %474 = vmatmul.mubr.bf16.gmra.mrb[0].mxu0 %v439
    %v475 = vpop.f32.mrb[0].mxu0
    %v476 = vadd.f32 %v425, %v475
    %v477 = vpop.f32.mrb[0].mxu0
    %v478 = vpop.f32.mrb[0].mxu0
    %v479 = vadd.f32 %v425, %v478
    %v480 = vpop.f32.mrb[0].mxu0
    %481 = vdwg.mxu0
    %v482 = vld [vmem:[#allocation10 + $0x20] sm:$0xf]
    %v483 = vld [vmem:[#allocation10 + $0x24] sm:$0xf]
    %v484 = vld [vmem:[#allocation10 + $0x28] sm:$0xf]
    %v485 = vld [vmem:[#allocation10 + $0x2c] sm:$0xf]
    %v486 = vld [vmem:[#allocation11 + $0x10] sm:$0x1]
    %v487 = vlaneseq
    %v488 = vshrl.u32 %v487, 7
    %v489 = vsub.s32 0, %v488
    %v490 = vrot.slane %v486, %v489
    %v495 = vunpack.c.l.b16 %v482
    %v496 = vunpack.c.l.b16 %v483
    %v497 = vunpack.c.l.b16 %v484
    %v498 = vunpack.c.l.b16 %v485
    %v499 = vpack.c.b16 %v496, %v495
    %v500 = vpack.c.b16 %v498, %v497
    %503 = vmatprep.subr.bf16.mxu0 0
    %504 = vmatpush1.bf16.msra.mxu0 %v499
    %505 = vmatprep.subr.bf16.mxu0 0
    %506 = vmatpush1.bf16.msra.mxu0 %v500
    %507 = vmatprep.subr.bf16.mxu0 0
    %508 = vmatpush1.bf16.msra.mxu0 0
    %509 = vmatprep.subr.bf16.mxu0 0
    %510 = vmatpush1.bf16.msra.mxu0 0
    %511 = vmatprep.subr.bf16.mxu0 0
    %512 = vmatpush1.bf16.msra.mxu0 0
    %513 = vmatprep.subr.bf16.mxu0 0
    %514 = vmatpush1.bf16.msra.mxu0 0
    %515 = vmatprep.subr.bf16.mxu0 0
    %516 = vmatpush1.bf16.msra.mxu0 0
    %517 = vmatprep.subr.bf16.mxu0 0
    %518 = vmatpush1.bf16.msra.mxu0 0
    %519 = vmatprep.subr.bf16.mxu0 0
    %520 = vmatpush1.bf16.msra.mxu0 0
    %521 = vmatprep.subr.bf16.mxu0 0
    %522 = vmatpush1.bf16.msra.mxu0 0
    %523 = vmatprep.subr.bf16.mxu0 0
    %524 = vmatpush1.bf16.msra.mxu0 0
    %525 = vmatprep.subr.bf16.mxu0 0
    %526 = vmatpush1.bf16.msra.mxu0 0
    %527 = vmatprep.subr.bf16.mxu0 0
    %528 = vmatpush1.bf16.msra.mxu0 0
    %529 = vmatprep.subr.bf16.mxu0 0
    %530 = vmatpush1.bf16.msra.mxu0 0
    %531 = vmatprep.subr.bf16.mxu0 0
    %532 = vmatpush1.bf16.msra.mxu0 0
    %533 = vmatprep.subr.bf16.mxu0 0
    %534 = vmatpush1.bf16.msra.mxu0 0
    %535 = vmatprep.mubr.bf16.mxu0 0
    %536 = vmatmul.mubr.bf16.gmra.mrb[0].mxu0 %v439
    %v537 = vpop.f32.mrb[0].mxu0
    %v538 = vadd.f32 %v490, %v537
    %v539 = vpop.f32.mrb[0].mxu0
    %v540 = vpop.f32.mrb[0].mxu0
    %v541 = vadd.f32 %v490, %v540
    %v542 = vpop.f32.mrb[0].mxu0
    %543 = vdwg.mxu0
    %546 = vrot.lane.b32.xlu0 %v476, 96
    %v547 = vpop.permute.xlu0 %546
    %548 = vrot.lane.b32.xlu0 %v479, 96
    %v549 = vpop.permute.xlu0 %548
    %552 = vxpose.xlu0.b32.start [1/16] %v547, 128
    %553 = vxpose.xlu0.b32.cont [2/16] %v549, 128
    %554 = vxpose.xlu0.b32.cont [3/16] 0.0, 128
    %555 = vxpose.xlu0.b32.cont [4/16] 0.0, 128
    %556 = vxpose.xlu0.b32.cont [5/16] 0.0, 128
    %557 = vxpose.xlu0.b32.cont [6/16] 0.0, 128
    %558 = vxpose.xlu0.b32.cont [7/16] 0.0, 128
    %559 = vxpose.xlu0.b32.cont [8/16] 0.0, 128
    %560 = vxpose.xlu0.b32.cont [9/16] 0.0, 128
    %561 = vxpose.xlu0.b32.cont [10/16] 0.0, 128
    %562 = vxpose.xlu0.b32.cont [11/16] 0.0, 128
    %563 = vxpose.xlu0.b32.cont [12/16] 0.0, 128
    %564 = vxpose.xlu0.b32.cont [13/16] 0.0, 128
    %565 = vxpose.xlu0.b32.cont [14/16] 0.0, 128
    %566 = vxpose.xlu0.b32.cont [15/16] 0.0, 128
    %567 = vxpose.xlu0.b32.end [16/16] 0.0, 128
    %v568 = vpop.trf.xlu0
    %v569 = vpop.trf.xlu0
    %v570 = vpop.trf.xlu0
    %v571 = vpop.trf.xlu0
    %v572 = vpop.trf.xlu0
    %v573 = vpop.trf.xlu0
    %v574 = vpop.trf.xlu0
    %v575 = vpop.trf.xlu0
    %v576 = vpop.trf.xlu0
    %v577 = vpop.trf.xlu0
    %v578 = vpop.trf.xlu0
    %v579 = vpop.trf.xlu0
    %v580 = vpop.trf.xlu0
    %v581 = vpop.trf.xlu0
    %v582 = vpop.trf.xlu0
    %v583 = vpop.trf.xlu0
    %v584 = vpack.c.bf16 %v479, %v476
    %v585 = vpack.c.bf16 %v568, %v568
    %vm586 = vcmask 64512
    %v588 = vsel %vm586, %v584, 0
    %vm590 = vcmask 1043456
    %v592 = vsel %vm590, %v585, 0
    %594 = vmatprep.subr.bf16.mxu0 0
    %595 = vmatpush1.bf16.msra.mxu0 %v592
    %596 = vmatprep.subr.bf16.mxu0 0
    %597 = vmatpush1.bf16.msra.mxu0 0
    %598 = vmatprep.subr.bf16.mxu0 0
    %599 = vmatpush1.bf16.msra.mxu0 0
    %600 = vmatprep.subr.bf16.mxu0 0
    %601 = vmatpush1.bf16.msra.mxu0 0
    %602 = vmatprep.subr.bf16.mxu0 0
    %603 = vmatpush1.bf16.msra.mxu0 0
    %604 = vmatprep.subr.bf16.mxu0 0
    %605 = vmatpush1.bf16.msra.mxu0 0
    %606 = vmatprep.subr.bf16.mxu0 0
    %607 = vmatpush1.bf16.msra.mxu0 0
    %608 = vmatprep.subr.bf16.mxu0 0
    %609 = vmatpush1.bf16.msra.mxu0 0
    %610 = vmatprep.subr.bf16.mxu0 0
    %611 = vmatpush1.bf16.msra.mxu0 0
    %612 = vmatprep.subr.bf16.mxu0 0
    %613 = vmatpush1.bf16.msra.mxu0 0
    %614 = vmatprep.subr.bf16.mxu0 0
    %615 = vmatpush1.bf16.msra.mxu0 0
    %616 = vmatprep.subr.bf16.mxu0 0
    %617 = vmatpush1.bf16.msra.mxu0 0
    %618 = vmatprep.subr.bf16.mxu0 0
    %619 = vmatpush1.bf16.msra.mxu0 0
    %620 = vmatprep.subr.bf16.mxu0 0
    %621 = vmatpush1.bf16.msra.mxu0 0
    %622 = vmatprep.subr.bf16.mxu0 0
    %623 = vmatpush1.bf16.msra.mxu0 0
    %624 = vmatprep.subr.bf16.mxu0 0
    %625 = vmatpush1.bf16.msra.mxu0 0
    %626 = vmatprep.mubr.bf16.mxu0 0
    %627 = vmatmul.mubr.bf16.gmra.mrb[0].mxu0 %v588
    %v628 = vpop.f32.mrb[0].mxu0
    %v629 = vadd.f32 %v115, %v628
    %v630 = vpop.f32.mrb[0].mxu0
    %v631 = vpop.f32.mrb[0].mxu0
    %v632 = vadd.f32 %v116, %v631
    %v633 = vpop.f32.mrb[0].mxu0
    %634 = vdwg.mxu0
    %vm635 = vcmask 130048
    %v636 = vsel %vm635, %v629, -inf
    %637 = vmax.xlane.f32.xlu0 %v636
    %v638 = vpop.xlane.xlu0 %637
    %v639 = vsel %vm635, %v632, -inf
    %640 = vmax.xlane.f32.xlu0 %v639
    %v641 = vpop.xlane.xlu0 %640
    %v642 = vsub.f32 %v629, %v638
    %v643 = vsub.f32 %v632, %v641
    %v644 = vmul.f32 %v642, 1.442695
    %v645 = vpow.pop %v644
    %v646 = vmul.f32 %v643, 1.442695
    %v647 = vpow.pop %v646
    %v648 = vsel %vm635, %v645, 0.0
    %649 = vadd.xlane.f32.xlu0 %v648
    %v650 = vpop.xlane.xlu0 %649
    %v651 = vsel %vm635, %v647, 0.0
    %652 = vadd.xlane.f32.xlu0 %v651
    %v653 = vpop.xlane.xlu0 %652
    %v654 = vrcp.pop %v650
    %v655 = vrcp.pop %v653
    %v656 = vmul.f32 %v645, %v654
    %v657 = vmul.f32 %v647, %v655
    %v658 = vpack.c.bf16 %v657, %v656
    %v659 = vpack.c.bf16 %v541, %v538
    %v660 = vpack.c.bf16 %v569, %v569
    %662 = vrot.lane.b32.xlu0 %v584, 120
    %v663 = vpop.permute.xlu0 %662
    %v665 = vsel %vm586, %v663, 0
    %v668 = vsel %vm590, %v660, 0
    %670 = vmatprep.subr.bf16.mxu0 0
    %671 = vmatpush1.bf16.msra.mxu0 %v668
    %672 = vmatprep.subr.bf16.mxu0 0
    %673 = vmatpush1.bf16.msra.mxu0 0
    %674 = vmatprep.subr.bf16.mxu0 0
    %675 = vmatpush1.bf16.msra.mxu0 0
    %676 = vmatprep.subr.bf16.mxu0 0
    %677 = vmatpush1.bf16.msra.mxu0 0
    %678 = vmatprep.subr.bf16.mxu0 0
    %679 = vmatpush1.bf16.msra.mxu0 0
    %680 = vmatprep.subr.bf16.mxu0 0
    %681 = vmatpush1.bf16.msra.mxu0 0
    %682 = vmatprep.subr.bf16.mxu0 0
    %683 = vmatpush1.bf16.msra.mxu0 0
    %684 = vmatprep.subr.bf16.mxu0 0
    %685 = vmatpush1.bf16.msra.mxu0 0
    %686 = vmatprep.subr.bf16.mxu0 0
    %687 = vmatpush1.bf16.msra.mxu0 0
    %688 = vmatprep.subr.bf16.mxu0 0
    %689 = vmatpush1.bf16.msra.mxu0 0
    %690 = vmatprep.subr.bf16.mxu0 0
    %691 = vmatpush1.bf16.msra.mxu0 0
    %692 = vmatprep.subr.bf16.mxu0 0
    %693 = vmatpush1.bf16.msra.mxu0 0
    %694 = vmatprep.subr.bf16.mxu0 0
    %695 = vmatpush1.bf16.msra.mxu0 0
    %696 = vmatprep.subr.bf16.mxu0 0
    %697 = vmatpush1.bf16.msra.mxu0 0
    %698 = vmatprep.subr.bf16.mxu0 0
    %699 = vmatpush1.bf16.msra.mxu0 0
    %700 = vmatprep.subr.bf16.mxu0 0
    %701 = vmatpush1.bf16.msra.mxu0 0
    %702 = vmatprep.mubr.bf16.mxu0 0
    %703 = vmatmul.mubr.bf16.gmra.mrb[0].mxu0 %v665
    %v704 = vpop.f32.mrb[0].mxu0
    %v705 = vadd.f32 %v115, %v704
    %v706 = vpop.f32.mrb[0].mxu0
    %v707 = vpop.f32.mrb[0].mxu0
    %v708 = vadd.f32 %v116, %v707
    %v709 = vpop.f32.mrb[0].mxu0
    %710 = vdwg.mxu0
    %v711 = vsel %vm635, %v705, -inf
    %712 = vmax.xlane.f32.xlu0 %v711
    %v713 = vpop.xlane.xlu0 %712
    %v714 = vsel %vm635, %v708, -inf
    %715 = vmax.xlane.f32.xlu0 %v714
    %v716 = vpop.xlane.xlu0 %715
    %v717 = vsub.f32 %v705, %v713
    %v718 = vsub.f32 %v708, %v716
    %v719 = vmul.f32 %v717, 1.442695
    %v720 = vpow.pop %v719
    %v721 = vmul.f32 %v718, 1.442695
    %v722 = vpow.pop %v721
    %v723 = vsel %vm635, %v720, 0.0
    %724 = vadd.xlane.f32.xlu0 %v723
    %v725 = vpop.xlane.xlu0 %724
    %v726 = vsel %vm635, %v722, 0.0
    %727 = vadd.xlane.f32.xlu0 %v726
    %v728 = vpop.xlane.xlu0 %727
    %v729 = vrcp.pop %v725
    %v730 = vrcp.pop %v728
    %v731 = vmul.f32 %v720, %v729
    %v732 = vmul.f32 %v722, %v730
    %v733 = vpack.c.bf16 %v732, %v731
    %735 = vrot.lane.b32.xlu0 %v659, 96
    %v736 = vpop.permute.xlu0 %735
    %v739 = vsel %vm635, %v733, 0
    %741 = vmatprep.subr.bf16.mxu0 0
    %742 = vmatpush1.bf16.msra.mxu0 %v736
    %743 = vmatprep.subr.bf16.mxu0 0
    %744 = vmatpush1.bf16.msra.mxu0 0
    %745 = vmatprep.subr.bf16.mxu0 0
    %746 = vmatpush1.bf16.msra.mxu0 0
    %747 = vmatprep.subr.bf16.mxu0 0
    %748 = vmatpush1.bf16.msra.mxu0 0
    %749 = vmatprep.subr.bf16.mxu0 0
    %750 = vmatpush1.bf16.msra.mxu0 0
    %751 = vmatprep.subr.bf16.mxu0 0
    %752 = vmatpush1.bf16.msra.mxu0 0
    %753 = vmatprep.subr.bf16.mxu0 0
    %754 = vmatpush1.bf16.msra.mxu0 0
    %755 = vmatprep.subr.bf16.mxu0 0
    %756 = vmatpush1.bf16.msra.mxu0 0
    %757 = vmatprep.subr.bf16.mxu0 0
    %758 = vmatpush1.bf16.msra.mxu0 0
    %759 = vmatprep.subr.bf16.mxu0 0
    %760 = vmatpush1.bf16.msra.mxu0 0
    %761 = vmatprep.subr.bf16.mxu0 0
    %762 = vmatpush1.bf16.msra.mxu0 0
    %763 = vmatprep.subr.bf16.mxu0 0
    %764 = vmatpush1.bf16.msra.mxu0 0
    %765 = vmatprep.subr.bf16.mxu0 0
    %766 = vmatpush1.bf16.msra.mxu0 0
    %767 = vmatprep.subr.bf16.mxu0 0
    %768 = vmatpush1.bf16.msra.mxu0 0
    %769 = vmatprep.subr.bf16.mxu0 0
    %770 = vmatpush1.bf16.msra.mxu0 0
    %771 = vmatprep.subr.bf16.mxu0 0
    %772 = vmatpush1.bf16.msra.mxu0 0
    %773 = vmatprep.mubr.bf16.mxu0 0
    %774 = vmatmul.mubr.bf16.gmra.mrb[0].mxu0 %v739
    %v775 = vpop.f32.mrb[0].mxu0
    %v776 = vadd.f32 0.0, %v775
    %v777 = vpop.f32.mrb[0].mxu0
    %v778 = vpop.f32.mrb[0].mxu0
    %v779 = vadd.f32 0.0, %v778
    %v780 = vpop.f32.mrb[0].mxu0
    %781 = vdwg.mxu0
    %v783 = vsel %vm635, %v658, 0
    %785 = vmatprep.subr.bf16.mxu0 0
    %786 = vmatpush1.bf16.msra.mxu0 %v659
    %787 = vmatprep.subr.bf16.mxu0 0
    %788 = vmatpush1.bf16.msra.mxu0 0
    %789 = vmatprep.subr.bf16.mxu0 0
    %790 = vmatpush1.bf16.msra.mxu0 0
    %791 = vmatprep.subr.bf16.mxu0 0
    %792 = vmatpush1.bf16.msra.mxu0 0
    %793 = vmatprep.subr.bf16.mxu0 0
    %794 = vmatpush1.bf16.msra.mxu0 0
    %795 = vmatprep.subr.bf16.mxu0 0
    %796 = vmatpush1.bf16.msra.mxu0 0
    %797 = vmatprep.subr.bf16.mxu0 0
    %798 = vmatpush1.bf16.msra.mxu0 0
    %799 = vmatprep.subr.bf16.mxu0 0
    %800 = vmatpush1.bf16.msra.mxu0 0
    %801 = vmatprep.subr.bf16.mxu0 0
    %802 = vmatpush1.bf16.msra.mxu0 0
    %803 = vmatprep.subr.bf16.mxu0 0
    %804 = vmatpush1.bf16.msra.mxu0 0
    %805 = vmatprep.subr.bf16.mxu0 0
    %806 = vmatpush1.bf16.msra.mxu0 0
    %807 = vmatprep.subr.bf16.mxu0 0
    %808 = vmatpush1.bf16.msra.mxu0 0
    %809 = vmatprep.subr.bf16.mxu0 0
    %810 = vmatpush1.bf16.msra.mxu0 0
    %811 = vmatprep.subr.bf16.mxu0 0
    %812 = vmatpush1.bf16.msra.mxu0 0
    %813 = vmatprep.subr.bf16.mxu0 0
    %814 = vmatpush1.bf16.msra.mxu0 0
    %815 = vmatprep.subr.bf16.mxu0 0
    %816 = vmatpush1.bf16.msra.mxu0 0
    %817 = vmatprep.mubr.bf16.mxu0 0
    %818 = vmatmul.mubr.bf16.gmra.mrb[0].mxu0 %v783
    %v819 = vpop.f32.mrb[0].mxu0
    %v820 = vadd.f32 %v776, %v819
    %v821 = vpop.f32.mrb[0].mxu0
    %v822 = vpop.f32.mrb[0].mxu0
    %v823 = vadd.f32 %v779, %v822
    %v824 = vpop.f32.mrb[0].mxu0
    %825 = vdwg.mxu0
    %v826 = vpack.c.bf16 %v570, %v570
    %827 = vrot.lane.b32.xlu0 %v584, 112
    %v828 = vpop.permute.xlu0 %827
    %v830 = vsel %vm586, %v828, 0
    %v833 = vsel %vm590, %v826, 0
    %835 = vmatprep.subr.bf16.mxu0 0
    %836 = vmatpush1.bf16.msra.mxu0 %v833
    %837 = vmatprep.subr.bf16.mxu0 0
    %838 = vmatpush1.bf16.msra.mxu0 0
    %839 = vmatprep.subr.bf16.mxu0 0
    %840 = vmatpush1.bf16.msra.mxu0 0
    %841 = vmatprep.subr.bf16.mxu0 0
    %842 = vmatpush1.bf16.msra.mxu0 0
    %843 = vmatprep.subr.bf16.mxu0 0
    %844 = vmatpush1.bf16.msra.mxu0 0
    %845 = vmatprep.subr.bf16.mxu0 0
    %846 = vmatpush1.bf16.msra.mxu0 0
    %847 = vmatprep.subr.bf16.mxu0 0
    %848 = vmatpush1.bf16.msra.mxu0 0
    %849 = vmatprep.subr.bf16.mxu0 0
    %850 = vmatpush1.bf16.msra.mxu0 0
    %851 = vmatprep.subr.bf16.mxu0 0
    %852 = vmatpush1.bf16.msra.mxu0 0
    %853 = vmatprep.subr.bf16.mxu0 0
    %854 = vmatpush1.bf16.msra.mxu0 0
    %855 = vmatprep.subr.bf16.mxu0 0
    %856 = vmatpush1.bf16.msra.mxu0 0
    %857 = vmatprep.subr.bf16.mxu0 0
    %858 = vmatpush1.bf16.msra.mxu0 0
    %859 = vmatprep.subr.bf16.mxu0 0
    %860 = vmatpush1.bf16.msra.mxu0 0
    %861 = vmatprep.subr.bf16.mxu0 0
    %862 = vmatpush1.bf16.msra.mxu0 0
    %863 = vmatprep.subr.bf16.mxu0 0
    %864 = vmatpush1.bf16.msra.mxu0 0
    %865 = vmatprep.subr.bf16.mxu0 0
    %866 = vmatpush1.bf16.msra.mxu0 0
    %867 = vmatprep.mubr.bf16.mxu0 0
    %868 = vmatmul.mubr.bf16.gmra.mrb[0].mxu0 %v830
    %v869 = vpop.f32.mrb[0].mxu0
    %v870 = vadd.f32 %v115, %v869
    %v871 = vpop.f32.mrb[0].mxu0
    %v872 = vpop.f32.mrb[0].mxu0
    %v873 = vadd.f32 %v116, %v872
    %v874 = vpop.f32.mrb[0].mxu0
    %875 = vdwg.mxu0
    %v876 = vsel %vm635, %v870, -inf
    %877 = vmax.xlane.f32.xlu0 %v876
    %v878 = vpop.xlane.xlu0 %877
    %v879 = vsel %vm635, %v873, -inf
    %880 = vmax.xlane.f32.xlu0 %v879
    %v881 = vpop.xlane.xlu0 %880
    %v882 = vsub.f32 %v870, %v878
    %v883 = vsub.f32 %v873, %v881
    %v884 = vmul.f32 %v882, 1.442695
    %v885 = vpow.pop %v884
    %v886 = vmul.f32 %v883, 1.442695
    %v887 = vpow.pop %v886
    %v888 = vsel %vm635, %v885, 0.0
    %889 = vadd.xlane.f32.xlu0 %v888
    %v890 = vpop.xlane.xlu0 %889
    %v891 = vsel %vm635, %v887, 0.0
    %892 = vadd.xlane.f32.xlu0 %v891
    %v893 = vpop.xlane.xlu0 %892
    %v894 = vrcp.pop %v890
    %v895 = vrcp.pop %v893
    %v896 = vmul.f32 %v885, %v894
    %v897 = vmul.f32 %v887, %v895
    %v898 = vpack.c.bf16 %v897, %v896
    %899 = vrot.lane.b32.xlu0 %v659, 64
    %v900 = vpop.permute.xlu0 %899
    %v903 = vsel %vm635, %v898, 0
    %905 = vmatprep.subr.bf16.mxu0 0
    %906 = vmatpush1.bf16.msra.mxu0 %v900
    %907 = vmatprep.subr.bf16.mxu0 0
    %908 = vmatpush1.bf16.msra.mxu0 0
    %909 = vmatprep.subr.bf16.mxu0 0
    %910 = vmatpush1.bf16.msra.mxu0 0
    %911 = vmatprep.subr.bf16.mxu0 0
    %912 = vmatpush1.bf16.msra.mxu0 0
    %913 = vmatprep.subr.bf16.mxu0 0
    %914 = vmatpush1.bf16.msra.mxu0 0
    %915 = vmatprep.subr.bf16.mxu0 0
    %916 = vmatpush1.bf16.msra.mxu0 0
    %917 = vmatprep.subr.bf16.mxu0 0
    %918 = vmatpush1.bf16.msra.mxu0 0
    %919 = vmatprep.subr.bf16.mxu0 0
    %920 = vmatpush1.bf16.msra.mxu0 0
    %921 = vmatprep.subr.bf16.mxu0 0
    %922 = vmatpush1.bf16.msra.mxu0 0
    %923 = vmatprep.subr.bf16.mxu0 0
    %924 = vmatpush1.bf16.msra.mxu0 0
    %925 = vmatprep.subr.bf16.mxu0 0
    %926 = vmatpush1.bf16.msra.mxu0 0
    %927 = vmatprep.subr.bf16.mxu0 0
    %928 = vmatpush1.bf16.msra.mxu0 0
    %929 = vmatprep.subr.bf16.mxu0 0
    %930 = vmatpush1.bf16.msra.mxu0 0
    %931 = vmatprep.subr.bf16.mxu0 0
    %932 = vmatpush1.bf16.msra.mxu0 0
    %933 = vmatprep.subr.bf16.mxu0 0
    %934 = vmatpush1.bf16.msra.mxu0 0
    %935 = vmatprep.subr.bf16.mxu0 0
    %936 = vmatpush1.bf16.msra.mxu0 0
    %937 = vmatprep.mubr.bf16.mxu0 0
    %938 = vmatmul.mubr.bf16.gmra.mrb[0].mxu0 %v903
    %v939 = vpop.f32.mrb[0].mxu0
    %v940 = vadd.f32 0.0, %v939
    %v941 = vpop.f32.mrb[0].mxu0
    %v942 = vpop.f32.mrb[0].mxu0
    %v943 = vadd.f32 0.0, %v942
    %v944 = vpop.f32.mrb[0].mxu0
    %945 = vdwg.mxu0
    %v946 = vadd.f32 %v820, %v940
    %v947 = vadd.f32 %v823, %v943
    %v948 = vpack.c.bf16 %v571, %v571
    %949 = vrot.lane.b32.xlu0 %v584, 104
    %v950 = vpop.permute.xlu0 %949
    %v952 = vsel %vm586, %v950, 0
    %v955 = vsel %vm590, %v948, 0
    %957 = vmatprep.subr.bf16.mxu0 0
    %958 = vmatpush1.bf16.msra.mxu0 %v955
    %959 = vmatprep.subr.bf16.mxu0 0
    %960 = vmatpush1.bf16.msra.mxu0 0
    %961 = vmatprep.subr.bf16.mxu0 0
    %962 = vmatpush1.bf16.msra.mxu0 0
    %963 = vmatprep.subr.bf16.mxu0 0
    %964 = vmatpush1.bf16.msra.mxu0 0
    %965 = vmatprep.subr.bf16.mxu0 0
    %966 = vmatpush1.bf16.msra.mxu0 0
    %967 = vmatprep.subr.bf16.mxu0 0
    %968 = vmatpush1.bf16.msra.mxu0 0
    %969 = vmatprep.subr.bf16.mxu0 0
    %970 = vmatpush1.bf16.msra.mxu0 0
    %971 = vmatprep.subr.bf16.mxu0 0
    %972 = vmatpush1.bf16.msra.mxu0 0
    %973 = vmatprep.subr.bf16.mxu0 0
    %974 = vmatpush1.bf16.msra.mxu0 0
    %975 = vmatprep.subr.bf16.mxu0 0
    %976 = vmatpush1.bf16.msra.mxu0 0
    %977 = vmatprep.subr.bf16.mxu0 0
    %978 = vmatpush1.bf16.msra.mxu0 0
    %979 = vmatprep.subr.bf16.mxu0 0
    %980 = vmatpush1.bf16.msra.mxu0 0
    %981 = vmatprep.subr.bf16.mxu0 0
    %982 = vmatpush1.bf16.msra.mxu0 0
    %983 = vmatprep.subr.bf16.mxu0 0
    %984 = vmatpush1.bf16.msra.mxu0 0
    %985 = vmatprep.subr.bf16.mxu0 0
    %986 = vmatpush1.bf16.msra.mxu0 0
    %987 = vmatprep.subr.bf16.mxu0 0
    %988 = vmatpush1.bf16.msra.mxu0 0
    %989 = vmatprep.mubr.bf16.mxu0 0
    %990 = vmatmul.mubr.bf16.gmra.mrb[0].mxu0 %v952
    %v991 = vpop.f32.mrb[0].mxu0
    %v992 = vadd.f32 %v115, %v991
    %v993 = vpop.f32.mrb[0].mxu0
    %v994 = vpop.f32.mrb[0].mxu0
    %v995 = vadd.f32 %v116, %v994
    %v996 = vpop.f32.mrb[0].mxu0
    %997 = vdwg.mxu0
    %v998 = vsel %vm635, %v992, -inf
    %999 = vmax.xlane.f32.xlu0 %v998
    %v1000 = vpop.xlane.xlu0 %999
    %v1001 = vsel %vm635, %v995, -inf
    %1002 = vmax.xlane.f32.xlu0 %v1001
    %v1003 = vpop.xlane.xlu0 %1002
    %v1004 = vsub.f32 %v992, %v1000
    %v1005 = vsub.f32 %v995, %v1003
    %v1006 = vmul.f32 %v1004, 1.442695
    %v1007 = vpow.pop %v1006
    %v1008 = vmul.f32 %v1005, 1.442695
    %v1009 = vpow.pop %v1008
    %v1010 = vsel %vm635, %v1007, 0.0
    %1011 = vadd.xlane.f32.xlu0 %v1010
    %v1012 = vpop.xlane.xlu0 %1011
    %v1013 = vsel %vm635, %v1009, 0.0
    %1014 = vadd.xlane.f32.xlu0 %v1013
    %v1015 = vpop.xlane.xlu0 %1014
    %v1016 = vrcp.pop %v1012
    %v1017 = vrcp.pop %v1015
    %v1018 = vmul.f32 %v1007, %v1016
    %v1019 = vmul.f32 %v1009, %v1017
    %v1020 = vpack.c.bf16 %v1019, %v1018
    %1021 = vrot.lane.b32.xlu0 %v659, 32
    %v1022 = vpop.permute.xlu0 %1021
    %v1025 = vsel %vm635, %v1020, 0
    %1027 = vmatprep.subr.bf16.mxu0 0
    %1028 = vmatpush1.bf16.msra.mxu0 %v1022
    %1029 = vmatprep.subr.bf16.mxu0 0
    %1030 = vmatpush1.bf16.msra.mxu0 0
    %1031 = vmatprep.subr.bf16.mxu0 0
    %1032 = vmatpush1.bf16.msra.mxu0 0
    %1033 = vmatprep.subr.bf16.mxu0 0
    %1034 = vmatpush1.bf16.msra.mxu0 0
    %1035 = vmatprep.subr.bf16.mxu0 0
    %1036 = vmatpush1.bf16.msra.mxu0 0
    %1037 = vmatprep.subr.bf16.mxu0 0
    %1038 = vmatpush1.bf16.msra.mxu0 0
    %1039 = vmatprep.subr.bf16.mxu0 0
    %1040 = vmatpush1.bf16.msra.mxu0 0
    %1041 = vmatprep.subr.bf16.mxu0 0
    %1042 = vmatpush1.bf16.msra.mxu0 0
    %1043 = vmatprep.subr.bf16.mxu0 0
    %1044 = vmatpush1.bf16.msra.mxu0 0
    %1045 = vmatprep.subr.bf16.mxu0 0
    %1046 = vmatpush1.bf16.msra.mxu0 0
    %1047 = vmatprep.subr.bf16.mxu0 0
    %1048 = vmatpush1.bf16.msra.mxu0 0
    %1049 = vmatprep.subr.bf16.mxu0 0
    %1050 = vmatpush1.bf16.msra.mxu0 0
    %1051 = vmatprep.subr.bf16.mxu0 0
    %1052 = vmatpush1.bf16.msra.mxu0 0
    %1053 = vmatprep.subr.bf16.mxu0 0
    %1054 = vmatpush1.bf16.msra.mxu0 0
    %1055 = vmatprep.subr.bf16.mxu0 0
    %1056 = vmatpush1.bf16.msra.mxu0 0
    %1057 = vmatprep.subr.bf16.mxu0 0
    %1058 = vmatpush1.bf16.msra.mxu0 0
    %1059 = vmatprep.mubr.bf16.mxu0 0
    %1060 = vmatmul.mubr.bf16.gmra.mrb[0].mxu0 %v1025
    %v1061 = vpop.f32.mrb[0].mxu0
    %v1062 = vadd.f32 0.0, %v1061
    %v1063 = vpop.f32.mrb[0].mxu0
    %v1064 = vpop.f32.mrb[0].mxu0
    %v1065 = vadd.f32 0.0, %v1064
    %v1066 = vpop.f32.mrb[0].mxu0
    %1067 = vdwg.mxu0
    %v1068 = vadd.f32 %v946, %v1062
    %v1069 = vadd.f32 %v947, %v1065
    %v1070 = vld [vmem:[#allocation11 + $0x18] sm:$0x1]
    %v1071 = vlaneseq
    %v1072 = vshrl.u32 %v1071, 7
    %v1073 = vsub.s32 0, %v1072
    %v1074 = vrot.slane %v1070, %v1073
    %v1075 = vadd.f32 %v1068, %v1074
    %v1076 = vadd.f32 %v1069, %v1074
    %v1077 = vadd.f32 %v107, %v1075
    %v1078 = vadd.f32 %v108, %v1076
    %v1079 = vld [vmem:[#allocation11 + $0x20] sm:$0x1]
    %v1080 = vld [vmem:[#allocation11 + $0x28] sm:$0x1]
    %v1081 = vsel %vm140, %v1077, 0.0
    %1082 = vadd.xlane.f32.xlu0 %v1081
    %v1083 = vpop.xlane.xlu0 %1082
    %v1084 = vsel %vm140, %v1078, 0.0
    %1085 = vadd.xlane.f32.xlu0 %v1084
    %v1086 = vpop.xlane.xlu0 %1085
    %v1087 = vrcp.pop 32.0
    %v1088 = vmul.f32 %v1083, %v1087
    %v1089 = vmul.f32 %v1086, %v1087
    %v1090 = vsub.f32 %v1077, %v1088
    %v1091 = vsub.f32 %v1078, %v1089
    %v1092 = vmul.f32 %v1090, %v1090
    %v1093 = vmul.f32 %v1091, %v1091
    %v1094 = vsel %vm140, %v1092, 0.0
    %1095 = vadd.xlane.f32.xlu0 %v1094
    %v1096 = vpop.xlane.xlu0 %1095
    %v1097 = vsel %vm140, %v1093, 0.0
    %1098 = vadd.xlane.f32.xlu0 %v1097
    %v1099 = vpop.xlane.xlu0 %1098
    %v1100 = vmul.f32 %v1096, %v1087
    %v1101 = vmul.f32 %v1099, %v1087
    %v1102 = vadd.f32 %v1100, 1e-05
    %v1103 = vadd.f32 %v1101, 1e-05
    %v1104 = vrsqrt.pop %v1102
    %v1105 = vrsqrt.pop %v1103
    %v1106 = vmul.f32 %v1090, %v1104
    %v1107 = vmul.f32 %v1091, %v1105
    %v1108 = vlaneseq
    %v1109 = vshrl.u32 %v1108, 7
    %v1110 = vsub.s32 0, %v1109
    %v1111 = vrot.slane %v1079, %v1110
    %v1112 = vmul.f32 %v1106, %v1111
    %v1113 = vmul.f32 %v1107, %v1111
    %v1114 = vlaneseq
    %v1115 = vshrl.u32 %v1114, 7
    %v1116 = vsub.s32 0, %v1115
    %v1117 = vrot.slane %v1080, %v1116
    %v1118 = vadd.f32 %v1112, %v1117
    %v1119 = vadd.f32 %v1113, %v1117
    %v1120 = vpack.c.bf16 %v1119, %v1118
    %v1121 = vld [vmem:[#allocation10 + $0x30] sm:$0xf]
    %v1122 = vld [vmem:[#allocation10 + $0x34] sm:$0xf]
    %v1123 = vld [vmem:[#allocation10 + $0x38] sm:$0xf]
    %v1124 = vld [vmem:[#allocation10 + $0x3c] sm:$0xf]
    %v1125 = vld [vmem:[#allocation11 + $0x30] sm:$0x1]
    %v1126 = vlaneseq
    %v1127 = vshrl.u32 %v1126, 7
    %v1128 = vsub.s32 0, %v1127
    %v1129 = vrot.slane %v1125, %v1128
    %v1134 = vunpack.c.l.b16 %v1121
    %v1135 = vunpack.c.l.b16 %v1122
    %v1136 = vunpack.c.l.b16 %v1123
    %v1137 = vunpack.c.l.b16 %v1124
    %v1138 = vpack.c.b16 %v1135, %v1134
    %v1139 = vpack.c.b16 %v1137, %v1136
    %v1143 = vsel %vm140, %v1120, 0
    %1145 = vmatprep.subr.bf16.mxu0 0
    %1146 = vmatpush1.bf16.msra.mxu0 %v1138
    %1147 = vmatprep.subr.bf16.mxu0 0
    %1148 = vmatpush1.bf16.msra.mxu0 %v1139
    %1149 = vmatprep.subr.bf16.mxu0 0
    %1150 = vmatpush1.bf16.msra.mxu0 0
    %1151 = vmatprep.subr.bf16.mxu0 0
    %1152 = vmatpush1.bf16.msra.mxu0 0
    %1153 = vmatprep.subr.bf16.mxu0 0
    %1154 = vmatpush1.bf16.msra.mxu0 0
    %1155 = vmatprep.subr.bf16.mxu0 0
    %1156 = vmatpush1.bf16.msra.mxu0 0
    %1157 = vmatprep.subr.bf16.mxu0 0
    %1158 = vmatpush1.bf16.msra.mxu0 0
    %1159 = vmatprep.subr.bf16.mxu0 0
    %1160 = vmatpush1.bf16.msra.mxu0 0
    %1161 = vmatprep.subr.bf16.mxu0 0
    %1162 = vmatpush1.bf16.msra.mxu0 0
    %1163 = vmatprep.subr.bf16.mxu0 0
    %1164 = vmatpush1.bf16.msra.mxu0 0
    %1165 = vmatprep.subr.bf16.mxu0 0
    %1166 = vmatpush1.bf16.msra.mxu0 0
    %1167 = vmatprep.subr.bf16.mxu0 0
    %1168 = vmatpush1.bf16.msra.mxu0 0
    %1169 = vmatprep.subr.bf16.mxu0 0
    %1170 = vmatpush1.bf16.msra.mxu0 0
    %1171 = vmatprep.subr.bf16.mxu0 0
    %1172 = vmatpush1.bf16.msra.mxu0 0
    %1173 = vmatprep.subr.bf16.mxu0 0
    %1174 = vmatpush1.bf16.msra.mxu0 0
    %1175 = vmatprep.subr.bf16.mxu0 0
    %1176 = vmatpush1.bf16.msra.mxu0 0
    %1177 = vmatprep.mubr.bf16.mxu0 0
    %1178 = vmatmul.mubr.bf16.gmra.mrb[0].mxu0 %v1143
    %v1179 = vpop.f32.mrb[0].mxu0
    %v1180 = vadd.f32 %v1129, %v1179
    %v1181 = vpop.f32.mrb[0].mxu0
    %v1182 = vpop.f32.mrb[0].mxu0
    %v1183 = vadd.f32 %v1129, %v1182
    %v1184 = vpop.f32.mrb[0].mxu0
    %1185 = vdwg.mxu0
    %v1186 = vpack.c.bf16 %v1183, %v1180
    %v1187 = vpack.c.bf16 %v212, %v212
    %v1189 = vsel %vm586, %v1186, 0
    %v1192 = vsel %vm590, %v1187, 0
    %1194 = vmatprep.subr.bf16.mxu0 0
    %1195 = vmatpush1.bf16.msra.mxu0 %v1192
    %1196 = vmatprep.subr.bf16.mxu0 0
    %1197 = vmatpush1.bf16.msra.mxu0 0
    %1198 = vmatprep.subr.bf16.mxu0 0
    %1199 = vmatpush1.bf16.msra.mxu0 0
    %1200 = vmatprep.subr.bf16.mxu0 0
    %1201 = vmatpush1.bf16.msra.mxu0 0
    %1202 = vmatprep.subr.bf16.mxu0 0
    %1203 = vmatpush1.bf16.msra.mxu0 0
    %1204 = vmatprep.subr.bf16.mxu0 0
    %1205 = vmatpush1.bf16.msra.mxu0 0
    %1206 = vmatprep.subr.bf16.mxu0 0
    %1207 = vmatpush1.bf16.msra.mxu0 0
    %1208 = vmatprep.subr.bf16.mxu0 0
    %1209 = vmatpush1.bf16.msra.mxu0 0
    %1210 = vmatprep.subr.bf16.mxu0 0
    %1211 = vmatpush1.bf16.msra.mxu0 0
    %1212 = vmatprep.subr.bf16.mxu0 0
    %1213 = vmatpush1.bf16.msra.mxu0 0
    %1214 = vmatprep.subr.bf16.mxu0 0
    %1215 = vmatpush1.bf16.msra.mxu0 0
    %1216 = vmatprep.subr.bf16.mxu0 0
    %1217 = vmatpush1.bf16.msra.mxu0 0
    %1218 = vmatprep.subr.bf16.mxu0 0
    %1219 = vmatpush1.bf16.msra.mxu0 0
    %1220 = vmatprep.subr.bf16.mxu0 0
    %1221 = vmatpush1.bf16.msra.mxu0 0
    %1222 = vmatprep.subr.bf16.mxu0 0
    %1223 = vmatpush1.bf16.msra.mxu0 0
    %1224 = vmatprep.subr.bf16.mxu0 0
    %1225 = vmatpush1.bf16.msra.mxu0 0
    %1226 = vmatprep.mubr.bf16.mxu0 0
    %1227 = vmatmul.mubr.bf16.gmra.mrb[0].mxu0 %v1189
    %v1228 = vpop.f32.mrb[0].mxu0
    %v1229 = vadd.f32 %v117, %v1228
    %v1230 = vpop.f32.mrb[0].mxu0
    %v1231 = vpop.f32.mrb[0].mxu0
    %v1232 = vadd.f32 %v118, %v1231
    %v1233 = vpop.f32.mrb[0].mxu0
    %1234 = vdwg.mxu0
    %v1235 = vsel %vm140, %v1229, -inf
    %1236 = vmax.xlane.f32.xlu0 %v1235
    %v1237 = vpop.xlane.xlu0 %1236
    %v1238 = vsel %vm140, %v1232, -inf
    %1239 = vmax.xlane.f32.xlu0 %v1238
    %v1240 = vpop.xlane.xlu0 %1239
    %v1241 = vsub.f32 %v1229, %v1237
    %v1242 = vsub.f32 %v1232, %v1240
    %v1243 = vmul.f32 %v1241, 1.442695
    %v1244 = vpow.pop %v1243
    %v1245 = vmul.f32 %v1242, 1.442695
    %v1246 = vpow.pop %v1245
    %v1247 = vsel %vm140, %v1244, 0.0
    %1248 = vadd.xlane.f32.xlu0 %v1247
    %v1249 = vpop.xlane.xlu0 %1248
    %v1250 = vsel %vm140, %v1246, 0.0
    %1251 = vadd.xlane.f32.xlu0 %v1250
    %v1252 = vpop.xlane.xlu0 %1251
    %v1253 = vrcp.pop %v1249
    %v1254 = vrcp.pop %v1252
    %v1255 = vmul.f32 %v1244, %v1253
    %v1256 = vmul.f32 %v1246, %v1254
    %v1257 = vpack.c.bf16 %v1256, %v1255
    %v1258 = vpack.c.bf16 %v335, %v332
    %v1259 = vpack.c.bf16 %v343, %v340
    %v1260 = vpack.c.bf16 %v213, %v213
    %1262 = vrot.lane.b32.xlu0 %v1186, 120
    %v1263 = vpop.permute.xlu0 %1262
    %v1265 = vsel %vm586, %v1263, 0
    %v1268 = vsel %vm590, %v1260, 0
    %1270 = vmatprep.subr.bf16.mxu0 0
    %1271 = vmatpush1.bf16.msra.mxu0 %v1268
    %1272 = vmatprep.subr.bf16.mxu0 0
    %1273 = vmatpush1.bf16.msra.mxu0 0
    %1274 = vmatprep.subr.bf16.mxu0 0
    %1275 = vmatpush1.bf16.msra.mxu0 0
    %1276 = vmatprep.subr.bf16.mxu0 0
    %1277 = vmatpush1.bf16.msra.mxu0 0
    %1278 = vmatprep.subr.bf16.mxu0 0
    %1279 = vmatpush1.bf16.msra.mxu0 0
    %1280 = vmatprep.subr.bf16.mxu0 0
    %1281 = vmatpush1.bf16.msra.mxu0 0
    %1282 = vmatprep.subr.bf16.mxu0 0
    %1283 = vmatpush1.bf16.msra.mxu0 0
    %1284 = vmatprep.subr.bf16.mxu0 0
    %1285 = vmatpush1.bf16.msra.mxu0 0
    %1286 = vmatprep.subr.bf16.mxu0 0
    %1287 = vmatpush1.bf16.msra.mxu0 0
    %1288 = vmatprep.subr.bf16.mxu0 0
    %1289 = vmatpush1.bf16.msra.mxu0 0
    %1290 = vmatprep.subr.bf16.mxu0 0
    %1291 = vmatpush1.bf16.msra.mxu0 0
    %1292 = vmatprep.subr.bf16.mxu0 0
    %1293 = vmatpush1.bf16.msra.mxu0 0
    %1294 = vmatprep.subr.bf16.mxu0 0
    %1295 = vmatpush1.bf16.msra.mxu0 0
    %1296 = vmatprep.subr.bf16.mxu0 0
    %1297 = vmatpush1.bf16.msra.mxu0 0
    %1298 = vmatprep.subr.bf16.mxu0 0
    %1299 = vmatpush1.bf16.msra.mxu0 0
    %1300 = vmatprep.subr.bf16.mxu0 0
    %1301 = vmatpush1.bf16.msra.mxu0 0
    %1302 = vmatprep.mubr.bf16.mxu0 0
    %1303 = vmatmul.mubr.bf16.gmra.mrb[0].mxu0 %v1265
    %v1304 = vpop.f32.mrb[0].mxu0
    %v1305 = vadd.f32 %v117, %v1304
    %v1306 = vpop.f32.mrb[0].mxu0
    %v1307 = vpop.f32.mrb[0].mxu0
    %v1308 = vadd.f32 %v118, %v1307
    %v1309 = vpop.f32.mrb[0].mxu0
    %1310 = vdwg.mxu0
    %v1311 = vsel %vm140, %v1305, -inf
    %1312 = vmax.xlane.f32.xlu0 %v1311
    %v1313 = vpop.xlane.xlu0 %1312
    %v1314 = vsel %vm140, %v1308, -inf
    %1315 = vmax.xlane.f32.xlu0 %v1314
    %v1316 = vpop.xlane.xlu0 %1315
    %v1317 = vsub.f32 %v1305, %v1313
    %v1318 = vsub.f32 %v1308, %v1316
    %v1319 = vmul.f32 %v1317, 1.442695
    %v1320 = vpow.pop %v1319
    %v1321 = vmul.f32 %v1318, 1.442695
    %v1322 = vpow.pop %v1321
    %v1323 = vsel %vm140, %v1320, 0.0
    %1324 = vadd.xlane.f32.xlu0 %v1323
    %v1325 = vpop.xlane.xlu0 %1324
    %v1326 = vsel %vm140, %v1322, 0.0
    %1327 = vadd.xlane.f32.xlu0 %v1326
    %v1328 = vpop.xlane.xlu0 %1327
    %v1329 = vrcp.pop %v1325
    %v1330 = vrcp.pop %v1328
    %v1331 = vmul.f32 %v1320, %v1329
    %v1332 = vmul.f32 %v1322, %v1330
    %v1333 = vpack.c.bf16 %v1332, %v1331
    %1336 = vrot.lane.b32.xlu0 %v1258, 96
    %v1337 = vpop.permute.xlu0 %1336
    %1338 = vrot.lane.b32.xlu0 %v1259, 96
    %v1339 = vpop.permute.xlu0 %1338
    %v1343 = vsel %vm140, %v1333, 0
    %1345 = vmatprep.subr.bf16.mxu0 0
    %1346 = vmatpush1.bf16.msra.mxu0 %v1337
    %1347 = vmatprep.subr.bf16.mxu0 0
    %1348 = vmatpush1.bf16.msra.mxu0 %v1339
    %1349 = vmatprep.subr.bf16.mxu0 0
    %1350 = vmatpush1.bf16.msra.mxu0 0
    %1351 = vmatprep.subr.bf16.mxu0 0
    %1352 = vmatpush1.bf16.msra.mxu0 0
    %1353 = vmatprep.subr.bf16.mxu0 0
    %1354 = vmatpush1.bf16.msra.mxu0 0
    %1355 = vmatprep.subr.bf16.mxu0 0
    %1356 = vmatpush1.bf16.msra.mxu0 0
    %1357 = vmatprep.subr.bf16.mxu0 0
    %1358 = vmatpush1.bf16.msra.mxu0 0
    %1359 = vmatprep.subr.bf16.mxu0 0
    %1360 = vmatpush1.bf16.msra.mxu0 0
    %1361 = vmatprep.subr.bf16.mxu0 0
    %1362 = vmatpush1.bf16.msra.mxu0 0
    %1363 = vmatprep.subr.bf16.mxu0 0
    %1364 = vmatpush1.bf16.msra.mxu0 0
    %1365 = vmatprep.subr.bf16.mxu0 0
    %1366 = vmatpush1.bf16.msra.mxu0 0
    %1367 = vmatprep.subr.bf16.mxu0 0
    %1368 = vmatpush1.bf16.msra.mxu0 0
    %1369 = vmatprep.subr.bf16.mxu0 0
    %1370 = vmatpush1.bf16.msra.mxu0 0
    %1371 = vmatprep.subr.bf16.mxu0 0
    %1372 = vmatpush1.bf16.msra.mxu0 0
    %1373 = vmatprep.subr.bf16.mxu0 0
    %1374 = vmatpush1.bf16.msra.mxu0 0
    %1375 = vmatprep.subr.bf16.mxu0 0
    %1376 = vmatpush1.bf16.msra.mxu0 0
    %1377 = vmatprep.mubr.bf16.mxu0 0
    %1378 = vmatmul.mubr.bf16.gmra.mrb[0].mxu0 %v1343
    %v1379 = vpop.f32.mrb[0].mxu0
    %v1380 = vadd.f32 0.0, %v1379
    %v1381 = vpop.f32.mrb[0].mxu0
    %v1382 = vpop.f32.mrb[0].mxu0
    %v1383 = vadd.f32 0.0, %v1382
    %v1384 = vpop.f32.mrb[0].mxu0
    %1385 = vdwg.mxu0
    %v1387 = vsel %vm140, %v1257, 0
    %1389 = vmatprep.subr.bf16.mxu0 0
    %1390 = vmatpush1.bf16.msra.mxu0 %v1258
    %1391 = vmatprep.subr.bf16.mxu0 0
    %1392 = vmatpush1.bf16.msra.mxu0 %v1259
    %1393 = vmatprep.subr.bf16.mxu0 0
    %1394 = vmatpush1.bf16.msra.mxu0 0
    %1395 = vmatprep.subr.bf16.mxu0 0
    %1396 = vmatpush1.bf16.msra.mxu0 0
    %1397 = vmatprep.subr.bf16.mxu0 0
    %1398 = vmatpush1.bf16.msra.mxu0 0
    %1399 = vmatprep.subr.bf16.mxu0 0
    %1400 = vmatpush1.bf16.msra.mxu0 0
    %1401 = vmatprep.subr.bf16.mxu0 0
    %1402 = vmatpush1.bf16.msra.mxu0 0
    %1403 = vmatprep.subr.bf16.mxu0 0
    %1404 = vmatpush1.bf16.msra.mxu0 0
    %1405 = vmatprep.subr.bf16.mxu0 0
    %1406 = vmatpush1.bf16.msra.mxu0 0
    %1407 = vmatprep.subr.bf16.mxu0 0
    %1408 = vmatpush1.bf16.msra.mxu0 0
    %1409 = vmatprep.subr.bf16.mxu0 0
    %1410 = vmatpush1.bf16.msra.mxu0 0
    %1411 = vmatprep.subr.bf16.mxu0 0
    %1412 = vmatpush1.bf16.msra.mxu0 0
    %1413 = vmatprep.subr.bf16.mxu0 0
    %1414 = vmatpush1.bf16.msra.mxu0 0
    %1415 = vmatprep.subr.bf16.mxu0 0
    %1416 = vmatpush1.bf16.msra.mxu0 0
    %1417 = vmatprep.subr.bf16.mxu0 0
    %1418 = vmatpush1.bf16.msra.mxu0 0
    %1419 = vmatprep.subr.bf16.mxu0 0
    %1420 = vmatpush1.bf16.msra.mxu0 0
    %1421 = vmatprep.mubr.bf16.mxu0 0
    %1422 = vmatmul.mubr.bf16.gmra.mrb[0].mxu0 %v1387
    %v1423 = vpop.f32.mrb[0].mxu0
    %v1424 = vadd.f32 %v1380, %v1423
    %v1425 = vpop.f32.mrb[0].mxu0
    %v1426 = vpop.f32.mrb[0].mxu0
    %v1427 = vadd.f32 %v1383, %v1426
    %v1428 = vpop.f32.mrb[0].mxu0
    %1429 = vdwg.mxu0
    %v1430 = vpack.c.bf16 %v214, %v214
    %1431 = vrot.lane.b32.xlu0 %v1186, 112
    %v1432 = vpop.permute.xlu0 %1431
    %v1434 = vsel %vm586, %v1432, 0
    %v1437 = vsel %vm590, %v1430, 0
    %1439 = vmatprep.subr.bf16.mxu0 0
    %1440 = vmatpush1.bf16.msra.mxu0 %v1437
    %1441 = vmatprep.subr.bf16.mxu0 0
    %1442 = vmatpush1.bf16.msra.mxu0 0
    %1443 = vmatprep.subr.bf16.mxu0 0
    %1444 = vmatpush1.bf16.msra.mxu0 0
    %1445 = vmatprep.subr.bf16.mxu0 0
    %1446 = vmatpush1.bf16.msra.mxu0 0
    %1447 = vmatprep.subr.bf16.mxu0 0
    %1448 = vmatpush1.bf16.msra.mxu0 0
    %1449 = vmatprep.subr.bf16.mxu0 0
    %1450 = vmatpush1.bf16.msra.mxu0 0
    %1451 = vmatprep.subr.bf16.mxu0 0
    %1452 = vmatpush1.bf16.msra.mxu0 0
    %1453 = vmatprep.subr.bf16.mxu0 0
    %1454 = vmatpush1.bf16.msra.mxu0 0
    %1455 = vmatprep.subr.bf16.mxu0 0
    %1456 = vmatpush1.bf16.msra.mxu0 0
    %1457 = vmatprep.subr.bf16.mxu0 0
    %1458 = vmatpush1.bf16.msra.mxu0 0
    %1459 = vmatprep.subr.bf16.mxu0 0
    %1460 = vmatpush1.bf16.msra.mxu0 0
    %1461 = vmatprep.subr.bf16.mxu0 0
    %1462 = vmatpush1.bf16.msra.mxu0 0
    %1463 = vmatprep.subr.bf16.mxu0 0
    %1464 = vmatpush1.bf16.msra.mxu0 0
    %1465 = vmatprep.subr.bf16.mxu0 0
    %1466 = vmatpush1.bf16.msra.mxu0 0
    %1467 = vmatprep.subr.bf16.mxu0 0
    %1468 = vmatpush1.bf16.msra.mxu0 0
    %1469 = vmatprep.subr.bf16.mxu0 0
    %1470 = vmatpush1.bf16.msra.mxu0 0
    %1471 = vmatprep.mubr.bf16.mxu0 0
    %1472 = vmatmul.mubr.bf16.gmra.mrb[0].mxu0 %v1434
    %v1473 = vpop.f32.mrb[0].mxu0
    %v1474 = vadd.f32 %v117, %v1473
    %v1475 = vpop.f32.mrb[0].mxu0
    %v1476 = vpop.f32.mrb[0].mxu0
    %v1477 = vadd.f32 %v118, %v1476
    %v1478 = vpop.f32.mrb[0].mxu0
    %1479 = vdwg.mxu0
    %v1480 = vsel %vm140, %v1474, -inf
    %1481 = vmax.xlane.f32.xlu0 %v1480
    %v1482 = vpop.xlane.xlu0 %1481
    %v1483 = vsel %vm140, %v1477, -inf
    %1484 = vmax.xlane.f32.xlu0 %v1483
    %v1485 = vpop.xlane.xlu0 %1484
    %v1486 = vsub.f32 %v1474, %v1482
    %v1487 = vsub.f32 %v1477, %v1485
    %v1488 = vmul.f32 %v1486, 1.442695
    %v1489 = vpow.pop %v1488
    %v1490 = vmul.f32 %v1487, 1.442695
    %v1491 = vpow.pop %v1490
    %v1492 = vsel %vm140, %v1489, 0.0
    %1493 = vadd.xlane.f32.xlu0 %v1492
    %v1494 = vpop.xlane.xlu0 %1493
    %v1495 = vsel %vm140, %v1491, 0.0
    %1496 = vadd.xlane.f32.xlu0 %v1495
    %v1497 = vpop.xlane.xlu0 %1496
    %v1498 = vrcp.pop %v1494
    %v1499 = vrcp.pop %v1497
    %v1500 = vmul.f32 %v1489, %v1498
    %v1501 = vmul.f32 %v1491, %v1499
    %v1502 = vpack.c.bf16 %v1501, %v1500
    %1503 = vrot.lane.b32.xlu0 %v1258, 64
    %v1504 = vpop.permute.xlu0 %1503
    %1505 = vrot.lane.b32.xlu0 %v1259, 64
    %v1506 = vpop.permute.xlu0 %1505
    %v1510 = vsel %vm140, %v1502, 0
    %1512 = vmatprep.subr.bf16.mxu0 0
    %1513 = vmatpush1.bf16.msra.mxu0 %v1504
    %1514 = vmatprep.subr.bf16.mxu0 0
    %1515 = vmatpush1.bf16.msra.mxu0 %v1506
    %1516 = vmatprep.subr.bf16.mxu0 0
    %1517 = vmatpush1.bf16.msra.mxu0 0
    %1518 = vmatprep.subr.bf16.mxu0 0
    %1519 = vmatpush1.bf16.msra.mxu0 0
    %1520 = vmatprep.subr.bf16.mxu0 0
    %1521 = vmatpush1.bf16.msra.mxu0 0
    %1522 = vmatprep.subr.bf16.mxu0 0
    %1523 = vmatpush1.bf16.msra.mxu0 0
    %1524 = vmatprep.subr.bf16.mxu0 0
    %1525 = vmatpush1.bf16.msra.mxu0 0
    %1526 = vmatprep.subr.bf16.mxu0 0
    %1527 = vmatpush1.bf16.msra.mxu0 0
    %1528 = vmatprep.subr.bf16.mxu0 0
    %1529 = vmatpush1.bf16.msra.mxu0 0
    %1530 = vmatprep.subr.bf16.mxu0 0
    %1531 = vmatpush1.bf16.msra.mxu0 0
    %1532 = vmatprep.subr.bf16.mxu0 0
    %1533 = vmatpush1.bf16.msra.mxu0 0
    %1534 = vmatprep.subr.bf16.mxu0 0
    %1535 = vmatpush1.bf16.msra.mxu0 0
    %1536 = vmatprep.subr.bf16.mxu0 0
    %1537 = vmatpush1.bf16.msra.mxu0 0
    %1538 = vmatprep.subr.bf16.mxu0 0
    %1539 = vmatpush1.bf16.msra.mxu0 0
    %1540 = vmatprep.subr.bf16.mxu0 0
    %1541 = vmatpush1.bf16.msra.mxu0 0
    %1542 = vmatprep.subr.bf16.mxu0 0
    %1543 = vmatpush1.bf16.msra.mxu0 0
    %1544 = vmatprep.mubr.bf16.mxu0 0
    %1545 = vmatmul.mubr.bf16.gmra.mrb[0].mxu0 %v1510
    %v1546 = vpop.f32.mrb[0].mxu0
    %v1547 = vadd.f32 0.0, %v1546
    %v1548 = vpop.f32.mrb[0].mxu0
    %v1549 = vpop.f32.mrb[0].mxu0
    %v1550 = vadd.f32 0.0, %v1549
    %v1551 = vpop.f32.mrb[0].mxu0
    %1552 = vdwg.mxu0
    %v1553 = vadd.f32 %v1424, %v1547
    %v1554 = vadd.f32 %v1427, %v1550
    %v1555 = vpack.c.bf16 %v215, %v215
    %1556 = vrot.lane.b32.xlu0 %v1186, 104
    %v1557 = vpop.permute.xlu0 %1556
    %v1559 = vsel %vm586, %v1557, 0
    %v1562 = vsel %vm590, %v1555, 0
    %1564 = vmatprep.subr.bf16.mxu0 0
    %1565 = vmatpush1.bf16.msra.mxu0 %v1562
    %1566 = vmatprep.subr.bf16.mxu0 0
    %1567 = vmatpush1.bf16.msra.mxu0 0
    %1568 = vmatprep.subr.bf16.mxu0 0
    %1569 = vmatpush1.bf16.msra.mxu0 0
    %1570 = vmatprep.subr.bf16.mxu0 0
    %1571 = vmatpush1.bf16.msra.mxu0 0
    %1572 = vmatprep.subr.bf16.mxu0 0
    %1573 = vmatpush1.bf16.msra.mxu0 0
    %1574 = vmatprep.subr.bf16.mxu0 0
    %1575 = vmatpush1.bf16.msra.mxu0 0
    %1576 = vmatprep.subr.bf16.mxu0 0
    %1577 = vmatpush1.bf16.msra.mxu0 0
    %1578 = vmatprep.subr.bf16.mxu0 0
    %1579 = vmatpush1.bf16.msra.mxu0 0
    %1580 = vmatprep.subr.bf16.mxu0 0
    %1581 = vmatpush1.bf16.msra.mxu0 0
    %1582 = vmatprep.subr.bf16.mxu0 0
    %1583 = vmatpush1.bf16.msra.mxu0 0
    %1584 = vmatprep.subr.bf16.mxu0 0
    %1585 = vmatpush1.bf16.msra.mxu0 0
    %1586 = vmatprep.subr.bf16.mxu0 0
    %1587 = vmatpush1.bf16.msra.mxu0 0
    %1588 = vmatprep.subr.bf16.mxu0 0
    %1589 = vmatpush1.bf16.msra.mxu0 0
    %1590 = vmatprep.subr.bf16.mxu0 0
    %1591 = vmatpush1.bf16.msra.mxu0 0
    %1592 = vmatprep.subr.bf16.mxu0 0
    %1593 = vmatpush1.bf16.msra.mxu0 0
    %1594 = vmatprep.subr.bf16.mxu0 0
    %1595 = vmatpush1.bf16.msra.mxu0 0
    %1596 = vmatprep.mubr.bf16.mxu0 0
    %1597 = vmatmul.mubr.bf16.gmra.mrb[0].mxu0 %v1559
    %v1598 = vpop.f32.mrb[0].mxu0
    %v1599 = vadd.f32 %v117, %v1598
    %v1600 = vpop.f32.mrb[0].mxu0
    %v1601 = vpop.f32.mrb[0].mxu0
    %v1602 = vadd.f32 %v118, %v1601
    %v1603 = vpop.f32.mrb[0].mxu0
    %1604 = vdwg.mxu0
    %v1605 = vsel %vm140, %v1599, -inf
    %1606 = vmax.xlane.f32.xlu0 %v1605
    %v1607 = vpop.xlane.xlu0 %1606
    %v1608 = vsel %vm140, %v1602, -inf
    %1609 = vmax.xlane.f32.xlu0 %v1608
    %v1610 = vpop.xlane.xlu0 %1609
    %v1611 = vsub.f32 %v1599, %v1607
    %v1612 = vsub.f32 %v1602, %v1610
    %v1613 = vmul.f32 %v1611, 1.442695
    %v1614 = vpow.pop %v1613
    %v1615 = vmul.f32 %v1612, 1.442695
    %v1616 = vpow.pop %v1615
    %v1617 = vsel %vm140, %v1614, 0.0
    %1618 = vadd.xlane.f32.xlu0 %v1617
    %v1619 = vpop.xlane.xlu0 %1618
    %v1620 = vsel %vm140, %v1616, 0.0
    %1621 = vadd.xlane.f32.xlu0 %v1620
    %v1622 = vpop.xlane.xlu0 %1621
    %v1623 = vrcp.pop %v1619
    %v1624 = vrcp.pop %v1622
    %v1625 = vmul.f32 %v1614, %v1623
    %v1626 = vmul.f32 %v1616, %v1624
    %v1627 = vpack.c.bf16 %v1626, %v1625
    %1628 = vrot.lane.b32.xlu0 %v1258, 32
    %v1629 = vpop.permute.xlu0 %1628
    %1630 = vrot.lane.b32.xlu0 %v1259, 32
    %v1631 = vpop.permute.xlu0 %1630
    %v1635 = vsel %vm140, %v1627, 0
    %1637 = vmatprep.subr.bf16.mxu0 0
    %1638 = vmatpush1.bf16.msra.mxu0 %v1629
    %1639 = vmatprep.subr.bf16.mxu0 0
    %1640 = vmatpush1.bf16.msra.mxu0 %v1631
    %1641 = vmatprep.subr.bf16.mxu0 0
    %1642 = vmatpush1.bf16.msra.mxu0 0
    %1643 = vmatprep.subr.bf16.mxu0 0
    %1644 = vmatpush1.bf16.msra.mxu0 0
    %1645 = vmatprep.subr.bf16.mxu0 0
    %1646 = vmatpush1.bf16.msra.mxu0 0
    %1647 = vmatprep.subr.bf16.mxu0 0
    %1648 = vmatpush1.bf16.msra.mxu0 0
    %1649 = vmatprep.subr.bf16.mxu0 0
    %1650 = vmatpush1.bf16.msra.mxu0 0
    %1651 = vmatprep.subr.bf16.mxu0 0
    %1652 = vmatpush1.bf16.msra.mxu0 0
    %1653 = vmatprep.subr.bf16.mxu0 0
    %1654 = vmatpush1.bf16.msra.mxu0 0
    %1655 = vmatprep.subr.bf16.mxu0 0
    %1656 = vmatpush1.bf16.msra.mxu0 0
    %1657 = vmatprep.subr.bf16.mxu0 0
    %1658 = vmatpush1.bf16.msra.mxu0 0
    %1659 = vmatprep.subr.bf16.mxu0 0
    %1660 = vmatpush1.bf16.msra.mxu0 0
    %1661 = vmatprep.subr.bf16.mxu0 0
    %1662 = vmatpush1.bf16.msra.mxu0 0
    %1663 = vmatprep.subr.bf16.mxu0 0
    %1664 = vmatpush1.bf16.msra.mxu0 0
    %1665 = vmatprep.subr.bf16.mxu0 0
    %1666 = vmatpush1.bf16.msra.mxu0 0
    %1667 = vmatprep.subr.bf16.mxu0 0
    %1668 = vmatpush1.bf16.msra.mxu0 0
    %1669 = vmatprep.mubr.bf16.mxu0 0
    %1670 = vmatmul.mubr.bf16.gmra.mrb[0].mxu0 %v1635
    %v1671 = vpop.f32.mrb[0].mxu0
    %v1672 = vadd.f32 0.0, %v1671
    %v1673 = vpop.f32.mrb[0].mxu0
    %v1674 = vpop.f32.mrb[0].mxu0
    %v1675 = vadd.f32 0.0, %v1674
    %v1676 = vpop.f32.mrb[0].mxu0
    %1677 = vdwg.mxu0
    %v1678 = vadd.f32 %v1553, %v1672
    %v1679 = vadd.f32 %v1554, %v1675
    %v1680 = vld [vmem:[#allocation11 + $0x40] sm:$0x1]
    %v1681 = vlaneseq
    %v1682 = vshrl.u32 %v1681, 7
    %v1683 = vsub.s32 0, %v1682
    %v1684 = vrot.slane %v1680, %v1683
    %v1685 = vadd.f32 %v1678, %v1684
    %v1686 = vadd.f32 %v1679, %v1684
    %v1687 = vadd.f32 %v1118, %v1685
    %v1688 = vadd.f32 %v1119, %v1686
    %v1689 = vld [vmem:[#allocation11 + $0x48] sm:$0x1]
    %v1690 = vld [vmem:[#allocation11 + $0x50] sm:$0x1]
    %v1691 = vsel %vm140, %v1687, 0.0
    %1692 = vadd.xlane.f32.xlu0 %v1691
    %v1693 = vpop.xlane.xlu0 %1692
    %v1694 = vsel %vm140, %v1688, 0.0
    %1695 = vadd.xlane.f32.xlu0 %v1694
    %v1696 = vpop.xlane.xlu0 %1695
    %v1697 = vmul.f32 %v1693, %v1087
    %v1698 = vmul.f32 %v1696, %v1087
    %v1699 = vsub.f32 %v1687, %v1697
    %v1700 = vsub.f32 %v1688, %v1698
    %v1701 = vmul.f32 %v1699, %v1699
    %v1702 = vmul.f32 %v1700, %v1700
    %v1703 = vsel %vm140, %v1701, 0.0
    %1704 = vadd.xlane.f32.xlu0 %v1703
    %v1705 = vpop.xlane.xlu0 %1704
    %v1706 = vsel %vm140, %v1702, 0.0
    %1707 = vadd.xlane.f32.xlu0 %v1706
    %v1708 = vpop.xlane.xlu0 %1707
    %v1709 = vmul.f32 %v1705, %v1087
    %v1710 = vmul.f32 %v1708, %v1087
    %v1711 = vadd.f32 %v1709, 1e-05
    %v1712 = vadd.f32 %v1710, 1e-05
    %v1713 = vrsqrt.pop %v1711
    %v1714 = vrsqrt.pop %v1712
    %v1715 = vmul.f32 %v1699, %v1713
    %v1716 = vmul.f32 %v1700, %v1714
    %v1717 = vlaneseq
    %v1718 = vshrl.u32 %v1717, 7
    %v1719 = vsub.s32 0, %v1718
    %v1720 = vrot.slane %v1689, %v1719
    %v1721 = vmul.f32 %v1715, %v1720
    %v1722 = vmul.f32 %v1716, %v1720
    %v1723 = vlaneseq
    %v1724 = vshrl.u32 %v1723, 7
    %v1725 = vsub.s32 0, %v1724
    %v1726 = vrot.slane %v1690, %v1725
    %v1727 = vadd.f32 %v1721, %v1726
    %v1728 = vadd.f32 %v1722, %v1726
    %v1729 = vpack.c.bf16 %v1728, %v1727
    %v1730 = vld [vmem:[#allocation10 + $0x50] sm:$0xf]
    %v1731 = vld [vmem:[#allocation10 + $0x54] sm:$0xf]
    %v1732 = vld [vmem:[#allocation10 + $0x58] sm:$0xf]
    %v1733 = vld [vmem:[#allocation10 + $0x5c] sm:$0xf]
    %v1734 = vld [vmem:[#allocation11 + $0x58] sm:$0x1]
    %v1735 = vlaneseq
    %v1736 = vshrl.u32 %v1735, 7
    %v1737 = vsub.s32 0, %v1736
    %v1738 = vrot.slane %v1734, %v1737
    %v1743 = vunpack.c.l.b16 %v1730
    %v1744 = vunpack.c.l.b16 %v1731
    %v1745 = vunpack.c.l.b16 %v1732
    %v1746 = vunpack.c.l.b16 %v1733
    %v1747 = vpack.c.b16 %v1744, %v1743
    %v1748 = vpack.c.b16 %v1746, %v1745
    %v1752 = vsel %vm140, %v1729, 0
    %1754 = vmatprep.subr.bf16.mxu0 0
    %1755 = vmatpush1.bf16.msra.mxu0 %v1747
    %1756 = vmatprep.subr.bf16.mxu0 0
    %1757 = vmatpush1.bf16.msra.mxu0 %v1748
    %1758 = vmatprep.subr.bf16.mxu0 0
    %1759 = vmatpush1.bf16.msra.mxu0 0
    %1760 = vmatprep.subr.bf16.mxu0 0
    %1761 = vmatpush1.bf16.msra.mxu0 0
    %1762 = vmatprep.subr.bf16.mxu0 0
    %1763 = vmatpush1.bf16.msra.mxu0 0
    %1764 = vmatprep.subr.bf16.mxu0 0
    %1765 = vmatpush1.bf16.msra.mxu0 0
    %1766 = vmatprep.subr.bf16.mxu0 0
    %1767 = vmatpush1.bf16.msra.mxu0 0
    %1768 = vmatprep.subr.bf16.mxu0 0
    %1769 = vmatpush1.bf16.msra.mxu0 0
    %1770 = vmatprep.subr.bf16.mxu0 0
    %1771 = vmatpush1.bf16.msra.mxu0 0
    %1772 = vmatprep.subr.bf16.mxu0 0
    %1773 = vmatpush1.bf16.msra.mxu0 0
    %1774 = vmatprep.subr.bf16.mxu0 0
    %1775 = vmatpush1.bf16.msra.mxu0 0
    %1776 = vmatprep.subr.bf16.mxu0 0
    %1777 = vmatpush1.bf16.msra.mxu0 0
    %1778 = vmatprep.subr.bf16.mxu0 0
    %1779 = vmatpush1.bf16.msra.mxu0 0
    %1780 = vmatprep.subr.bf16.mxu0 0
    %1781 = vmatpush1.bf16.msra.mxu0 0
    %1782 = vmatprep.subr.bf16.mxu0 0
    %1783 = vmatpush1.bf16.msra.mxu0 0
    %1784 = vmatprep.subr.bf16.mxu0 0
    %1785 = vmatpush1.bf16.msra.mxu0 0
    %1786 = vmatprep.mubr.bf16.mxu0 0
    %1787 = vmatmul.mubr.bf16.gmra.mrb[0].mxu0 %v1752
    %v1788 = vpop.f32.mrb[0].mxu0
    %v1789 = vadd.f32 %v1738, %v1788
    %v1790 = vpop.f32.mrb[0].mxu0
    %v1791 = vpop.f32.mrb[0].mxu0
    %v1792 = vadd.f32 %v1738, %v1791
    %v1793 = vpop.f32.mrb[0].mxu0
    %1794 = vdwg.mxu0
    %v1795 = vmul.f32 %v1789, %v1789
    %v1796 = vmul.f32 %v1792, %v1792
    %v1797 = vmul.f32 %v1789, %v1795
    %v1798 = vmul.f32 %v1792, %v1796
    %v1799 = vmul.f32 %v1797, 0.044715
    %v1800 = vmul.f32 %v1798, 0.044715
    %v1801 = vadd.f32 %v1789, %v1799
    %v1802 = vadd.f32 %v1792, %v1800
    %v1803 = vmul.f32 %v1801, 0.7978846
    %v1804 = vmul.f32 %v1802, 0.7978846
    %v1805 = vtanh.pop %v1803
    %v1806 = vtanh.pop %v1804
    %v1807 = vadd.f32 %v1805, 1.0
    %v1808 = vadd.f32 %v1806, 1.0
    %v1809 = vmul.f32 %v1807, 0.5
    %v1810 = vmul.f32 %v1808, 0.5
    %v1811 = vmul.f32 %v1789, %v1809
    %v1812 = vmul.f32 %v1792, %v1810
    %v1813 = vpack.c.bf16 %v1812, %v1811
    %v1814 = vld [vmem:[#allocation10 + $0x60] sm:$0xf]
    %v1815 = vld [vmem:[#allocation10 + $0x64] sm:$0xf]
    %v1816 = vld [vmem:[#allocation10 + $0x68] sm:$0xf]
    %v1817 = vld [vmem:[#allocation10 + $0x6c] sm:$0xf]
    %v1818 = vld [vmem:[#allocation10 + $0x70] sm:$0xf]
    %v1819 = vld [vmem:[#allocation10 + $0x74] sm:$0xf]
    %v1820 = vld [vmem:[#allocation10 + $0x78] sm:$0xf]
    %v1821 = vld [vmem:[#allocation10 + $0x7c] sm:$0xf]
    %v1822 = vld [vmem:[#allocation11 + $0x60] sm:$0x1]
    %v1823 = vlaneseq
    %v1824 = vshrl.u32 %v1823, 7
    %v1825 = vsub.s32 0, %v1824
    %v1826 = vrot.slane %v1822, %v1825
    %v1835 = vunpack.c.l.b16 %v1814
    %v1836 = vunpack.c.l.b16 %v1815
    %v1837 = vunpack.c.l.b16 %v1816
    %v1838 = vunpack.c.l.b16 %v1817
    %v1839 = vunpack.c.l.b16 %v1818
    %v1840 = vunpack.c.l.b16 %v1819
    %v1841 = vunpack.c.l.b16 %v1820
    %v1842 = vunpack.c.l.b16 %v1821
    %v1843 = vpack.c.b16 %v1836, %v1835
    %v1844 = vpack.c.b16 %v1838, %v1837
    %v1845 = vpack.c.b16 %v1840, %v1839
    %v1846 = vpack.c.b16 %v1842, %v1841
    %vm1851 = vcmask 523264
    %v1853 = vsel %vm1851, %v1813, 0
    %1855 = vmatprep.subr.bf16.mxu0 0
    %1856 = vmatpush1.bf16.msra.mxu0 %v1843
    %1857 = vmatprep.subr.bf16.mxu0 0
    %1858 = vmatpush1.bf16.msra.mxu0 %v1844
    %1859 = vmatprep.subr.bf16.mxu0 0
    %1860 = vmatpush1.bf16.msra.mxu0 %v1845
    %1861 = vmatprep.subr.bf16.mxu0 0
    %1862 = vmatpush1.bf16.msra.mxu0 %v1846
    %1863 = vmatprep.subr.bf16.mxu0 0
    %1864 = vmatpush1.bf16.msra.mxu0 0
    %1865 = vmatprep.subr.bf16.mxu0 0
    %1866 = vmatpush1.bf16.msra.mxu0 0
    %1867 = vmatprep.subr.bf16.mxu0 0
    %1868 = vmatpush1.bf16.msra.mxu0 0
    %1869 = vmatprep.subr.bf16.mxu0 0
    %1870 = vmatpush1.bf16.msra.mxu0 0
    %1871 = vmatprep.subr.bf16.mxu0 0
    %1872 = vmatpush1.bf16.msra.mxu0 0
    %1873 = vmatprep.subr.bf16.mxu0 0
    %1874 = vmatpush1.bf16.msra.mxu0 0
    %1875 = vmatprep.subr.bf16.mxu0 0
    %1876 = vmatpush1.bf16.msra.mxu0 0
    %1877 = vmatprep.subr.bf16.mxu0 0
    %1878 = vmatpush1.bf16.msra.mxu0 0
    %1879 = vmatprep.subr.bf16.mxu0 0
    %1880 = vmatpush1.bf16.msra.mxu0 0
    %1881 = vmatprep.subr.bf16.mxu0 0
    %1882 = vmatpush1.bf16.msra.mxu0 0
    %1883 = vmatprep.subr.bf16.mxu0 0
    %1884 = vmatpush1.bf16.msra.mxu0 0
    %1885 = vmatprep.subr.bf16.mxu0 0
    %1886 = vmatpush1.bf16.msra.mxu0 0
    %1887 = vmatprep.mubr.bf16.mxu0 0
    %1888 = vmatmul.mubr.bf16.gmra.mrb[0].mxu0 %v1853
    %v1889 = vpop.f32.mrb[0].mxu0
    %v1890 = vadd.f32 %v1826, %v1889
    %v1891 = vpop.f32.mrb[0].mxu0
    %v1892 = vpop.f32.mrb[0].mxu0
    %v1893 = vadd.f32 %v1826, %v1892
    %v1894 = vpop.f32.mrb[0].mxu0
    %1895 = vdwg.mxu0
    %v1896 = vadd.f32 %v1727, %v1890
    %v1897 = vadd.f32 %v1728, %v1893
    %v1898 = vld [vmem:[#allocation11 + $0x68] sm:$0x1]
    %v1899 = vld [vmem:[#allocation11 + $0x70] sm:$0x1]
    %v1900 = vsel %vm140, %v1896, 0.0
    %1901 = vadd.xlane.f32.xlu0 %v1900
    %v1902 = vpop.xlane.xlu0 %1901
    %v1903 = vsel %vm140, %v1897, 0.0
    %1904 = vadd.xlane.f32.xlu0 %v1903
    %v1905 = vpop.xlane.xlu0 %1904
    %v1906 = vmul.f32 %v1902, %v1087
    %v1907 = vmul.f32 %v1905, %v1087
    %v1908 = vsub.f32 %v1896, %v1906
    %v1909 = vsub.f32 %v1897, %v1907
    %v1910 = vmul.f32 %v1908, %v1908
    %v1911 = vmul.f32 %v1909, %v1909
    %v1912 = vsel %vm140, %v1910, 0.0
    %1913 = vadd.xlane.f32.xlu0 %v1912
    %v1914 = vpop.xlane.xlu0 %1913
    %v1915 = vsel %vm140, %v1911, 0.0
    %1916 = vadd.xlane.f32.xlu0 %v1915
    %v1917 = vpop.xlane.xlu0 %1916
    %v1918 = vmul.f32 %v1914, %v1087
    %v1919 = vmul.f32 %v1917, %v1087
    %v1920 = vadd.f32 %v1918, 1e-05
    %v1921 = vadd.f32 %v1919, 1e-05
    %v1922 = vrsqrt.pop %v1920
    %v1923 = vrsqrt.pop %v1921
    %v1924 = vmul.f32 %v1908, %v1922
    %v1925 = vmul.f32 %v1909, %v1923
    %v1926 = vlaneseq
    %v1927 = vshrl.u32 %v1926, 7
    %v1928 = vsub.s32 0, %v1927
    %v1929 = vrot.slane %v1898, %v1928
    %v1930 = vmul.f32 %v1924, %v1929
    %v1931 = vmul.f32 %v1925, %v1929
    %v1932 = vlaneseq
    %v1933 = vshrl.u32 %v1932, 7
    %v1934 = vsub.s32 0, %v1933
    %v1935 = vrot.slane %v1899, %v1934
    %v1936 = vadd.f32 %v1930, %v1935
    %v1937 = vadd.f32 %v1931, %v1935
    %1938 = vst.msk [vmem:[#allocation13] sm:$0xff] %vm140, %v1936
    %1939 = vst.msk [vmem:[#allocation13 + $0x8] sm:$0xff] %vm140, %v1937
    %v1940 = vpack.c.bf16 %v1937, %v1936
    %v1941 = vld [vmem:[#allocation10 + $0x80] sm:$0xf]
    %v1942 = vld [vmem:[#allocation10 + $0x84] sm:$0xf]
    %v1943 = vld [vmem:[#allocation10 + $0x88] sm:$0xf]
    %v1944 = vld [vmem:[#allocation10 + $0x8c] sm:$0xf]
    %v1945 = vld [vmem:[#allocation11 + $0x78] sm:$0x1]
    %v1946 = vlaneseq
    %v1947 = vshrl.u32 %v1946, 7
    %v1948 = vsub.s32 0, %v1947
    %v1949 = vrot.slane %v1945, %v1948
    %v1954 = vunpack.c.l.b16 %v1941
    %v1955 = vunpack.c.l.b16 %v1942
    %v1956 = vunpack.c.l.b16 %v1943
    %v1957 = vunpack.c.l.b16 %v1944
    %v1958 = vpack.c.b16 %v1955, %v1954
    %v1959 = vpack.c.b16 %v1957, %v1956
    %v1963 = vsel %vm140, %v1940, 0
    %1965 = vmatprep.subr.bf16.mxu0 0
    %1966 = vmatpush1.bf16.msra.mxu0 %v1958
    %1967 = vmatprep.subr.bf16.mxu0 0
    %1968 = vmatpush1.bf16.msra.mxu0 %v1959
    %1969 = vmatprep.subr.bf16.mxu0 0
    %1970 = vmatpush1.bf16.msra.mxu0 0
    %1971 = vmatprep.subr.bf16.mxu0 0
    %1972 = vmatpush1.bf16.msra.mxu0 0
    %1973 = vmatprep.subr.bf16.mxu0 0
    %1974 = vmatpush1.bf16.msra.mxu0 0
    %1975 = vmatprep.subr.bf16.mxu0 0
    %1976 = vmatpush1.bf16.msra.mxu0 0
    %1977 = vmatprep.subr.bf16.mxu0 0
    %1978 = vmatpush1.bf16.msra.mxu0 0
    %1979 = vmatprep.subr.bf16.mxu0 0
    %1980 = vmatpush1.bf16.msra.mxu0 0
    %1981 = vmatprep.subr.bf16.mxu0 0
    %1982 = vmatpush1.bf16.msra.mxu0 0
    %1983 = vmatprep.subr.bf16.mxu0 0
    %1984 = vmatpush1.bf16.msra.mxu0 0
    %1985 = vmatprep.subr.bf16.mxu0 0
    %1986 = vmatpush1.bf16.msra.mxu0 0
    %1987 = vmatprep.subr.bf16.mxu0 0
    %1988 = vmatpush1.bf16.msra.mxu0 0
    %1989 = vmatprep.subr.bf16.mxu0 0
    %1990 = vmatpush1.bf16.msra.mxu0 0
    %1991 = vmatprep.subr.bf16.mxu0 0
    %1992 = vmatpush1.bf16.msra.mxu0 0
    %1993 = vmatprep.subr.bf16.mxu0 0
    %1994 = vmatpush1.bf16.msra.mxu0 0
    %1995 = vmatprep.subr.bf16.mxu0 0
    %1996 = vmatpush1.bf16.msra.mxu0 0
    %1997 = vmatprep.mubr.bf16.mxu0 0
    %1998 = vmatmul.mubr.bf16.gmra.mrb[0].mxu0 %v1963
    %v1999 = vpop.f32.mrb[0].mxu0
    %v2000 = vadd.f32 %v1949, %v1999
    %v2001 = vpop.f32.mrb[0].mxu0
    %v2002 = vpop.f32.mrb[0].mxu0
    %v2003 = vadd.f32 %v1949, %v2002
    %v2004 = vpop.f32.mrb[0].mxu0
    %2005 = vdwg.mxu0
    %v2006 = vld [vmem:[#allocation10 + $0x90] sm:$0xf]
    %v2007 = vld [vmem:[#allocation10 + $0x94] sm:$0xf]
    %v2008 = vld [vmem:[#allocation10 + $0x98] sm:$0xf]
    %v2009 = vld [vmem:[#allocation10 + $0x9c] sm:$0xf]
    %v2010 = vld [vmem:[#allocation11 + $0x80] sm:$0x1]
    %v2011 = vlaneseq
    %v2012 = vshrl.u32 %v2011, 7
    %v2013 = vsub.s32 0, %v2012
    %v2014 = vrot.slane %v2010, %v2013
    %v2019 = vunpack.c.l.b16 %v2006
    %v2020 = vunpack.c.l.b16 %v2007
    %v2021 = vunpack.c.l.b16 %v2008
    %v2022 = vunpack.c.l.b16 %v2009
    %v2023 = vpack.c.b16 %v2020, %v2019
    %v2024 = vpack.c.b16 %v2022, %v2021
    %2027 = vmatprep.subr.bf16.mxu0 0
    %2028 = vmatpush1.bf16.msra.mxu0 %v2023
    %2029 = vmatprep.subr.bf16.mxu0 0
    %2030 = vmatpush1.bf16.msra.mxu0 %v2024
    %2031 = vmatprep.subr.bf16.mxu0 0
    %2032 = vmatpush1.bf16.msra.mxu0 0
    %2033 = vmatprep.subr.bf16.mxu0 0
    %2034 = vmatpush1.bf16.msra.mxu0 0
    %2035 = vmatprep.subr.bf16.mxu0 0
    %2036 = vmatpush1.bf16.msra.mxu0 0
    %2037 = vmatprep.subr.bf16.mxu0 0
    %2038 = vmatpush1.bf16.msra.mxu0 0
    %2039 = vmatprep.subr.bf16.mxu0 0
    %2040 = vmatpush1.bf16.msra.mxu0 0
    %2041 = vmatprep.subr.bf16.mxu0 0
    %2042 = vmatpush1.bf16.msra.mxu0 0
    %2043 = vmatprep.subr.bf16.mxu0 0
    %2044 = vmatpush1.bf16.msra.mxu0 0
    %2045 = vmatprep.subr.bf16.mxu0 0
    %2046 = vmatpush1.bf16.msra.mxu0 0
    %2047 = vmatprep.subr.bf16.mxu0 0
    %2048 = vmatpush1.bf16.msra.mxu0 0
    %2049 = vmatprep.subr.bf16.mxu0 0
    %2050 = vmatpush1.bf16.msra.mxu0 0
    %2051 = vmatprep.subr.bf16.mxu0 0
    %2052 = vmatpush1.bf16.msra.mxu0 0
    %2053 = vmatprep.subr.bf16.mxu0 0
    %2054 = vmatpush1.bf16.msra.mxu0 0
    %2055 = vmatprep.subr.bf16.mxu0 0
    %2056 = vmatpush1.bf16.msra.mxu0 0
    %2057 = vmatprep.subr.bf16.mxu0 0
    %2058 = vmatpush1.bf16.msra.mxu0 0
    %2059 = vmatprep.mubr.bf16.mxu0 0
    %2060 = vmatmul.mubr.bf16.gmra.mrb[0].mxu0 %v1963
    %v2061 = vpop.f32.mrb[0].mxu0
    %v2062 = vadd.f32 %v2014, %v2061
    %v2063 = vpop.f32.mrb[0].mxu0
    %v2064 = vpop.f32.mrb[0].mxu0
    %v2065 = vadd.f32 %v2014, %v2064
    %v2066 = vpop.f32.mrb[0].mxu0
    %2067 = vdwg.mxu0
    %2070 = vrot.lane.b32.xlu0 %v2000, 96
    %v2071 = vpop.permute.xlu0 %2070
    %2072 = vrot.lane.b32.xlu0 %v2003, 96
    %v2073 = vpop.permute.xlu0 %2072
    %2076 = vxpose.xlu0.b32.start [1/16] %v2071, 128
    %2077 = vxpose.xlu0.b32.cont [2/16] %v2073, 128
    %2078 = vxpose.xlu0.b32.cont [3/16] 0.0, 128
    %2079 = vxpose.xlu0.b32.cont [4/16] 0.0, 128
    %2080 = vxpose.xlu0.b32.cont [5/16] 0.0, 128
    %2081 = vxpose.xlu0.b32.cont [6/16] 0.0, 128
    %2082 = vxpose.xlu0.b32.cont [7/16] 0.0, 128
    %2083 = vxpose.xlu0.b32.cont [8/16] 0.0, 128
    %2084 = vxpose.xlu0.b32.cont [9/16] 0.0, 128
    %2085 = vxpose.xlu0.b32.cont [10/16] 0.0, 128
    %2086 = vxpose.xlu0.b32.cont [11/16] 0.0, 128
    %2087 = vxpose.xlu0.b32.cont [12/16] 0.0, 128
    %2088 = vxpose.xlu0.b32.cont [13/16] 0.0, 128
    %2089 = vxpose.xlu0.b32.cont [14/16] 0.0, 128
    %2090 = vxpose.xlu0.b32.cont [15/16] 0.0, 128
    %2091 = vxpose.xlu0.b32.end [16/16] 0.0, 128
    %v2092 = vpop.trf.xlu0
    %v2093 = vpop.trf.xlu0
    %v2094 = vpop.trf.xlu0
    %v2095 = vpop.trf.xlu0
    %v2096 = vpop.trf.xlu0
    %v2097 = vpop.trf.xlu0
    %v2098 = vpop.trf.xlu0
    %v2099 = vpop.trf.xlu0
    %v2100 = vpop.trf.xlu0
    %v2101 = vpop.trf.xlu0
    %v2102 = vpop.trf.xlu0
    %v2103 = vpop.trf.xlu0
    %v2104 = vpop.trf.xlu0
    %v2105 = vpop.trf.xlu0
    %v2106 = vpop.trf.xlu0
    %v2107 = vpop.trf.xlu0
    %v2108 = vpack.c.bf16 %v2003, %v2000
    %v2109 = vpack.c.bf16 %v2092, %v2092
    %v2111 = vsel %vm586, %v2108, 0
    %v2114 = vsel %vm590, %v2109, 0
    %2116 = vmatprep.subr.bf16.mxu0 0
    %2117 = vmatpush1.bf16.msra.mxu0 %v2114
    %2118 = vmatprep.subr.bf16.mxu0 0
    %2119 = vmatpush1.bf16.msra.mxu0 0
    %2120 = vmatprep.subr.bf16.mxu0 0
    %2121 = vmatpush1.bf16.msra.mxu0 0
    %2122 = vmatprep.subr.bf16.mxu0 0
    %2123 = vmatpush1.bf16.msra.mxu0 0
    %2124 = vmatprep.subr.bf16.mxu0 0
    %2125 = vmatpush1.bf16.msra.mxu0 0
    %2126 = vmatprep.subr.bf16.mxu0 0
    %2127 = vmatpush1.bf16.msra.mxu0 0
    %2128 = vmatprep.subr.bf16.mxu0 0
    %2129 = vmatpush1.bf16.msra.mxu0 0
    %2130 = vmatprep.subr.bf16.mxu0 0
    %2131 = vmatpush1.bf16.msra.mxu0 0
    %2132 = vmatprep.subr.bf16.mxu0 0
    %2133 = vmatpush1.bf16.msra.mxu0 0
    %2134 = vmatprep.subr.bf16.mxu0 0
    %2135 = vmatpush1.bf16.msra.mxu0 0
    %2136 = vmatprep.subr.bf16.mxu0 0
    %2137 = vmatpush1.bf16.msra.mxu0 0
    %2138 = vmatprep.subr.bf16.mxu0 0
    %2139 = vmatpush1.bf16.msra.mxu0 0
    %2140 = vmatprep.subr.bf16.mxu0 0
    %2141 = vmatpush1.bf16.msra.mxu0 0
    %2142 = vmatprep.subr.bf16.mxu0 0
    %2143 = vmatpush1.bf16.msra.mxu0 0
    %2144 = vmatprep.subr.bf16.mxu0 0
    %2145 = vmatpush1.bf16.msra.mxu0 0
    %2146 = vmatprep.subr.bf16.mxu0 0
    %2147 = vmatpush1.bf16.msra.mxu0 0
    %2148 = vmatprep.mubr.bf16.mxu0 0
    %2149 = vmatmul.mubr.bf16.gmra.mrb[0].mxu0 %v2111
    %v2150 = vpop.f32.mrb[0].mxu0
    %v2151 = vadd.f32 %v115, %v2150
    %v2152 = vpop.f32.mrb[0].mxu0
    %v2153 = vpop.f32.mrb[0].mxu0
    %v2154 = vadd.f32 %v116, %v2153
    %v2155 = vpop.f32.mrb[0].mxu0
    %2156 = vdwg.mxu0
    %v2157 = vsel %vm635, %v2151, -inf
    %2158 = vmax.xlane.f32.xlu0 %v2157
    %v2159 = vpop.xlane.xlu0 %2158
    %v2160 = vsel %vm635, %v2154, -inf
    %2161 = vmax.xlane.f32.xlu0 %v2160
    %v2162 = vpop.xlane.xlu0 %2161
    %v2163 = vsub.f32 %v2151, %v2159
    %v2164 = vsub.f32 %v2154, %v2162
    %v2165 = vmul.f32 %v2163, 1.442695
    %v2166 = vpow.pop %v2165
    %v2167 = vmul.f32 %v2164, 1.442695
    %v2168 = vpow.pop %v2167
    %v2169 = vsel %vm635, %v2166, 0.0
    %2170 = vadd.xlane.f32.xlu0 %v2169
    %v2171 = vpop.xlane.xlu0 %2170
    %v2172 = vsel %vm635, %v2168, 0.0
    %2173 = vadd.xlane.f32.xlu0 %v2172
    %v2174 = vpop.xlane.xlu0 %2173
    %v2175 = vrcp.pop %v2171
    %v2176 = vrcp.pop %v2174
    %v2177 = vmul.f32 %v2166, %v2175
    %v2178 = vmul.f32 %v2168, %v2176
    %v2179 = vpack.c.bf16 %v2178, %v2177
    %v2180 = vpack.c.bf16 %v2065, %v2062
    %v2181 = vpack.c.bf16 %v2093, %v2093
    %2183 = vrot.lane.b32.xlu0 %v2108, 120
    %v2184 = vpop.permute.xlu0 %2183
    %v2186 = vsel %vm586, %v2184, 0
    %v2189 = vsel %vm590, %v2181, 0
    %2191 = vmatprep.subr.bf16.mxu0 0
    %2192 = vmatpush1.bf16.msra.mxu0 %v2189
    %2193 = vmatprep.subr.bf16.mxu0 0
    %2194 = vmatpush1.bf16.msra.mxu0 0
    %2195 = vmatprep.subr.bf16.mxu0 0
    %2196 = vmatpush1.bf16.msra.mxu0 0
    %2197 = vmatprep.subr.bf16.mxu0 0
    %2198 = vmatpush1.bf16.msra.mxu0 0
    %2199 = vmatprep.subr.bf16.mxu0 0
    %2200 = vmatpush1.bf16.msra.mxu0 0
    %2201 = vmatprep.subr.bf16.mxu0 0
    %2202 = vmatpush1.bf16.msra.mxu0 0
    %2203 = vmatprep.subr.bf16.mxu0 0
    %2204 = vmatpush1.bf16.msra.mxu0 0
    %2205 = vmatprep.subr.bf16.mxu0 0
    %2206 = vmatpush1.bf16.msra.mxu0 0
    %2207 = vmatprep.subr.bf16.mxu0 0
    %2208 = vmatpush1.bf16.msra.mxu0 0
    %2209 = vmatprep.subr.bf16.mxu0 0
    %2210 = vmatpush1.bf16.msra.mxu0 0
    %2211 = vmatprep.subr.bf16.mxu0 0
    %2212 = vmatpush1.bf16.msra.mxu0 0
    %2213 = vmatprep.subr.bf16.mxu0 0
    %2214 = vmatpush1.bf16.msra.mxu0 0
    %2215 = vmatprep.subr.bf16.mxu0 0
    %2216 = vmatpush1.bf16.msra.mxu0 0
    %2217 = vmatprep.subr.bf16.mxu0 0
    %2218 = vmatpush1.bf16.msra.mxu0 0
    %2219 = vmatprep.subr.bf16.mxu0 0
    %2220 = vmatpush1.bf16.msra.mxu0 0
    %2221 = vmatprep.subr.bf16.mxu0 0
    %2222 = vmatpush1.bf16.msra.mxu0 0
    %2223 = vmatprep.mubr.bf16.mxu0 0
    %2224 = vmatmul.mubr.bf16.gmra.mrb[0].mxu0 %v2186
    %v2225 = vpop.f32.mrb[0].mxu0
    %v2226 = vadd.f32 %v115, %v2225
    %v2227 = vpop.f32.mrb[0].mxu0
    %v2228 = vpop.f32.mrb[0].mxu0
    %v2229 = vadd.f32 %v116, %v2228
    %v2230 = vpop.f32.mrb[0].mxu0
    %2231 = vdwg.mxu0
    %v2232 = vsel %vm635, %v2226, -inf
    %2233 = vmax.xlane.f32.xlu0 %v2232
    %v2234 = vpop.xlane.xlu0 %2233
    %v2235 = vsel %vm635, %v2229, -inf
    %2236 = vmax.xlane.f32.xlu0 %v2235
    %v2237 = vpop.xlane.xlu0 %2236
    %v2238 = vsub.f32 %v2226, %v2234
    %v2239 = vsub.f32 %v2229, %v2237
    %v2240 = vmul.f32 %v2238, 1.442695
    %v2241 = vpow.pop %v2240
    %v2242 = vmul.f32 %v2239, 1.442695
    %v2243 = vpow.pop %v2242
    %v2244 = vsel %vm635, %v2241, 0.0
    %2245 = vadd.xlane.f32.xlu0 %v2244
    %v2246 = vpop.xlane.xlu0 %2245
    %v2247 = vsel %vm635, %v2243, 0.0
    %2248 = vadd.xlane.f32.xlu0 %v2247
    %v2249 = vpop.xlane.xlu0 %2248
    %v2250 = vrcp.pop %v2246
    %v2251 = vrcp.pop %v2249
    %v2252 = vmul.f32 %v2241, %v2250
    %v2253 = vmul.f32 %v2243, %v2251
    %v2254 = vpack.c.bf16 %v2253, %v2252
    %2256 = vrot.lane.b32.xlu0 %v2180, 96
    %v2257 = vpop.permute.xlu0 %2256
    %v2260 = vsel %vm635, %v2254, 0
    %2262 = vmatprep.subr.bf16.mxu0 0
    %2263 = vmatpush1.bf16.msra.mxu0 %v2257
    %2264 = vmatprep.subr.bf16.mxu0 0
    %2265 = vmatpush1.bf16.msra.mxu0 0
    %2266 = vmatprep.subr.bf16.mxu0 0
    %2267 = vmatpush1.bf16.msra.mxu0 0
    %2268 = vmatprep.subr.bf16.mxu0 0
    %2269 = vmatpush1.bf16.msra.mxu0 0
    %2270 = vmatprep.subr.bf16.mxu0 0
    %2271 = vmatpush1.bf16.msra.mxu0 0
    %2272 = vmatprep.subr.bf16.mxu0 0
    %2273 = vmatpush1.bf16.msra.mxu0 0
    %2274 = vmatprep.subr.bf16.mxu0 0
    %2275 = vmatpush1.bf16.msra.mxu0 0
    %2276 = vmatprep.subr.bf16.mxu0 0
    %2277 = vmatpush1.bf16.msra.mxu0 0
    %2278 = vmatprep.subr.bf16.mxu0 0
    %2279 = vmatpush1.bf16.msra.mxu0 0
    %2280 = vmatprep.subr.bf16.mxu0 0
    %2281 = vmatpush1.bf16.msra.mxu0 0
    %2282 = vmatprep.subr.bf16.mxu0 0
    %2283 = vmatpush1.bf16.msra.mxu0 0
    %2284 = vmatprep.subr.bf16.mxu0 0
    %2285 = vmatpush1.bf16.msra.mxu0 0
    %2286 = vmatprep.subr.bf16.mxu0 0
    %2287 = vmatpush1.bf16.msra.mxu0 0
    %2288 = vmatprep.subr.bf16.mxu0 0
    %2289 = vmatpush1.bf16.msra.mxu0 0
    %2290 = vmatprep.subr.bf16.mxu0 0
    %2291 = vmatpush1.bf16.msra.mxu0 0
    %2292 = vmatprep.subr.bf16.mxu0 0
    %2293 = vmatpush1.bf16.msra.mxu0 0
    %2294 = vmatprep.mubr.bf16.mxu0 0
    %2295 = vmatmul.mubr.bf16.gmra.mrb[0].mxu0 %v2260
    %v2296 = vpop.f32.mrb[0].mxu0
    %v2297 = vadd.f32 0.0, %v2296
    %v2298 = vpop.f32.mrb[0].mxu0
    %v2299 = vpop.f32.mrb[0].mxu0
    %v2300 = vadd.f32 0.0, %v2299
    %v2301 = vpop.f32.mrb[0].mxu0
    %2302 = vdwg.mxu0
    %v2304 = vsel %vm635, %v2179, 0
    %2306 = vmatprep.subr.bf16.mxu0 0
    %2307 = vmatpush1.bf16.msra.mxu0 %v2180
    %2308 = vmatprep.subr.bf16.mxu0 0
    %2309 = vmatpush1.bf16.msra.mxu0 0
    %2310 = vmatprep.subr.bf16.mxu0 0
    %2311 = vmatpush1.bf16.msra.mxu0 0
    %2312 = vmatprep.subr.bf16.mxu0 0
    %2313 = vmatpush1.bf16.msra.mxu0 0
    %2314 = vmatprep.subr.bf16.mxu0 0
    %2315 = vmatpush1.bf16.msra.mxu0 0
    %2316 = vmatprep.subr.bf16.mxu0 0
    %2317 = vmatpush1.bf16.msra.mxu0 0
    %2318 = vmatprep.subr.bf16.mxu0 0
    %2319 = vmatpush1.bf16.msra.mxu0 0
    %2320 = vmatprep.subr.bf16.mxu0 0
    %2321 = vmatpush1.bf16.msra.mxu0 0
    %2322 = vmatprep.subr.bf16.mxu0 0
    %2323 = vmatpush1.bf16.msra.mxu0 0
    %2324 = vmatprep.subr.bf16.mxu0 0
    %2325 = vmatpush1.bf16.msra.mxu0 0
    %2326 = vmatprep.subr.bf16.mxu0 0
    %2327 = vmatpush1.bf16.msra.mxu0 0
    %2328 = vmatprep.subr.bf16.mxu0 0
    %2329 = vmatpush1.bf16.msra.mxu0 0
    %2330 = vmatprep.subr.bf16.mxu0 0
    %2331 = vmatpush1.bf16.msra.mxu0 0
    %2332 = vmatprep.subr.bf16.mxu0 0
    %2333 = vmatpush1.bf16.msra.mxu0 0
    %2334 = vmatprep.subr.bf16.mxu0 0
    %2335 = vmatpush1.bf16.msra.mxu0 0
    %2336 = vmatprep.subr.bf16.mxu0 0
    %2337 = vmatpush1.bf16.msra.mxu0 0
    %2338 = vmatprep.mubr.bf16.mxu0 0
    %2339 = vmatmul.mubr.bf16.gmra.mrb[0].mxu0 %v2304
    %v2340 = vpop.f32.mrb[0].mxu0
    %v2341 = vadd.f32 %v2297, %v2340
    %v2342 = vpop.f32.mrb[0].mxu0
    %v2343 = vpop.f32.mrb[0].mxu0
    %v2344 = vadd.f32 %v2300, %v2343
    %v2345 = vpop.f32.mrb[0].mxu0
    %2346 = vdwg.mxu0
    %v2347 = vpack.c.bf16 %v2094, %v2094
    %2348 = vrot.lane.b32.xlu0 %v2108, 112
    %v2349 = vpop.permute.xlu0 %2348
    %v2351 = vsel %vm586, %v2349, 0
    %v2354 = vsel %vm590, %v2347, 0
    %2356 = vmatprep.subr.bf16.mxu0 0
    %2357 = vmatpush1.bf16.msra.mxu0 %v2354
    %2358 = vmatprep.subr.bf16.mxu0 0
    %2359 = vmatpush1.bf16.msra.mxu0 0
    %2360 = vmatprep.subr.bf16.mxu0 0
    %2361 = vmatpush1.bf16.msra.mxu0 0
    %2362 = vmatprep.subr.bf16.mxu0 0
    %2363 = vmatpush1.bf16.msra.mxu0 0
    %2364 = vmatprep.subr.bf16.mxu0 0
    %2365 = vmatpush1.bf16.msra.mxu0 0
    %2366 = vmatprep.subr.bf16.mxu0 0
    %2367 = vmatpush1.bf16.msra.mxu0 0
    %2368 = vmatprep.subr.bf16.mxu0 0
    %2369 = vmatpush1.bf16.msra.mxu0 0
    %2370 = vmatprep.subr.bf16.mxu0 0
    %2371 = vmatpush1.bf16.msra.mxu0 0
    %2372 = vmatprep.subr.bf16.mxu0 0
    %2373 = vmatpush1.bf16.msra.mxu0 0
    %2374 = vmatprep.subr.bf16.mxu0 0
    %2375 = vmatpush1.bf16.msra.mxu0 0
    %2376 = vmatprep.subr.bf16.mxu0 0
    %2377 = vmatpush1.bf16.msra.mxu0 0
    %2378 = vmatprep.subr.bf16.mxu0 0
    %2379 = vmatpush1.bf16.msra.mxu0 0
    %2380 = vmatprep.subr.bf16.mxu0 0
    %2381 = vmatpush1.bf16.msra.mxu0 0
    %2382 = vmatprep.subr.bf16.mxu0 0
    %2383 = vmatpush1.bf16.msra.mxu0 0
    %2384 = vmatprep.subr.bf16.mxu0 0
    %2385 = vmatpush1.bf16.msra.mxu0 0
    %2386 = vmatprep.subr.bf16.mxu0 0
    %2387 = vmatpush1.bf16.msra.mxu0 0
    %2388 = vmatprep.mubr.bf16.mxu0 0
    %2389 = vmatmul.mubr.bf16.gmra.mrb[0].mxu0 %v2351
    %v2390 = vpop.f32.mrb[0].mxu0
    %v2391 = vadd.f32 %v115, %v2390
    %v2392 = vpop.f32.mrb[0].mxu0
    %v2393 = vpop.f32.mrb[0].mxu0
    %v2394 = vadd.f32 %v116, %v2393
    %v2395 = vpop.f32.mrb[0].mxu0
    %2396 = vdwg.mxu0
    %v2397 = vsel %vm635, %v2391, -inf
    %2398 = vmax.xlane.f32.xlu0 %v2397
    %v2399 = vpop.xlane.xlu0 %2398
    %v2400 = vsel %vm635, %v2394, -inf
    %2401 = vmax.xlane.f32.xlu0 %v2400
    %v2402 = vpop.xlane.xlu0 %2401
    %v2403 = vsub.f32 %v2391, %v2399
    %v2404 = vsub.f32 %v2394, %v2402
    %v2405 = vmul.f32 %v2403, 1.442695
    %v2406 = vpow.pop %v2405
    %v2407 = vmul.f32 %v2404, 1.442695
    %v2408 = vpow.pop %v2407
    %v2409 = vsel %vm635, %v2406, 0.0
    %2410 = vadd.xlane.f32.xlu0 %v2409
    %v2411 = vpop.xlane.xlu0 %2410
    %v2412 = vsel %vm635, %v2408, 0.0
    %2413 = vadd.xlane.f32.xlu0 %v2412
    %v2414 = vpop.xlane.xlu0 %2413
    %v2415 = vrcp.pop %v2411
    %v2416 = vrcp.pop %v2414
    %v2417 = vmul.f32 %v2406, %v2415
    %v2418 = vmul.f32 %v2408, %v2416
    %v2419 = vpack.c.bf16 %v2418, %v2417
    %2420 = vrot.lane.b32.xlu0 %v2180, 64
    %v2421 = vpop.permute.xlu0 %2420
    %v2424 = vsel %vm635, %v2419, 0
    %2426 = vmatprep.subr.bf16.mxu0 0
    %2427 = vmatpush1.bf16.msra.mxu0 %v2421
    %2428 = vmatprep.subr.bf16.mxu0 0
    %2429 = vmatpush1.bf16.msra.mxu0 0
    %2430 = vmatprep.subr.bf16.mxu0 0
    %2431 = vmatpush1.bf16.msra.mxu0 0
    %2432 = vmatprep.subr.bf16.mxu0 0
    %2433 = vmatpush1.bf16.msra.mxu0 0
    %2434 = vmatprep.subr.bf16.mxu0 0
    %2435 = vmatpush1.bf16.msra.mxu0 0
    %2436 = vmatprep.subr.bf16.mxu0 0
    %2437 = vmatpush1.bf16.msra.mxu0 0
    %2438 = vmatprep.subr.bf16.mxu0 0
    %2439 = vmatpush1.bf16.msra.mxu0 0
    %2440 = vmatprep.subr.bf16.mxu0 0
    %2441 = vmatpush1.bf16.msra.mxu0 0
    %2442 = vmatprep.subr.bf16.mxu0 0
    %2443 = vmatpush1.bf16.msra.mxu0 0
    %2444 = vmatprep.subr.bf16.mxu0 0
    %2445 = vmatpush1.bf16.msra.mxu0 0
    %2446 = vmatprep.subr.bf16.mxu0 0
    %2447 = vmatpush1.bf16.msra.mxu0 0
    %2448 = vmatprep.subr.bf16.mxu0 0
    %2449 = vmatpush1.bf16.msra.mxu0 0
    %2450 = vmatprep.subr.bf16.mxu0 0
    %2451 = vmatpush1.bf16.msra.mxu0 0
    %2452 = vmatprep.subr.bf16.mxu0 0
    %2453 = vmatpush1.bf16.msra.mxu0 0
    %2454 = vmatprep.subr.bf16.mxu0 0
    %2455 = vmatpush1.bf16.msra.mxu0 0
    %2456 = vmatprep.subr.bf16.mxu0 0
    %2457 = vmatpush1.bf16.msra.mxu0 0
    %2458 = vmatprep.mubr.bf16.mxu0 0
    %2459 = vmatmul.mubr.bf16.gmra.mrb[0].mxu0 %v2424
    %v2460 = vpop.f32.mrb[0].mxu0
    %v2461 = vadd.f32 0.0, %v2460
    %v2462 = vpop.f32.mrb[0].mxu0
    %v2463 = vpop.f32.mrb[0].mxu0
    %v2464 = vadd.f32 0.0, %v2463
    %v2465 = vpop.f32.mrb[0].mxu0
    %2466 = vdwg.mxu0
    %v2467 = vadd.f32 %v2341, %v2461
    %v2468 = vadd.f32 %v2344, %v2464
    %v2469 = vpack.c.bf16 %v2095, %v2095
    %2470 = vrot.lane.b32.xlu0 %v2108, 104
    %v2471 = vpop.permute.xlu0 %2470
    %v2473 = vsel %vm586, %v2471, 0
    %v2476 = vsel %vm590, %v2469, 0
    %2478 = vmatprep.subr.bf16.mxu0 0
    %2479 = vmatpush1.bf16.msra.mxu0 %v2476
    %2480 = vmatprep.subr.bf16.mxu0 0
    %2481 = vmatpush1.bf16.msra.mxu0 0
    %2482 = vmatprep.subr.bf16.mxu0 0
    %2483 = vmatpush1.bf16.msra.mxu0 0
    %2484 = vmatprep.subr.bf16.mxu0 0
    %2485 = vmatpush1.bf16.msra.mxu0 0
    %2486 = vmatprep.subr.bf16.mxu0 0
    %2487 = vmatpush1.bf16.msra.mxu0 0
    %2488 = vmatprep.subr.bf16.mxu0 0
    %2489 = vmatpush1.bf16.msra.mxu0 0
    %2490 = vmatprep.subr.bf16.mxu0 0
    %2491 = vmatpush1.bf16.msra.mxu0 0
    %2492 = vmatprep.subr.bf16.mxu0 0
    %2493 = vmatpush1.bf16.msra.mxu0 0
    %2494 = vmatprep.subr.bf16.mxu0 0
    %2495 = vmatpush1.bf16.msra.mxu0 0
    %2496 = vmatprep.subr.bf16.mxu0 0
    %2497 = vmatpush1.bf16.msra.mxu0 0
    %2498 = vmatprep.subr.bf16.mxu0 0
    %2499 = vmatpush1.bf16.msra.mxu0 0
    %2500 = vmatprep.subr.bf16.mxu0 0
    %2501 = vmatpush1.bf16.msra.mxu0 0
    %2502 = vmatprep.subr.bf16.mxu0 0
    %2503 = vmatpush1.bf16.msra.mxu0 0
    %2504 = vmatprep.subr.bf16.mxu0 0
    %2505 = vmatpush1.bf16.msra.mxu0 0
    %2506 = vmatprep.subr.bf16.mxu0 0
    %2507 = vmatpush1.bf16.msra.mxu0 0
    %2508 = vmatprep.subr.bf16.mxu0 0
    %2509 = vmatpush1.bf16.msra.mxu0 0
    %2510 = vmatprep.mubr.bf16.mxu0 0
    %2511 = vmatmul.mubr.bf16.gmra.mrb[0].mxu0 %v2473
    %v2512 = vpop.f32.mrb[0].mxu0
    %v2513 = vadd.f32 %v115, %v2512
    %v2514 = vpop.f32.mrb[0].mxu0
    %v2515 = vpop.f32.mrb[0].mxu0
    %v2516 = vadd.f32 %v116, %v2515
    %v2517 = vpop.f32.mrb[0].mxu0
    %2518 = vdwg.mxu0
    %v2519 = vsel %vm635, %v2513, -inf
    %2520 = vmax.xlane.f32.xlu0 %v2519
    %v2521 = vpop.xlane.xlu0 %2520
    %v2522 = vsel %vm635, %v2516, -inf
    %2523 = vmax.xlane.f32.xlu0 %v2522
    %v2524 = vpop.xlane.xlu0 %2523
    %v2525 = vsub.f32 %v2513, %v2521
    %v2526 = vsub.f32 %v2516, %v2524
    %v2527 = vmul.f32 %v2525, 1.442695
    %v2528 = vpow.pop %v2527
    %v2529 = vmul.f32 %v2526, 1.442695
    %v2530 = vpow.pop %v2529
    %v2531 = vsel %vm635, %v2528, 0.0
    %2532 = vadd.xlane.f32.xlu0 %v2531
    %v2533 = vpop.xlane.xlu0 %2532
    %v2534 = vsel %vm635, %v2530, 0.0
    %2535 = vadd.xlane.f32.xlu0 %v2534
    %v2536 = vpop.xlane.xlu0 %2535
    %v2537 = vrcp.pop %v2533
    %v2538 = vrcp.pop %v2536
    %v2539 = vmul.f32 %v2528, %v2537
    %v2540 = vmul.f32 %v2530, %v2538
    %v2541 = vpack.c.bf16 %v2540, %v2539
    %2542 = vrot.lane.b32.xlu0 %v2180, 32
    %v2543 = vpop.permute.xlu0 %2542
    %v2546 = vsel %vm635, %v2541, 0
    %2548 = vmatprep.subr.bf16.mxu0 0
    %2549 = vmatpush1.bf16.msra.mxu0 %v2543
    %2550 = vmatprep.subr.bf16.mxu0 0
    %2551 = vmatpush1.bf16.msra.mxu0 0
    %2552 = vmatprep.subr.bf16.mxu0 0
    %2553 = vmatpush1.bf16.msra.mxu0 0
    %2554 = vmatprep.subr.bf16.mxu0 0
    %2555 = vmatpush1.bf16.msra.mxu0 0
    %2556 = vmatprep.subr.bf16.mxu0 0
    %2557 = vmatpush1.bf16.msra.mxu0 0
    %2558 = vmatprep.subr.bf16.mxu0 0
    %2559 = vmatpush1.bf16.msra.mxu0 0
    %2560 = vmatprep.subr.bf16.mxu0 0
    %2561 = vmatpush1.bf16.msra.mxu0 0
    %2562 = vmatprep.subr.bf16.mxu0 0
    %2563 = vmatpush1.bf16.msra.mxu0 0
    %2564 = vmatprep.subr.bf16.mxu0 0
    %2565 = vmatpush1.bf16.msra.mxu0 0
    %2566 = vmatprep.subr.bf16.mxu0 0
    %2567 = vmatpush1.bf16.msra.mxu0 0
    %2568 = vmatprep.subr.bf16.mxu0 0
    %2569 = vmatpush1.bf16.msra.mxu0 0
    %2570 = vmatprep.subr.bf16.mxu0 0
    %2571 = vmatpush1.bf16.msra.mxu0 0
    %2572 = vmatprep.subr.bf16.mxu0 0
    %2573 = vmatpush1.bf16.msra.mxu0 0
    %2574 = vmatprep.subr.bf16.mxu0 0
    %2575 = vmatpush1.bf16.msra.mxu0 0
    %2576 = vmatprep.subr.bf16.mxu0 0
    %2577 = vmatpush1.bf16.msra.mxu0 0
    %2578 = vmatprep.subr.bf16.mxu0 0
    %2579 = vmatpush1.bf16.msra.mxu0 0
    %2580 = vmatprep.mubr.bf16.mxu0 0
    %2581 = vmatmul.mubr.bf16.gmra.mrb[0].mxu0 %v2546
    %v2582 = vpop.f32.mrb[0].mxu0
    %v2583 = vadd.f32 0.0, %v2582
    %v2584 = vpop.f32.mrb[0].mxu0
    %v2585 = vpop.f32.mrb[0].mxu0
    %v2586 = vadd.f32 0.0, %v2585
    %v2587 = vpop.f32.mrb[0].mxu0
    %2588 = vdwg.mxu0
    %v2589 = vadd.f32 %v2467, %v2583
    %v2590 = vadd.f32 %v2468, %v2586
    %v2591 = vld [vmem:[#allocation11 + $0x88] sm:$0x1]
    %v2592 = vlaneseq
    %v2593 = vshrl.u32 %v2592, 7
    %v2594 = vsub.s32 0, %v2593
    %v2595 = vrot.slane %v2591, %v2594
    %v2596 = vadd.f32 %v2589, %v2595
    %v2597 = vadd.f32 %v2590, %v2595
    %v2598 = vadd.f32 %v1936, %v2596
    %v2599 = vadd.f32 %v1937, %v2597
    %v2600 = vld [vmem:[#allocation11 + $0x90] sm:$0x1]
    %v2601 = vld [vmem:[#allocation11 + $0x98] sm:$0x1]
    %v2602 = vsel %vm140, %v2598, 0.0
    %2603 = vadd.xlane.f32.xlu0 %v2602
    %v2604 = vpop.xlane.xlu0 %2603
    %v2605 = vsel %vm140, %v2599, 0.0
    %2606 = vadd.xlane.f32.xlu0 %v2605
    %v2607 = vpop.xlane.xlu0 %2606
    %v2608 = vmul.f32 %v2604, %v1087
    %v2609 = vmul.f32 %v2607, %v1087
    %v2610 = vsub.f32 %v2598, %v2608
    %v2611 = vsub.f32 %v2599, %v2609
    %v2612 = vmul.f32 %v2610, %v2610
    %v2613 = vmul.f32 %v2611, %v2611
    %v2614 = vsel %vm140, %v2612, 0.0
    %2615 = vadd.xlane.f32.xlu0 %v2614
    %v2616 = vpop.xlane.xlu0 %2615
    %v2617 = vsel %vm140, %v2613, 0.0
    %2618 = vadd.xlane.f32.xlu0 %v2617
    %v2619 = vpop.xlane.xlu0 %2618
    %v2620 = vmul.f32 %v2616, %v1087
    %v2621 = vmul.f32 %v2619, %v1087
    %v2622 = vadd.f32 %v2620, 1e-05
    %v2623 = vadd.f32 %v2621, 1e-05
    %v2624 = vrsqrt.pop %v2622
    %v2625 = vrsqrt.pop %v2623
    %v2626 = vmul.f32 %v2610, %v2624
    %v2627 = vmul.f32 %v2611, %v2625
    %v2628 = vlaneseq
    %v2629 = vshrl.u32 %v2628, 7
    %v2630 = vsub.s32 0, %v2629
    %v2631 = vrot.slane %v2600, %v2630
    %v2632 = vmul.f32 %v2626, %v2631
    %v2633 = vmul.f32 %v2627, %v2631
    %v2634 = vlaneseq
    %v2635 = vshrl.u32 %v2634, 7
    %v2636 = vsub.s32 0, %v2635
    %v2637 = vrot.slane %v2601, %v2636
    %v2638 = vadd.f32 %v2632, %v2637
    %v2639 = vadd.f32 %v2633, %v2637
    %v2640 = vpack.c.bf16 %v2639, %v2638
    %v2641 = vld [vmem:[#allocation10 + $0xa0] sm:$0xf]
    %v2642 = vld [vmem:[#allocation10 + $0xa4] sm:$0xf]
    %v2643 = vld [vmem:[#allocation10 + $0xa8] sm:$0xf]
    %v2644 = vld [vmem:[#allocation10 + $0xac] sm:$0xf]
    %v2645 = vld [vmem:[#allocation11 + $0xa0] sm:$0x1]
    %v2646 = vlaneseq
    %v2647 = vshrl.u32 %v2646, 7
    %v2648 = vsub.s32 0, %v2647
    %v2649 = vrot.slane %v2645, %v2648
    %v2654 = vunpack.c.l.b16 %v2641
    %v2655 = vunpack.c.l.b16 %v2642
    %v2656 = vunpack.c.l.b16 %v2643
    %v2657 = vunpack.c.l.b16 %v2644
    %v2658 = vpack.c.b16 %v2655, %v2654
    %v2659 = vpack.c.b16 %v2657, %v2656
    %v2663 = vsel %vm140, %v2640, 0
    %2665 = vmatprep.subr.bf16.mxu0 0
    %2666 = vmatpush1.bf16.msra.mxu0 %v2658
    %2667 = vmatprep.subr.bf16.mxu0 0
    %2668 = vmatpush1.bf16.msra.mxu0 %v2659
    %2669 = vmatprep.subr.bf16.mxu0 0
    %2670 = vmatpush1.bf16.msra.mxu0 0
    %2671 = vmatprep.subr.bf16.mxu0 0
    %2672 = vmatpush1.bf16.msra.mxu0 0
    %2673 = vmatprep.subr.bf16.mxu0 0
    %2674 = vmatpush1.bf16.msra.mxu0 0
    %2675 = vmatprep.subr.bf16.mxu0 0
    %2676 = vmatpush1.bf16.msra.mxu0 0
    %2677 = vmatprep.subr.bf16.mxu0 0
    %2678 = vmatpush1.bf16.msra.mxu0 0
    %2679 = vmatprep.subr.bf16.mxu0 0
    %2680 = vmatpush1.bf16.msra.mxu0 0
    %2681 = vmatprep.subr.bf16.mxu0 0
    %2682 = vmatpush1.bf16.msra.mxu0 0
    %2683 = vmatprep.subr.bf16.mxu0 0
    %2684 = vmatpush1.bf16.msra.mxu0 0
    %2685 = vmatprep.subr.bf16.mxu0 0
    %2686 = vmatpush1.bf16.msra.mxu0 0
    %2687 = vmatprep.subr.bf16.mxu0 0
    %2688 = vmatpush1.bf16.msra.mxu0 0
    %2689 = vmatprep.subr.bf16.mxu0 0
    %2690 = vmatpush1.bf16.msra.mxu0 0
    %2691 = vmatprep.subr.bf16.mxu0 0
    %2692 = vmatpush1.bf16.msra.mxu0 0
    %2693 = vmatprep.subr.bf16.mxu0 0
    %2694 = vmatpush1.bf16.msra.mxu0 0
    %2695 = vmatprep.subr.bf16.mxu0 0
    %2696 = vmatpush1.bf16.msra.mxu0 0
    %2697 = vmatprep.mubr.bf16.mxu0 0
    %2698 = vmatmul.mubr.bf16.gmra.mrb[0].mxu0 %v2663
    %v2699 = vpop.f32.mrb[0].mxu0
    %v2700 = vadd.f32 %v2649, %v2699
    %v2701 = vpop.f32.mrb[0].mxu0
    %v2702 = vpop.f32.mrb[0].mxu0
    %v2703 = vadd.f32 %v2649, %v2702
    %v2704 = vpop.f32.mrb[0].mxu0
    %2705 = vdwg.mxu0
    %v2706 = vpack.c.bf16 %v2703, %v2700
    %v2707 = vpack.c.bf16 %v260, %v260
    %v2709 = vsel %vm586, %v2706, 0
    %v2712 = vsel %vm590, %v2707, 0
    %2714 = vmatprep.subr.bf16.mxu0 0
    %2715 = vmatpush1.bf16.msra.mxu0 %v2712
    %2716 = vmatprep.subr.bf16.mxu0 0
    %2717 = vmatpush1.bf16.msra.mxu0 0
    %2718 = vmatprep.subr.bf16.mxu0 0
    %2719 = vmatpush1.bf16.msra.mxu0 0
    %2720 = vmatprep.subr.bf16.mxu0 0
    %2721 = vmatpush1.bf16.msra.mxu0 0
    %2722 = vmatprep.subr.bf16.mxu0 0
    %2723 = vmatpush1.bf16.msra.mxu0 0
    %2724 = vmatprep.subr.bf16.mxu0 0
    %2725 = vmatpush1.bf16.msra.mxu0 0
    %2726 = vmatprep.subr.bf16.mxu0 0
    %2727 = vmatpush1.bf16.msra.mxu0 0
    %2728 = vmatprep.subr.bf16.mxu0 0
    %2729 = vmatpush1.bf16.msra.mxu0 0
    %2730 = vmatprep.subr.bf16.mxu0 0
    %2731 = vmatpush1.bf16.msra.mxu0 0
    %2732 = vmatprep.subr.bf16.mxu0 0
    %2733 = vmatpush1.bf16.msra.mxu0 0
    %2734 = vmatprep.subr.bf16.mxu0 0
    %2735 = vmatpush1.bf16.msra.mxu0 0
    %2736 = vmatprep.subr.bf16.mxu0 0
    %2737 = vmatpush1.bf16.msra.mxu0 0
    %2738 = vmatprep.subr.bf16.mxu0 0
    %2739 = vmatpush1.bf16.msra.mxu0 0
    %2740 = vmatprep.subr.bf16.mxu0 0
    %2741 = vmatpush1.bf16.msra.mxu0 0
    %2742 = vmatprep.subr.bf16.mxu0 0
    %2743 = vmatpush1.bf16.msra.mxu0 0
    %2744 = vmatprep.subr.bf16.mxu0 0
    %2745 = vmatpush1.bf16.msra.mxu0 0
    %2746 = vmatprep.mubr.bf16.mxu0 0
    %2747 = vmatmul.mubr.bf16.gmra.mrb[0].mxu0 %v2709
    %v2748 = vpop.f32.mrb[0].mxu0
    %v2749 = vadd.f32 %v117, %v2748
    %v2750 = vpop.f32.mrb[0].mxu0
    %v2751 = vpop.f32.mrb[0].mxu0
    %v2752 = vadd.f32 %v118, %v2751
    %v2753 = vpop.f32.mrb[0].mxu0
    %2754 = vdwg.mxu0
    %v2755 = vsel %vm140, %v2749, -inf
    %2756 = vmax.xlane.f32.xlu0 %v2755
    %v2757 = vpop.xlane.xlu0 %2756
    %v2758 = vsel %vm140, %v2752, -inf
    %2759 = vmax.xlane.f32.xlu0 %v2758
    %v2760 = vpop.xlane.xlu0 %2759
    %v2761 = vsub.f32 %v2749, %v2757
    %v2762 = vsub.f32 %v2752, %v2760
    %v2763 = vmul.f32 %v2761, 1.442695
    %v2764 = vpow.pop %v2763
    %v2765 = vmul.f32 %v2762, 1.442695
    %v2766 = vpow.pop %v2765
    %v2767 = vsel %vm140, %v2764, 0.0
    %2768 = vadd.xlane.f32.xlu0 %v2767
    %v2769 = vpop.xlane.xlu0 %2768
    %v2770 = vsel %vm140, %v2766, 0.0
    %2771 = vadd.xlane.f32.xlu0 %v2770
    %v2772 = vpop.xlane.xlu0 %2771
    %v2773 = vrcp.pop %v2769
    %v2774 = vrcp.pop %v2772
    %v2775 = vmul.f32 %v2764, %v2773
    %v2776 = vmul.f32 %v2766, %v2774
    %v2777 = vpack.c.bf16 %v2776, %v2775
    %v2778 = vpack.c.bf16 %v405, %v402
    %v2779 = vpack.c.bf16 %v413, %v410
    %v2780 = vpack.c.bf16 %v261, %v261
    %2782 = vrot.lane.b32.xlu0 %v2706, 120
    %v2783 = vpop.permute.xlu0 %2782
    %v2785 = vsel %vm586, %v2783, 0
    %v2788 = vsel %vm590, %v2780, 0
    %2790 = vmatprep.subr.bf16.mxu0 0
    %2791 = vmatpush1.bf16.msra.mxu0 %v2788
    %2792 = vmatprep.subr.bf16.mxu0 0
    %2793 = vmatpush1.bf16.msra.mxu0 0
    %2794 = vmatprep.subr.bf16.mxu0 0
    %2795 = vmatpush1.bf16.msra.mxu0 0
    %2796 = vmatprep.subr.bf16.mxu0 0
    %2797 = vmatpush1.bf16.msra.mxu0 0
    %2798 = vmatprep.subr.bf16.mxu0 0
    %2799 = vmatpush1.bf16.msra.mxu0 0
    %2800 = vmatprep.subr.bf16.mxu0 0
    %2801 = vmatpush1.bf16.msra.mxu0 0
    %2802 = vmatprep.subr.bf16.mxu0 0
    %2803 = vmatpush1.bf16.msra.mxu0 0
    %2804 = vmatprep.subr.bf16.mxu0 0
    %2805 = vmatpush1.bf16.msra.mxu0 0
    %2806 = vmatprep.subr.bf16.mxu0 0
    %2807 = vmatpush1.bf16.msra.mxu0 0
    %2808 = vmatprep.subr.bf16.mxu0 0
    %2809 = vmatpush1.bf16.msra.mxu0 0
    %2810 = vmatprep.subr.bf16.mxu0 0
    %2811 = vmatpush1.bf16.msra.mxu0 0
    %2812 = vmatprep.subr.bf16.mxu0 0
    %2813 = vmatpush1.bf16.msra.mxu0 0
    %2814 = vmatprep.subr.bf16.mxu0 0
    %2815 = vmatpush1.bf16.msra.mxu0 0
    %2816 = vmatprep.subr.bf16.mxu0 0
    %2817 = vmatpush1.bf16.msra.mxu0 0
    %2818 = vmatprep.subr.bf16.mxu0 0
    %2819 = vmatpush1.bf16.msra.mxu0 0
    %2820 = vmatprep.subr.bf16.mxu0 0
    %2821 = vmatpush1.bf16.msra.mxu0 0
    %2822 = vmatprep.mubr.bf16.mxu0 0
    %2823 = vmatmul.mubr.bf16.gmra.mrb[0].mxu0 %v2785
    %v2824 = vpop.f32.mrb[0].mxu0
    %v2825 = vadd.f32 %v117, %v2824
    %v2826 = vpop.f32.mrb[0].mxu0
    %v2827 = vpop.f32.mrb[0].mxu0
    %v2828 = vadd.f32 %v118, %v2827
    %v2829 = vpop.f32.mrb[0].mxu0
    %2830 = vdwg.mxu0
    %v2831 = vsel %vm140, %v2825, -inf
    %2832 = vmax.xlane.f32.xlu0 %v2831
    %v2833 = vpop.xlane.xlu0 %2832
    %v2834 = vsel %vm140, %v2828, -inf
    %2835 = vmax.xlane.f32.xlu0 %v2834
    %v2836 = vpop.xlane.xlu0 %2835
    %v2837 = vsub.f32 %v2825, %v2833
    %v2838 = vsub.f32 %v2828, %v2836
    %v2839 = vmul.f32 %v2837, 1.442695
    %v2840 = vpow.pop %v2839
    %v2841 = vmul.f32 %v2838, 1.442695
    %v2842 = vpow.pop %v2841
    %v2843 = vsel %vm140, %v2840, 0.0
    %2844 = vadd.xlane.f32.xlu0 %v2843
    %v2845 = vpop.xlane.xlu0 %2844
    %v2846 = vsel %vm140, %v2842, 0.0
    %2847 = vadd.xlane.f32.xlu0 %v2846
    %v2848 = vpop.xlane.xlu0 %2847
    %v2849 = vrcp.pop %v2845
    %v2850 = vrcp.pop %v2848
    %v2851 = vmul.f32 %v2840, %v2849
    %v2852 = vmul.f32 %v2842, %v2850
    %v2853 = vpack.c.bf16 %v2852, %v2851
    %2856 = vrot.lane.b32.xlu0 %v2778, 96
    %v2857 = vpop.permute.xlu0 %2856
    %2858 = vrot.lane.b32.xlu0 %v2779, 96
    %v2859 = vpop.permute.xlu0 %2858
    %v2863 = vsel %vm140, %v2853, 0
    %2865 = vmatprep.subr.bf16.mxu0 0
    %2866 = vmatpush1.bf16.msra.mxu0 %v2857
    %2867 = vmatprep.subr.bf16.mxu0 0
    %2868 = vmatpush1.bf16.msra.mxu0 %v2859
    %2869 = vmatprep.subr.bf16.mxu0 0
    %2870 = vmatpush1.bf16.msra.mxu0 0
    %2871 = vmatprep.subr.bf16.mxu0 0
    %2872 = vmatpush1.bf16.msra.mxu0 0
    %2873 = vmatprep.subr.bf16.mxu0 0
    %2874 = vmatpush1.bf16.msra.mxu0 0
    %2875 = vmatprep.subr.bf16.mxu0 0
    %2876 = vmatpush1.bf16.msra.mxu0 0
    %2877 = vmatprep.subr.bf16.mxu0 0
    %2878 = vmatpush1.bf16.msra.mxu0 0
    %2879 = vmatprep.subr.bf16.mxu0 0
    %2880 = vmatpush1.bf16.msra.mxu0 0
    %2881 = vmatprep.subr.bf16.mxu0 0
    %2882 = vmatpush1.bf16.msra.mxu0 0
    %2883 = vmatprep.subr.bf16.mxu0 0
    %2884 = vmatpush1.bf16.msra.mxu0 0
    %2885 = vmatprep.subr.bf16.mxu0 0
    %2886 = vmatpush1.bf16.msra.mxu0 0
    %2887 = vmatprep.subr.bf16.mxu0 0
    %2888 = vmatpush1.bf16.msra.mxu0 0
    %2889 = vmatprep.subr.bf16.mxu0 0
    %2890 = vmatpush1.bf16.msra.mxu0 0
    %2891 = vmatprep.subr.bf16.mxu0 0
    %2892 = vmatpush1.bf16.msra.mxu0 0
    %2893 = vmatprep.subr.bf16.mxu0 0
    %2894 = vmatpush1.bf16.msra.mxu0 0
    %2895 = vmatprep.subr.bf16.mxu0 0
    %2896 = vmatpush1.bf16.msra.mxu0 0
    %2897 = vmatprep.mubr.bf16.mxu0 0
    %2898 = vmatmul.mubr.bf16.gmra.mrb[0].mxu0 %v2863
    %v2899 = vpop.f32.mrb[0].mxu0
    %v2900 = vadd.f32 0.0, %v2899
    %v2901 = vpop.f32.mrb[0].mxu0
    %v2902 = vpop.f32.mrb[0].mxu0
    %v2903 = vadd.f32 0.0, %v2902
    %v2904 = vpop.f32.mrb[0].mxu0
    %2905 = vdwg.mxu0
    %v2907 = vsel %vm140, %v2777, 0
    %2909 = vmatprep.subr.bf16.mxu0 0
    %2910 = vmatpush1.bf16.msra.mxu0 %v2778
    %2911 = vmatprep.subr.bf16.mxu0 0
    %2912 = vmatpush1.bf16.msra.mxu0 %v2779
    %2913 = vmatprep.subr.bf16.mxu0 0
    %2914 = vmatpush1.bf16.msra.mxu0 0
    %2915 = vmatprep.subr.bf16.mxu0 0
    %2916 = vmatpush1.bf16.msra.mxu0 0
    %2917 = vmatprep.subr.bf16.mxu0 0
    %2918 = vmatpush1.bf16.msra.mxu0 0
    %2919 = vmatprep.subr.bf16.mxu0 0
    %2920 = vmatpush1.bf16.msra.mxu0 0
    %2921 = vmatprep.subr.bf16.mxu0 0
    %2922 = vmatpush1.bf16.msra.mxu0 0
    %2923 = vmatprep.subr.bf16.mxu0 0
    %2924 = vmatpush1.bf16.msra.mxu0 0
    %2925 = vmatprep.subr.bf16.mxu0 0
    %2926 = vmatpush1.bf16.msra.mxu0 0
    %2927 = vmatprep.subr.bf16.mxu0 0
    %2928 = vmatpush1.bf16.msra.mxu0 0
    %2929 = vmatprep.subr.bf16.mxu0 0
    %2930 = vmatpush1.bf16.msra.mxu0 0
    %2931 = vmatprep.subr.bf16.mxu0 0
    %2932 = vmatpush1.bf16.msra.mxu0 0
    %2933 = vmatprep.subr.bf16.mxu0 0
    %2934 = vmatpush1.bf16.msra.mxu0 0
    %2935 = vmatprep.subr.bf16.mxu0 0
    %2936 = vmatpush1.bf16.msra.mxu0 0
    %2937 = vmatprep.subr.bf16.mxu0 0
    %2938 = vmatpush1.bf16.msra.mxu0 0
    %2939 = vmatprep.subr.bf16.mxu0 0
    %2940 = vmatpush1.bf16.msra.mxu0 0
    %2941 = vmatprep.mubr.bf16.mxu0 0
    %2942 = vmatmul.mubr.bf16.gmra.mrb[0].mxu0 %v2907
    %v2943 = vpop.f32.mrb[0].mxu0
    %v2944 = vadd.f32 %v2900, %v2943
    %v2945 = vpop.f32.mrb[0].mxu0
    %v2946 = vpop.f32.mrb[0].mxu0
    %v2947 = vadd.f32 %v2903, %v2946
    %v2948 = vpop.f32.mrb[0].mxu0
    %2949 = vdwg.mxu0
    %v2950 = vpack.c.bf16 %v262, %v262
    %2951 = vrot.lane.b32.xlu0 %v2706, 112
    %v2952 = vpop.permute.xlu0 %2951
    %v2954 = vsel %vm586, %v2952, 0
    %v2957 = vsel %vm590, %v2950, 0
    %2959 = vmatprep.subr.bf16.mxu0 0
    %2960 = vmatpush1.bf16.msra.mxu0 %v2957
    %2961 = vmatprep.subr.bf16.mxu0 0
    %2962 = vmatpush1.bf16.msra.mxu0 0
    %2963 = vmatprep.subr.bf16.mxu0 0
    %2964 = vmatpush1.bf16.msra.mxu0 0
    %2965 = vmatprep.subr.bf16.mxu0 0
    %2966 = vmatpush1.bf16.msra.mxu0 0
    %2967 = vmatprep.subr.bf16.mxu0 0
    %2968 = vmatpush1.bf16.msra.mxu0 0
    %2969 = vmatprep.subr.bf16.mxu0 0
    %2970 = vmatpush1.bf16.msra.mxu0 0
    %2971 = vmatprep.subr.bf16.mxu0 0
    %2972 = vmatpush1.bf16.msra.mxu0 0
    %2973 = vmatprep.subr.bf16.mxu0 0
    %2974 = vmatpush1.bf16.msra.mxu0 0
    %2975 = vmatprep.subr.bf16.mxu0 0
    %2976 = vmatpush1.bf16.msra.mxu0 0
    %2977 = vmatprep.subr.bf16.mxu0 0
    %2978 = vmatpush1.bf16.msra.mxu0 0
    %2979 = vmatprep.subr.bf16.mxu0 0
    %2980 = vmatpush1.bf16.msra.mxu0 0
    %2981 = vmatprep.subr.bf16.mxu0 0
    %2982 = vmatpush1.bf16.msra.mxu0 0
    %2983 = vmatprep.subr.bf16.mxu0 0
    %2984 = vmatpush1.bf16.msra.mxu0 0
    %2985 = vmatprep.subr.bf16.mxu0 0
    %2986 = vmatpush1.bf16.msra.mxu0 0
    %2987 = vmatprep.subr.bf16.mxu0 0
    %2988 = vmatpush1.bf16.msra.mxu0 0
    %2989 = vmatprep.subr.bf16.mxu0 0
    %2990 = vmatpush1.bf16.msra.mxu0 0
    %2991 = vmatprep.mubr.bf16.mxu0 0
    %2992 = vmatmul.mubr.bf16.gmra.mrb[0].mxu0 %v2954
    %v2993 = vpop.f32.mrb[0].mxu0
    %v2994 = vadd.f32 %v117, %v2993
    %v2995 = vpop.f32.mrb[0].mxu0
    %v2996 = vpop.f32.mrb[0].mxu0
    %v2997 = vadd.f32 %v118, %v2996
    %v2998 = vpop.f32.mrb[0].mxu0
    %2999 = vdwg.mxu0
    %v3000 = vsel %vm140, %v2994, -inf
    %3001 = vmax.xlane.f32.xlu0 %v3000
    %v3002 = vpop.xlane.xlu0 %3001
    %v3003 = vsel %vm140, %v2997, -inf
    %3004 = vmax.xlane.f32.xlu0 %v3003
    %v3005 = vpop.xlane.xlu0 %3004
    %v3006 = vsub.f32 %v2994, %v3002
    %v3007 = vsub.f32 %v2997, %v3005
    %v3008 = vmul.f32 %v3006, 1.442695
    %v3009 = vpow.pop %v3008
    %v3010 = vmul.f32 %v3007, 1.442695
    %v3011 = vpow.pop %v3010
    %v3012 = vsel %vm140, %v3009, 0.0
    %3013 = vadd.xlane.f32.xlu0 %v3012
    %v3014 = vpop.xlane.xlu0 %3013
    %v3015 = vsel %vm140, %v3011, 0.0
    %3016 = vadd.xlane.f32.xlu0 %v3015
    %v3017 = vpop.xlane.xlu0 %3016
    %v3018 = vrcp.pop %v3014
    %v3019 = vrcp.pop %v3017
    %v3020 = vmul.f32 %v3009, %v3018
    %v3021 = vmul.f32 %v3011, %v3019
    %v3022 = vpack.c.bf16 %v3021, %v3020
    %3023 = vrot.lane.b32.xlu0 %v2778, 64
    %v3024 = vpop.permute.xlu0 %3023
    %3025 = vrot.lane.b32.xlu0 %v2779, 64
    %v3026 = vpop.permute.xlu0 %3025
    %v3030 = vsel %vm140, %v3022, 0
    %3032 = vmatprep.subr.bf16.mxu0 0
    %3033 = vmatpush1.bf16.msra.mxu0 %v3024
    %3034 = vmatprep.subr.bf16.mxu0 0
    %3035 = vmatpush1.bf16.msra.mxu0 %v3026
    %3036 = vmatprep.subr.bf16.mxu0 0
    %3037 = vmatpush1.bf16.msra.mxu0 0
    %3038 = vmatprep.subr.bf16.mxu0 0
    %3039 = vmatpush1.bf16.msra.mxu0 0
    %3040 = vmatprep.subr.bf16.mxu0 0
    %3041 = vmatpush1.bf16.msra.mxu0 0
    %3042 = vmatprep.subr.bf16.mxu0 0
    %3043 = vmatpush1.bf16.msra.mxu0 0
    %3044 = vmatprep.subr.bf16.mxu0 0
    %3045 = vmatpush1.bf16.msra.mxu0 0
    %3046 = vmatprep.subr.bf16.mxu0 0
    %3047 = vmatpush1.bf16.msra.mxu0 0
    %3048 = vmatprep.subr.bf16.mxu0 0
    %3049 = vmatpush1.bf16.msra.mxu0 0
    %3050 = vmatprep.subr.bf16.mxu0 0
    %3051 = vmatpush1.bf16.msra.mxu0 0
    %3052 = vmatprep.subr.bf16.mxu0 0
    %3053 = vmatpush1.bf16.msra.mxu0 0
    %3054 = vmatprep.subr.bf16.mxu0 0
    %3055 = vmatpush1.bf16.msra.mxu0 0
    %3056 = vmatprep.subr.bf16.mxu0 0
    %3057 = vmatpush1.bf16.msra.mxu0 0
    %3058 = vmatprep.subr.bf16.mxu0 0
    %3059 = vmatpush1.bf16.msra.mxu0 0
    %3060 = vmatprep.subr.bf16.mxu0 0
    %3061 = vmatpush1.bf16.msra.mxu0 0
    %3062 = vmatprep.subr.bf16.mxu0 0
    %3063 = vmatpush1.bf16.msra.mxu0 0
    %3064 = vmatprep.mubr.bf16.mxu0 0
    %3065 = vmatmul.mubr.bf16.gmra.mrb[0].mxu0 %v3030
    %v3066 = vpop.f32.mrb[0].mxu0
    %v3067 = vadd.f32 0.0, %v3066
    %v3068 = vpop.f32.mrb[0].mxu0
    %v3069 = vpop.f32.mrb[0].mxu0
    %v3070 = vadd.f32 0.0, %v3069
    %v3071 = vpop.f32.mrb[0].mxu0
    %3072 = vdwg.mxu0
    %v3073 = vadd.f32 %v2944, %v3067
    %v3074 = vadd.f32 %v2947, %v3070
    %v3075 = vpack.c.bf16 %v263, %v263
    %3076 = vrot.lane.b32.xlu0 %v2706, 104
    %v3077 = vpop.permute.xlu0 %3076
    %v3079 = vsel %vm586, %v3077, 0
    %v3082 = vsel %vm590, %v3075, 0
    %3084 = vmatprep.subr.bf16.mxu0 0
    %3085 = vmatpush1.bf16.msra.mxu0 %v3082
    %3086 = vmatprep.subr.bf16.mxu0 0
    %3087 = vmatpush1.bf16.msra.mxu0 0
    %3088 = vmatprep.subr.bf16.mxu0 0
    %3089 = vmatpush1.bf16.msra.mxu0 0
    %3090 = vmatprep.subr.bf16.mxu0 0
    %3091 = vmatpush1.bf16.msra.mxu0 0
    %3092 = vmatprep.subr.bf16.mxu0 0
    %3093 = vmatpush1.bf16.msra.mxu0 0
    %3094 = vmatprep.subr.bf16.mxu0 0
    %3095 = vmatpush1.bf16.msra.mxu0 0
    %3096 = vmatprep.subr.bf16.mxu0 0
    %3097 = vmatpush1.bf16.msra.mxu0 0
    %3098 = vmatprep.subr.bf16.mxu0 0
    %3099 = vmatpush1.bf16.msra.mxu0 0
    %3100 = vmatprep.subr.bf16.mxu0 0
    %3101 = vmatpush1.bf16.msra.mxu0 0
    %3102 = vmatprep.subr.bf16.mxu0 0
    %3103 = vmatpush1.bf16.msra.mxu0 0
    %3104 = vmatprep.subr.bf16.mxu0 0
    %3105 = vmatpush1.bf16.msra.mxu0 0
    %3106 = vmatprep.subr.bf16.mxu0 0
    %3107 = vmatpush1.bf16.msra.mxu0 0
    %3108 = vmatprep.subr.bf16.mxu0 0
    %3109 = vmatpush1.bf16.msra.mxu0 0
    %3110 = vmatprep.subr.bf16.mxu0 0
    %3111 = vmatpush1.bf16.msra.mxu0 0
    %3112 = vmatprep.subr.bf16.mxu0 0
    %3113 = vmatpush1.bf16.msra.mxu0 0
    %3114 = vmatprep.subr.bf16.mxu0 0
    %3115 = vmatpush1.bf16.msra.mxu0 0
    %3116 = vmatprep.mubr.bf16.mxu0 0
    %3117 = vmatmul.mubr.bf16.gmra.mrb[0].mxu0 %v3079
    %v3118 = vpop.f32.mrb[0].mxu0
    %v3119 = vadd.f32 %v117, %v3118
    %v3120 = vpop.f32.mrb[0].mxu0
    %v3121 = vpop.f32.mrb[0].mxu0
    %v3122 = vadd.f32 %v118, %v3121
    %v3123 = vpop.f32.mrb[0].mxu0
    %3124 = vdwg.mxu0
    %v3125 = vsel %vm140, %v3119, -inf
    %3126 = vmax.xlane.f32.xlu0 %v3125
    %v3127 = vpop.xlane.xlu0 %3126
    %v3128 = vsel %vm140, %v3122, -inf
    %3129 = vmax.xlane.f32.xlu0 %v3128
    %v3130 = vpop.xlane.xlu0 %3129
    %v3131 = vsub.f32 %v3119, %v3127
    %v3132 = vsub.f32 %v3122, %v3130
    %v3133 = vmul.f32 %v3131, 1.442695
    %v3134 = vpow.pop %v3133
    %v3135 = vmul.f32 %v3132, 1.442695
    %v3136 = vpow.pop %v3135
    %v3137 = vsel %vm140, %v3134, 0.0
    %3138 = vadd.xlane.f32.xlu0 %v3137
    %v3139 = vpop.xlane.xlu0 %3138
    %v3140 = vsel %vm140, %v3136, 0.0
    %3141 = vadd.xlane.f32.xlu0 %v3140
    %v3142 = vpop.xlane.xlu0 %3141
    %v3143 = vrcp.pop %v3139
    %v3144 = vrcp.pop %v3142
    %v3145 = vmul.f32 %v3134, %v3143
    %v3146 = vmul.f32 %v3136, %v3144
    %v3147 = vpack.c.bf16 %v3146, %v3145
    %3148 = vrot.lane.b32.xlu0 %v2778, 32
    %v3149 = vpop.permute.xlu0 %3148
    %3150 = vrot.lane.b32.xlu0 %v2779, 32
    %v3151 = vpop.permute.xlu0 %3150
    %v3155 = vsel %vm140, %v3147, 0
    %3157 = vmatprep.subr.bf16.mxu0 0
    %3158 = vmatpush1.bf16.msra.mxu0 %v3149
    %3159 = vmatprep.subr.bf16.mxu0 0
    %3160 = vmatpush1.bf16.msra.mxu0 %v3151
    %3161 = vmatprep.subr.bf16.mxu0 0
    %3162 = vmatpush1.bf16.msra.mxu0 0
    %3163 = vmatprep.subr.bf16.mxu0 0
    %3164 = vmatpush1.bf16.msra.mxu0 0
    %3165 = vmatprep.subr.bf16.mxu0 0
    %3166 = vmatpush1.bf16.msra.mxu0 0
    %3167 = vmatprep.subr.bf16.mxu0 0
    %3168 = vmatpush1.bf16.msra.mxu0 0
    %3169 = vmatprep.subr.bf16.mxu0 0
    %3170 = vmatpush1.bf16.msra.mxu0 0
    %3171 = vmatprep.subr.bf16.mxu0 0
    %3172 = vmatpush1.bf16.msra.mxu0 0
    %3173 = vmatprep.subr.bf16.mxu0 0
    %3174 = vmatpush1.bf16.msra.mxu0 0
    %3175 = vmatprep.subr.bf16.mxu0 0
    %3176 = vmatpush1.bf16.msra.mxu0 0
    %3177 = vmatprep.subr.bf16.mxu0 0
    %3178 = vmatpush1.bf16.msra.mxu0 0
    %3179 = vmatprep.subr.bf16.mxu0 0
    %3180 = vmatpush1.bf16.msra.mxu0 0
    %3181 = vmatprep.subr.bf16.mxu0 0
    %3182 = vmatpush1.bf16.msra.mxu0 0
    %3183 = vmatprep.subr.bf16.mxu0 0
    %3184 = vmatpush1.bf16.msra.mxu0 0
    %3185 = vmatprep.subr.bf16.mxu0 0
    %3186 = vmatpush1.bf16.msra.mxu0 0
    %3187 = vmatprep.subr.bf16.mxu0 0
    %3188 = vmatpush1.bf16.msra.mxu0 0
    %3189 = vmatprep.mubr.bf16.mxu0 0
    %3190 = vmatmul.mubr.bf16.gmra.mrb[0].mxu0 %v3155
    %v3191 = vpop.f32.mrb[0].mxu0
    %v3192 = vadd.f32 0.0, %v3191
    %v3193 = vpop.f32.mrb[0].mxu0
    %v3194 = vpop.f32.mrb[0].mxu0
    %v3195 = vadd.f32 0.0, %v3194
    %v3196 = vpop.f32.mrb[0].mxu0
    %3197 = vdwg.mxu0
    %v3198 = vadd.f32 %v3073, %v3192
    %v3199 = vadd.f32 %v3074, %v3195
    %v3200 = vld [vmem:[#allocation11 + $0xb0] sm:$0x1]
    %v3201 = vlaneseq
    %v3202 = vshrl.u32 %v3201, 7
    %v3203 = vsub.s32 0, %v3202
    %v3204 = vrot.slane %v3200, %v3203
    %v3205 = vadd.f32 %v3198, %v3204
    %v3206 = vadd.f32 %v3199, %v3204
    %v3207 = vadd.f32 %v2638, %v3205
    %v3208 = vadd.f32 %v2639, %v3206
    %v3209 = vld [vmem:[#allocation11 + $0xb8] sm:$0x1]
    %v3210 = vld [vmem:[#allocation11 + $0xc0] sm:$0x1]
    %v3211 = vsel %vm140, %v3207, 0.0
    %3212 = vadd.xlane.f32.xlu0 %v3211
    %v3213 = vpop.xlane.xlu0 %3212
    %v3214 = vsel %vm140, %v3208, 0.0
    %3215 = vadd.xlane.f32.xlu0 %v3214
    %v3216 = vpop.xlane.xlu0 %3215
    %v3217 = vmul.f32 %v3213, %v1087
    %v3218 = vmul.f32 %v3216, %v1087
    %v3219 = vsub.f32 %v3207, %v3217
    %v3220 = vsub.f32 %v3208, %v3218
    %v3221 = vmul.f32 %v3219, %v3219
    %v3222 = vmul.f32 %v3220, %v3220
    %v3223 = vsel %vm140, %v3221, 0.0
    %3224 = vadd.xlane.f32.xlu0 %v3223
    %v3225 = vpop.xlane.xlu0 %3224
    %v3226 = vsel %vm140, %v3222, 0.0
    %3227 = vadd.xlane.f32.xlu0 %v3226
    %v3228 = vpop.xlane.xlu0 %3227
    %v3229 = vmul.f32 %v3225, %v1087
    %v3230 = vmul.f32 %v3228, %v1087
    %v3231 = vadd.f32 %v3229, 1e-05
    %v3232 = vadd.f32 %v3230, 1e-05
    %v3233 = vrsqrt.pop %v3231
    %v3234 = vrsqrt.pop %v3232
    %v3235 = vmul.f32 %v3219, %v3233
    %v3236 = vmul.f32 %v3220, %v3234
    %v3237 = vlaneseq
    %v3238 = vshrl.u32 %v3237, 7
    %v3239 = vsub.s32 0, %v3238
    %v3240 = vrot.slane %v3209, %v3239
    %v3241 = vmul.f32 %v3235, %v3240
    %v3242 = vmul.f32 %v3236, %v3240
    %v3243 = vlaneseq
    %v3244 = vshrl.u32 %v3243, 7
    %v3245 = vsub.s32 0, %v3244
    %v3246 = vrot.slane %v3210, %v3245
    %v3247 = vadd.f32 %v3241, %v3246
    %v3248 = vadd.f32 %v3242, %v3246
    %v3249 = vpack.c.bf16 %v3248, %v3247
    %v3250 = vld [vmem:[#allocation10 + $0xc0] sm:$0xf]
    %v3251 = vld [vmem:[#allocation10 + $0xc4] sm:$0xf]
    %v3252 = vld [vmem:[#allocation10 + $0xc8] sm:$0xf]
    %v3253 = vld [vmem:[#allocation10 + $0xcc] sm:$0xf]
    %v3254 = vld [vmem:[#allocation11 + $0xc8] sm:$0x1]
    %v3255 = vlaneseq
    %v3256 = vshrl.u32 %v3255, 7
    %v3257 = vsub.s32 0, %v3256
    %v3258 = vrot.slane %v3254, %v3257
    %v3263 = vunpack.c.l.b16 %v3250
    %v3264 = vunpack.c.l.b16 %v3251
    %v3265 = vunpack.c.l.b16 %v3252
    %v3266 = vunpack.c.l.b16 %v3253
    %v3267 = vpack.c.b16 %v3264, %v3263
    %v3268 = vpack.c.b16 %v3266, %v3265
    %v3272 = vsel %vm140, %v3249, 0
    %3274 = vmatprep.subr.bf16.mxu0 0
    %3275 = vmatpush1.bf16.msra.mxu0 %v3267
    %3276 = vmatprep.subr.bf16.mxu0 0
    %3277 = vmatpush1.bf16.msra.mxu0 %v3268
    %3278 = vmatprep.subr.bf16.mxu0 0
    %3279 = vmatpush1.bf16.msra.mxu0 0
    %3280 = vmatprep.subr.bf16.mxu0 0
    %3281 = vmatpush1.bf16.msra.mxu0 0
    %3282 = vmatprep.subr.bf16.mxu0 0
    %3283 = vmatpush1.bf16.msra.mxu0 0
    %3284 = vmatprep.subr.bf16.mxu0 0
    %3285 = vmatpush1.bf16.msra.mxu0 0
    %3286 = vmatprep.subr.bf16.mxu0 0
    %3287 = vmatpush1.bf16.msra.mxu0 0
    %3288 = vmatprep.subr.bf16.mxu0 0
    %3289 = vmatpush1.bf16.msra.mxu0 0
    %3290 = vmatprep.subr.bf16.mxu0 0
    %3291 = vmatpush1.bf16.msra.mxu0 0
    %3292 = vmatprep.subr.bf16.mxu0 0
    %3293 = vmatpush1.bf16.msra.mxu0 0
    %3294 = vmatprep.subr.bf16.mxu0 0
    %3295 = vmatpush1.bf16.msra.mxu0 0
    %3296 = vmatprep.subr.bf16.mxu0 0
    %3297 = vmatpush1.bf16.msra.mxu0 0
    %3298 = vmatprep.subr.bf16.mxu0 0
    %3299 = vmatpush1.bf16.msra.mxu0 0
    %3300 = vmatprep.subr.bf16.mxu0 0
    %3301 = vmatpush1.bf16.msra.mxu0 0
    %3302 = vmatprep.subr.bf16.mxu0 0
    %3303 = vmatpush1.bf16.msra.mxu0 0
    %3304 = vmatprep.subr.bf16.mxu0 0
    %3305 = vmatpush1.bf16.msra.mxu0 0
    %3306 = vmatprep.mubr.bf16.mxu0 0
    %3307 = vmatmul.mubr.bf16.gmra.mrb[0].mxu0 %v3272
    %v3308 = vpop.f32.mrb[0].mxu0
    %v3309 = vadd.f32 %v3258, %v3308
    %v3310 = vpop.f32.mrb[0].mxu0
    %v3311 = vpop.f32.mrb[0].mxu0
    %v3312 = vadd.f32 %v3258, %v3311
    %v3313 = vpop.f32.mrb[0].mxu0
    %3314 = vdwg.mxu0
    %v3315 = vmul.f32 %v3309, %v3309
    %v3316 = vmul.f32 %v3312, %v3312
    %v3317 = vmul.f32 %v3309, %v3315
    %v3318 = vmul.f32 %v3312, %v3316
    %v3319 = vmul.f32 %v3317, 0.044715
    %v3320 = vmul.f32 %v3318, 0.044715
    %v3321 = vadd.f32 %v3309, %v3319
    %v3322 = vadd.f32 %v3312, %v3320
    %v3323 = vmul.f32 %v3321, 0.7978846
    %v3324 = vmul.f32 %v3322, 0.7978846
    %v3325 = vtanh.pop %v3323
    %v3326 = vtanh.pop %v3324
    %v3327 = vadd.f32 %v3325, 1.0
    %v3328 = vadd.f32 %v3326, 1.0
    %v3329 = vmul.f32 %v3327, 0.5
    %v3330 = vmul.f32 %v3328, 0.5
    %v3331 = vmul.f32 %v3309, %v3329
    %v3332 = vmul.f32 %v3312, %v3330
    %v3333 = vpack.c.bf16 %v3332, %v3331
    %v3334 = vld [vmem:[#allocation10 + $0xd0] sm:$0xf]
    %v3335 = vld [vmem:[#allocation10 + $0xd4] sm:$0xf]
    %v3336 = vld [vmem:[#allocation10 + $0xd8] sm:$0xf]
    %v3337 = vld [vmem:[#allocation10 + $0xdc] sm:$0xf]
    %v3338 = vld [vmem:[#allocation10 + $0xe0] sm:$0xf]
    %v3339 = vld [vmem:[#allocation10 + $0xe4] sm:$0xf]
    %v3340 = vld [vmem:[#allocation10 + $0xe8] sm:$0xf]
    %v3341 = vld [vmem:[#allocation10 + $0xec] sm:$0xf]
    %v3342 = vld [vmem:[#allocation11 + $0xd0] sm:$0x1]
    %v3343 = vlaneseq
    %v3344 = vshrl.u32 %v3343, 7
    %v3345 = vsub.s32 0, %v3344
    %v3346 = vrot.slane %v3342, %v3345
    %v3355 = vunpack.c.l.b16 %v3334
    %v3356 = vunpack.c.l.b16 %v3335
    %v3357 = vunpack.c.l.b16 %v3336
    %v3358 = vunpack.c.l.b16 %v3337
    %v3359 = vunpack.c.l.b16 %v3338
    %v3360 = vunpack.c.l.b16 %v3339
    %v3361 = vunpack.c.l.b16 %v3340
    %v3362 = vunpack.c.l.b16 %v3341
    %v3363 = vpack.c.b16 %v3356, %v3355
    %v3364 = vpack.c.b16 %v3358, %v3357
    %v3365 = vpack.c.b16 %v3360, %v3359
    %v3366 = vpack.c.b16 %v3362, %v3361
    %v3372 = vsel %vm1851, %v3333, 0
    %3374 = vmatprep.subr.bf16.mxu0 0
    %3375 = vmatpush1.bf16.msra.mxu0 %v3363
    %3376 = vmatprep.subr.bf16.mxu0 0
    %3377 = vmatpush1.bf16.msra.mxu0 %v3364
    %3378 = vmatprep.subr.bf16.mxu0 0
    %3379 = vmatpush1.bf16.msra.mxu0 %v3365
    %3380 = vmatprep.subr.bf16.mxu0 0
    %3381 = vmatpush1.bf16.msra.mxu0 %v3366
    %3382 = vmatprep.subr.bf16.mxu0 0
    %3383 = vmatpush1.bf16.msra.mxu0 0
    %3384 = vmatprep.subr.bf16.mxu0 0
    %3385 = vmatpush1.bf16.msra.mxu0 0
    %3386 = vmatprep.subr.bf16.mxu0 0
    %3387 = vmatpush1.bf16.msra.mxu0 0
    %3388 = vmatprep.subr.bf16.mxu0 0
    %3389 = vmatpush1.bf16.msra.mxu0 0
    %3390 = vmatprep.subr.bf16.mxu0 0
    %3391 = vmatpush1.bf16.msra.mxu0 0
    %3392 = vmatprep.subr.bf16.mxu0 0
    %3393 = vmatpush1.bf16.msra.mxu0 0
    %3394 = vmatprep.subr.bf16.mxu0 0
    %3395 = vmatpush1.bf16.msra.mxu0 0
    %3396 = vmatprep.subr.bf16.mxu0 0
    %3397 = vmatpush1.bf16.msra.mxu0 0
    %3398 = vmatprep.subr.bf16.mxu0 0
    %3399 = vmatpush1.bf16.msra.mxu0 0
    %3400 = vmatprep.subr.bf16.mxu0 0
    %3401 = vmatpush1.bf16.msra.mxu0 0
    %3402 = vmatprep.subr.bf16.mxu0 0
    %3403 = vmatpush1.bf16.msra.mxu0 0
    %3404 = vmatprep.subr.bf16.mxu0 0
    %3405 = vmatpush1.bf16.msra.mxu0 0
    %3406 = vmatprep.mubr.bf16.mxu0 0
    %3407 = vmatmul.mubr.bf16.gmra.mrb[0].mxu0 %v3372
    %v3408 = vpop.f32.mrb[0].mxu0
    %v3409 = vadd.f32 %v3346, %v3408
    %v3410 = vpop.f32.mrb[0].mxu0
    %v3411 = vpop.f32.mrb[0].mxu0
    %v3412 = vadd.f32 %v3346, %v3411
    %v3413 = vpop.f32.mrb[0].mxu0
    %3414 = vdwg.mxu0
    %v3415 = vadd.f32 %v3247, %v3409
    %v3416 = vadd.f32 %v3248, %v3412
    %v3417 = vld [vmem:[#allocation11 + $0xd8] sm:$0x1]
    %v3418 = vld [vmem:[#allocation11 + $0xe0] sm:$0x1]
    %v3419 = vsel %vm140, %v3415, 0.0
    %3420 = vadd.xlane.f32.xlu0 %v3419
    %v3421 = vpop.xlane.xlu0 %3420
    %v3422 = vsel %vm140, %v3416, 0.0
    %3423 = vadd.xlane.f32.xlu0 %v3422
    %v3424 = vpop.xlane.xlu0 %3423
    %v3425 = vmul.f32 %v3421, %v1087
    %v3426 = vmul.f32 %v3424, %v1087
    %v3427 = vsub.f32 %v3415, %v3425
    %v3428 = vsub.f32 %v3416, %v3426
    %v3429 = vmul.f32 %v3427, %v3427
    %v3430 = vmul.f32 %v3428, %v3428
    %v3431 = vsel %vm140, %v3429, 0.0
    %3432 = vadd.xlane.f32.xlu0 %v3431
    %v3433 = vpop.xlane.xlu0 %3432
    %v3434 = vsel %vm140, %v3430, 0.0
    %3435 = vadd.xlane.f32.xlu0 %v3434
    %v3436 = vpop.xlane.xlu0 %3435
    %v3437 = vmul.f32 %v3433, %v1087
    %v3438 = vmul.f32 %v3436, %v1087
    %v3439 = vadd.f32 %v3437, 1e-05
    %v3440 = vadd.f32 %v3438, 1e-05
    %v3441 = vrsqrt.pop %v3439
    %v3442 = vrsqrt.pop %v3440
    %v3443 = vmul.f32 %v3427, %v3441
    %v3444 = vmul.f32 %v3428, %v3442
    %v3445 = vlaneseq
    %v3446 = vshrl.u32 %v3445, 7
    %v3447 = vsub.s32 0, %v3446
    %v3448 = vrot.slane %v3417, %v3447
    %v3449 = vmul.f32 %v3443, %v3448
    %v3450 = vmul.f32 %v3444, %v3448
    %v3451 = vlaneseq
    %v3452 = vshrl.u32 %v3451, 7
    %v3453 = vsub.s32 0, %v3452
    %v3454 = vrot.slane %v3418, %v3453
    %v3455 = vadd.f32 %v3449, %v3454
    %v3456 = vadd.f32 %v3450, %v3454
    %s3457 = scalar_lea.vmem [#allocation13], 16
    %3458 = vst.msk [vmem:[%s3457] sm:$0xff] %vm140, %v3455
    %3459 = vst.msk [vmem:[%s3457 + $0x8] sm:$0xff] %vm140, %v3456
    // Predicated region
    $region50: #{tpu_custom_call.1} parent=1 // pred_check
      _
    $region51: #{tpu_custom_call.1} parent=1 // pred_check_branch
      %3461 = sbr.rel (0) target = $region53
    $region52: #{tpu_custom_call.1} parent=1 // pred_region
      %s3463 = ssub.s32 512, 512
      %3464 = vsyncadd [#allocation4], %s3463
      %s3465 = sshll.u32 [#allocation13], 4
      %s3466 = int_to_ptr.vmem [resolvable:$true] %s3465
      %3471 = dma.vmem_to_hbm [thread:$0]  %s3466, 512, %s6, [#allocation4], 128, 128, 8
    $region53: #{tpu_custom_call.1} parent=1 // pred_fallthru
      _
    // Predicated region
    $region54: #{tpu_custom_call.1} parent=1 // pred_check
      _
    $region55: #{tpu_custom_call.1} parent=1 // pred_check_branch
      %3473 = sbr.rel (0) target = $region57
    $region56: #{tpu_custom_call.1} parent=1 // pred_region
      %3474 = dma.done [#allocation4], 512
    $region57: #{tpu_custom_call.1} parent=1 // pred_fallthru
      _
    %3475 = vsyncpa [#allocation3], 1
    %3476 = vsyncpa [#allocation6], 1
    %3477 = vsyncpa [#allocation9], 1
    %3478 = vsyncpa [#allocation12], 1
    %3479 = vsyncpa [#allocation4], 1

</llo_original>
